<compile_context>
chip_gen: v5e
topology: v5e:2x2
jax: 0.10.0
libtpu: 0.0.40
codegen_flags: <defaults>
</compile_context>

<pallas_src>
import math
import functools

import jax
import jax.numpy as jnp
from jax.experimental import pallas as pl
from jax.experimental.pallas import tpu as pltpu


# ----------------------------- config ---------------------------------------

class BertConfig:
    def __init__(self, n_ctx=64, vocab_size=1000, n_layer=2, n_head=4, n_embd=32):
        self.n_ctx = n_ctx
        self.vocab_size = vocab_size
        self.n_layer = n_layer
        self.n_head = n_head
        self.n_embd = n_embd


MM_DTYPE = jnp.bfloat16     # matmul operand dtype (f32 accumulation)
SOFTMAX_EXACT = False       # True -> exact divide (tight reference comparisons)
LANE = 128


def _round_up(n, m):
    return ((n + m - 1) // m) * m


def _vmem_limit_bytes():
    """Per-generation scoped-VMEM cap (~75% of physical, bounded at 100 MiB)."""
    try:
        cap = int(pltpu.get_tpu_info().vmem_capacity_bytes)
    except Exception:
        cap = 64 * 1024 * 1024
    return int(min(cap * 3 // 4, 100 * 1024 * 1024))


# ----------------------------- in-kernel math --------------------------------

def _layernorm_padded(x, g, b, n_valid, eps=1e-12):
    """LayerNorm over the first n_valid channels of a zero-padded (R, Cp) slab.

    Invariant: channels >= n_valid of `x` are exactly zero and gamma/beta are
    zero-padded, so sums over the full padded lane width equal sums over the
    valid channels and padded output channels stay zero.
    """
    inv_n = 1.0 / float(n_valid)
    s1 = jnp.sum(x, axis=-1, keepdims=True)
    s2 = jnp.sum(x * x, axis=-1, keepdims=True)
    mu = s1 * inv_n
    var = s2 * inv_n - mu * mu
    inv = jax.lax.rsqrt(var + eps)        # EUP
    return (x - mu) * inv * g + b


def _gelu_exact(x):
    # matches torch nn.GELU() (erf-based, non-approximate)
    return 0.5 * x * (1.0 + jax.lax.erf(x * (1.0 / math.sqrt(2.0))))


# ----------------------------- fused kernel ----------------------------------

def bert_fused_kernel(x_emb_ref, embg_ref, embb_ref,
                      wqkv_ref, bqkv_ref, wo_ref, bo_ref, ln1g_ref, ln1b_ref,
                      wi_ref, bi_ref, wo2_ref, bo2_ref, ln2g_ref, ln2b_ref,
                      pw_ref, pb_ref,
                      x_ref, pool_ref,
                      *, batch, seqlen, n_head, head_size, n_valid):
    layer = pl.program_id(0)
    C = n_valid

    # ---- layer-0 prologue: embedding LayerNorm (no separate tiny kernel) ----
    @pl.when(layer == 0)
    def _():
        x_ref[...] = _layernorm_padded(
            x_emb_ref[...], embg_ref[...], embb_ref[...], n_valid)

    # Activation is VMEM-resident across the layer grid axis (block index
    # of this output never changes), so this read sees the previous layer.
    x = x_ref[...]                                         # (B*T, Cp) f32
    x_mm = x.astype(wqkv_ref.dtype)

    # ---- fused QKV projection (1/sqrt(hs) folded into the Q columns) ----
    qkv = jnp.dot(x_mm, wqkv_ref[0],
                  preferred_element_type=jnp.float32) + bqkv_ref[0]   # (R, 3C)

    def split_heads(z):                                    # (R, C) -> (B*H, T, hs)
        z = z.reshape(batch, seqlen, n_head, head_size)
        return z.transpose(0, 2, 1, 3).reshape(batch * n_head, seqlen, head_size)

    q = split_heads(qkv[:, 0 * C:1 * C])
    k = split_heads(qkv[:, 1 * C:2 * C])
    v = split_heads(qkv[:, 2 * C:3 * C])

    # ---- attention, batched over (batch*heads); non-causal, no mask ----
    s = jnp.einsum('bqd,bkd->bqk', q, k, preferred_element_type=jnp.float32)
    s = s - jnp.max(s, axis=-1, keepdims=True)
    p = jnp.exp(s)
    denom = jnp.sum(p, axis=-1, keepdims=True)
    if SOFTMAX_EXACT:
        p = p / denom
    else:
        p = p * pl.reciprocal(denom, approx=True)          # EUP slot, frees VALU
    y = jnp.einsum('bqk,bkd->bqd', p, v, preferred_element_type=jnp.float32)
    y = (y.reshape(batch, n_head, seqlen, head_size)
          .transpose(0, 2, 1, 3).reshape(batch * seqlen, C))

    # ---- self-output: dense + residual + LayerNorm ----
    attn = jnp.dot(y.astype(wo_ref.dtype), wo_ref[0],
                   preferred_element_type=jnp.float32) + bo_ref[0]
    x1 = _layernorm_padded(x + attn, ln1g_ref[0], ln1b_ref[0], n_valid)

    # ---- FFN: dense + exact GELU + dense + residual + LayerNorm ----
    inter = jnp.dot(x1.astype(wi_ref.dtype), wi_ref[0],
                    preferred_element_type=jnp.float32) + bi_ref[0]
    inter = _gelu_exact(inter)
    out = jnp.dot(inter.astype(wo2_ref.dtype), wo2_ref[0],
                  preferred_element_type=jnp.float32) + bo2_ref[0]
    x2 = _layernorm_padded(x1 + out, ln2g_ref[0], ln2b_ref[0], n_valid)

    x_ref[...] = x2                                        # stays resident for next layer

    # ---- pooler fused into the final layer's epilogue ----
    @pl.when(layer == pl.num_programs(0) - 1)
    def _():
        cls = x2.reshape(batch, seqlen, x2.shape[-1])[:, 0, :]        # (B, Cp) CLS rows
        h = jnp.dot(cls.astype(pw_ref.dtype), pw_ref[...],
                    preferred_element_type=jnp.float32) + pb_ref[...]
        pool_ref[...] = jnp.tanh(h)


# ----------------------------- wrapper ---------------------------------------

def bert_model_forward(ids, params, config, token_type_ids=None):
    B, T = ids.shape
    assert T <= config.n_ctx, "Length of ids is greater than max context length"
    assert config.n_layer >= 1
    C = config.n_embd
    H = config.n_head
    Cp = int(params["word_emb"].shape[-1])
    R = B * T
    Lw = params["layers"]
    n_layer = int(Lw["wqkv"].shape[0])

    # TODO(synk): embedding-table gathers stay in plain JAX (XLA fuses the adds).
    pe = params["pos_emb"][:T]                             # (T, Cp)
    if token_type_ids is None:
        token_type_ids = jnp.zeros((T,), dtype=jnp.int32)
    tt = jnp.asarray(token_type_ids, dtype=jnp.int32)
    we = jnp.take(params["word_emb"], ids, axis=0)         # (B, T, Cp)
    te = jnp.take(params["tok_emb"], tt, axis=0)           # (T, Cp) or (B, T, Cp)
    x_emb = (we + pe + te).reshape(R, Cp).astype(jnp.float32)   # pre-LN sum

    kernel = functools.partial(
        bert_fused_kernel, batch=B, seqlen=T,
        n_head=H, head_size=C // H, n_valid=C)

    def inv2(arr):    # grid-invariant 2-D input
        return pl.BlockSpec(arr.shape, lambda l: (0, 0))

    def lyr(arr):     # per-layer 3-D input: one layer slice per grid step
        return pl.BlockSpec((1,) + arr.shape[1:], lambda l: (l, 0, 0))

    x_out, pool = pl.pallas_call(
        kernel,
        out_shape=(jax.ShapeDtypeStruct((R, Cp), jnp.float32),
                   jax.ShapeDtypeStruct((B, Cp), jnp.float32)),
        grid=(n_layer,),
        in_specs=[
            inv2(x_emb), inv2(params["emb_ln_g"]), inv2(params["emb_ln_b"]),
            lyr(Lw["wqkv"]), lyr(Lw["bqkv"]), lyr(Lw["wo"]), lyr(Lw["bo"]),
            lyr(Lw["ln1_g"]), lyr(Lw["ln1_b"]),
            lyr(Lw["wi"]), lyr(Lw["bi"]), lyr(Lw["wo2"]), lyr(Lw["bo2"]),
            lyr(Lw["ln2_g"]), lyr(Lw["ln2_b"]),
            inv2(params["pool_w"]), inv2(params["pool_b"]),
        ],
        out_specs=(pl.BlockSpec((R, Cp), lambda l: (0, 0)),     # lane-dense (128)
                   pl.BlockSpec((B, Cp), lambda l: (0, 0))),
        compiler_params=pltpu.CompilerParams(
            dimension_semantics=("arbitrary",),       # serial layer dependency
            vmem_limit_bytes=_vmem_limit_bytes()),
    )(x_emb, params["emb_ln_g"], params["emb_ln_b"],
      Lw["wqkv"], Lw["bqkv"], Lw["wo"], Lw["bo"], Lw["ln1_g"], Lw["ln1_b"],
      Lw["wi"], Lw["bi"], Lw["wo2"], Lw["bo2"], Lw["ln2_g"], Lw["ln2_b"],
      params["pool_w"], params["pool_b"])

    # strip channel padding outside the kernel (kernel stores stay lane-dense)
    x_out = x_out.reshape(B, T, Cp)[:, :, :C]
    pool = pool[:, :C]
    return x_out, pool


# ----------------------------- params ---------------------------------------

def init_raw_params(config, key):
    """Standard per-matrix f32 parameters (mirrors the PyTorch module layout)."""
    C = config.n_embd
    F4 = 4 * C
    std = 0.02

    def nrm(k, shape):
        return jax.random.normal(k, shape, dtype=jnp.float32) * std

    keys = jax.random.split(key, 5 + config.n_layer)
    params = {
        "word_emb": nrm(keys[0], (config.vocab_size, C)),
        "pos_emb":  nrm(keys[1], (config.n_ctx, C)),
        "tok_emb":  nrm(keys[2], (2, C)),
        "emb_ln_g": jnp.ones((1, C), jnp.float32),
        "emb_ln_b": jnp.zeros((1, C), jnp.float32),
        "pool_w":   nrm(keys[3], (C, C)),
        "pool_b":   nrm(keys[4], (1, C)),
        "layers": [],
    }
    for li in range(config.n_layer):
        lk = jax.random.split(keys[5 + li], 12)
        params["layers"].append({
            "wq": nrm(lk[0], (C, C)), "bq": nrm(lk[1], (1, C)),
            "wk": nrm(lk[2], (C, C)), "bk": nrm(lk[3], (1, C)),
            "wv": nrm(lk[4], (C, C)), "bv": nrm(lk[5], (1, C)),
            "wo": nrm(lk[6], (C, C)), "bo": nrm(lk[7], (1, C)),
            "ln1_g": jnp.ones((1, C), jnp.float32),
            "ln1_b": jnp.zeros((1, C), jnp.float32),
            "wi":  nrm(lk[8], (C, F4)),  "bi":  nrm(lk[9], (1, F4)),
            "wo2": nrm(lk[10], (F4, C)), "bo2": nrm(lk[11], (1, C)),
            "ln2_g": jnp.ones((1, C), jnp.float32),
            "ln2_b": jnp.zeros((1, C), jnp.float32),
        })
    return params


def prepare_params(raw, config):
    """Fuse QKV, fold 1/sqrt(hs) into Q, zero-pad channels to the lane width,
    stack per-layer weights on a leading layer axis, cast matmul weights to bf16."""
    C = config.n_embd
    hs = C // config.n_head
    F4 = 4 * C
    Cp = max(_round_up(C, LANE), LANE)
    F4p = max(_round_up(F4, LANE), LANE)
    scale = 1.0 / math.sqrt(hs)

    def padc(a, width):   # zero-pad last dim to `width`
        return jnp.pad(a, [(0, 0)] * (a.ndim - 1) + [(0, width - a.shape[-1])])

    def padr(a, rows):    # zero-pad first dim to `rows`
        return jnp.pad(a, [(0, rows - a.shape[0])] + [(0, 0)] * (a.ndim - 1))

    prepared = {
        "word_emb": padc(raw["word_emb"], Cp),
        "pos_emb":  padc(raw["pos_emb"], Cp),
        "tok_emb":  padc(raw["tok_emb"], Cp),
        "emb_ln_g": padc(raw["emb_ln_g"], Cp),
        "emb_ln_b": padc(raw["emb_ln_b"], Cp),
        "pool_w":   padc(padr(raw["pool_w"], Cp), Cp).astype(MM_DTYPE),
        "pool_b":   padc(raw["pool_b"], Cp),
    }

    acc = {k: [] for k in ("wqkv", "bqkv", "wo", "bo", "ln1_g", "ln1_b",
                           "wi", "bi", "wo2", "bo2", "ln2_g", "ln2_b")}
    for lp in raw["layers"]:
        wqkv = jnp.concatenate([lp["wq"] * scale, lp["wk"], lp["wv"]], axis=1)
        bqkv = jnp.concatenate([lp["bq"] * scale, lp["bk"], lp["bv"]], axis=1)
        acc["wqkv"].append(padr(wqkv, Cp).astype(MM_DTYPE))        # (Cp, 3C)
        acc["bqkv"].append(bqkv)                                    # (1, 3C)
        acc["wo"].append(padc(lp["wo"], Cp).astype(MM_DTYPE))       # (C, Cp)
        acc["bo"].append(padc(lp["bo"], Cp))
        acc["ln1_g"].append(padc(lp["ln1_g"], Cp))
        acc["ln1_b"].append(padc(lp["ln1_b"], Cp))
        acc["wi"].append(padc(padr(lp["wi"], Cp), F4p).astype(MM_DTYPE))   # (Cp, F4p)
        acc["bi"].append(padc(lp["bi"], F4p))
        acc["wo2"].append(padc(padr(lp["wo2"], F4p), Cp).astype(MM_DTYPE)) # (F4p, Cp)
        acc["bo2"].append(padc(lp["bo2"], Cp))
        acc["ln2_g"].append(padc(lp["ln2_g"], Cp))
        acc["ln2_b"].append(padc(lp["ln2_b"], Cp))

    prepared["layers"] = {k: jnp.stack(v, axis=0) for k, v in acc.items()}
    return prepared


# ----------------------------- pure-JAX reference ----------------------------

def bert_reference(ids, raw, config, token_type_ids=None):
    B, T = ids.shape
    C = config.n_embd
    H = config.n_head
    hs = C // H

    def ln(x, g, b, eps=1e-12):
        mu = jnp.mean(x, axis=-1, keepdims=True)
        var = jnp.mean((x - mu) ** 2, axis=-1, keepdims=True)
        return (x - mu) * jax.lax.rsqrt(var + eps) * g + b

    pe = raw["pos_emb"][:T]
    tt = (jnp.zeros((T,), jnp.int32) if token_type_ids is None
          else jnp.asarray(token_type_ids, jnp.int32))
    x = ln(jnp.take(raw["word_emb"], ids, axis=0) + pe +
           jnp.take(raw["tok_emb"], tt, axis=0),
           raw["emb_ln_g"], raw["emb_ln_b"])
    for lp in raw["layers"]:
        q = (x @ lp["wq"] + lp["bq"]).reshape(B, T, H, hs).transpose(0, 2, 1, 3)
        k = (x @ lp["wk"] + lp["bk"]).reshape(B, T, H, hs).transpose(0, 2, 1, 3)
        v = (x @ lp["wv"] + lp["bv"]).reshape(B, T, H, hs).transpose(0, 2, 1, 3)
        s = (q @ jnp.swapaxes(k, -1, -2)) * (1.0 / math.sqrt(hs))
        p = jax.nn.softmax(s, axis=-1)
        y = (p @ v).transpose(0, 2, 1, 3).reshape(B, T, C)
        x = ln(x + (y @ lp["wo"] + lp["bo"]), lp["ln1_g"], lp["ln1_b"])
        h = jax.nn.gelu(x @ lp["wi"] + lp["bi"], approximate=False)
        x = ln(x + (h @ lp["wo2"] + lp["bo2"]), lp["ln2_g"], lp["ln2_b"])
    pool = jnp.tanh(x[:, 0] @ raw["pool_w"] + raw["pool_b"])
    return x, pool


# ----------------------------- main ------------------------------------------

if __name__ == "__main__":
    config = BertConfig(n_ctx=64, vocab_size=1000, n_layer=2, n_head=4, n_embd=32)
    B, T = 2, 8

    key = jax.random.PRNGKey(0)
    k_ids, k_params = jax.random.split(key)
    ids = jax.random.randint(k_ids, (B, T), 0, config.vocab_size, dtype=jnp.int32)

    raw_params = init_raw_params(config, k_params)
    params = prepare_params(raw_params, config)

    x_out, pool_out = bert_model_forward(ids, params, config)
    jax.block_until_ready((x_out, pool_out))

    assert x_out.shape == (B, T, config.n_embd)
    assert pool_out.shape == (B, config.n_embd)
    assert bool(jnp.all(jnp.isfinite(x_out))) and bool(jnp.all(jnp.isfinite(pool_out)))

    # loose tolerance: bf16 weights + approx softmax reciprocal vs f32 reference
    x_ref, pool_ref = bert_reference(ids, raw_params, config)
    assert float(jnp.max(jnp.abs(x_out - x_ref))) < 1e-1
    assert float(jnp.max(jnp.abs(pool_out - pool_ref))) < 5e-2

    print("KERNEL_OK")
</pallas_src>

<mosaic_0001>
module attributes {stable_mosaic.version = 11 : i64} {
  func.func @bert_fused_kernel(%arg0: i32, %arg1: memref<16x128xf32, #tpu.memory_space<vmem>>, %arg2: memref<1x128xf32, #tpu.memory_space<vmem>>, %arg3: memref<1x128xf32, #tpu.memory_space<vmem>>, %arg4: memref<1x128x96xbf16, #tpu.memory_space<vmem>>, %arg5: memref<1x1x96xf32, #tpu.memory_space<vmem>>, %arg6: memref<1x32x128xbf16, #tpu.memory_space<vmem>>, %arg7: memref<1x1x128xf32, #tpu.memory_space<vmem>>, %arg8: memref<1x1x128xf32, #tpu.memory_space<vmem>>, %arg9: memref<1x1x128xf32, #tpu.memory_space<vmem>>, %arg10: memref<1x128x128xbf16, #tpu.memory_space<vmem>>, %arg11: memref<1x1x128xf32, #tpu.memory_space<vmem>>, %arg12: memref<1x128x128xbf16, #tpu.memory_space<vmem>>, %arg13: memref<1x1x128xf32, #tpu.memory_space<vmem>>, %arg14: memref<1x1x128xf32, #tpu.memory_space<vmem>>, %arg15: memref<1x1x128xf32, #tpu.memory_space<vmem>>, %arg16: memref<128x128xbf16, #tpu.memory_space<vmem>>, %arg17: memref<1x128xf32, #tpu.memory_space<vmem>>, %arg18: memref<16x128xf32, #tpu.memory_space<vmem>>, %arg19: memref<2x128xf32, #tpu.memory_space<vmem>>) attributes {dimension_semantics = [#tpu.dimension_semantics<arbitrary>], iteration_bounds = array<i64: 2>, scalar_prefetch = 0 : i64, scratch_operands = 0 : i64, tpu.core_type = #tpu.core_type<tc>, window_params = [{pipeline_mode = #tpu.pipeline_mode<synchronous>, transform_indices = @transform_0, window_bounds = array<i64: 16, 128>}, {pipeline_mode = #tpu.pipeline_mode<synchronous>, transform_indices = @transform_1, window_bounds = array<i64: 1, 128>}, {pipeline_mode = #tpu.pipeline_mode<synchronous>, transform_indices = @transform_2, window_bounds = array<i64: 1, 128>}, {transform_indices = @transform_3, window_bounds = array<i64: 1, 128, 96>}, {transform_indices = @transform_4, window_bounds = array<i64: 1, 1, 96>}, {transform_indices = @transform_5, window_bounds = array<i64: 1, 32, 128>}, {transform_indices = @transform_6, window_bounds = array<i64: 1, 1, 128>}, {transform_indices = @transform_7, window_bounds = array<i64: 1, 1, 128>}, {transform_indices = @transform_8, window_bounds = array<i64: 1, 1, 128>}, {transform_indices = @transform_9, window_bounds = array<i64: 1, 128, 128>}, {transform_indices = @transform_10, window_bounds = array<i64: 1, 1, 128>}, {transform_indices = @transform_11, window_bounds = array<i64: 1, 128, 128>}, {transform_indices = @transform_12, window_bounds = array<i64: 1, 1, 128>}, {transform_indices = @transform_13, window_bounds = array<i64: 1, 1, 128>}, {transform_indices = @transform_14, window_bounds = array<i64: 1, 1, 128>}, {pipeline_mode = #tpu.pipeline_mode<synchronous>, transform_indices = @transform_15, window_bounds = array<i64: 128, 128>}, {pipeline_mode = #tpu.pipeline_mode<synchronous>, transform_indices = @transform_16, window_bounds = array<i64: 1, 128>}, {pipeline_mode = #tpu.pipeline_mode<synchronous>, transform_indices = @transform_17, window_bounds = array<i64: 16, 128>}, {pipeline_mode = #tpu.pipeline_mode<synchronous>, transform_indices = @transform_18, window_bounds = array<i64: 2, 128>}]} {
    %c0_i32 = arith.constant 0 : i32
    %0 = arith.cmpi eq, %arg0, %c0_i32 : i32
    %1 = arith.extui %0 : i1 to i32
    %c0_i32_0 = arith.constant 0 : i32
    %2 = arith.cmpi ne, %1, %c0_i32_0 : i32
    scf.if %2 {
      %c0_61 = arith.constant 0 : index
      %c0_62 = arith.constant 0 : index
      %129 = vector.load %arg1[%c0_61, %c0_62] : memref<16x128xf32, #tpu.memory_space<vmem>>, vector<16x128xf32>
      %c0_63 = arith.constant 0 : index
      %c0_64 = arith.constant 0 : index
      %130 = vector.load %arg2[%c0_63, %c0_64] : memref<1x128xf32, #tpu.memory_space<vmem>>, vector<1x128xf32>
      %c0_65 = arith.constant 0 : index
      %c0_66 = arith.constant 0 : index
      %131 = vector.load %arg3[%c0_65, %c0_66] : memref<1x128xf32, #tpu.memory_space<vmem>>, vector<1x128xf32>
      %cst_67 = arith.constant dense<0.000000e+00> : vector<16xf32>
      %132 = vector.multi_reduction <add>, %129, %cst_67 [1] : vector<16x128xf32> to vector<16xf32>
      %133 = vector.shape_cast %132 : vector<16xf32> to vector<16x1xf32>
      %134 = arith.mulf %129, %129 : vector<16x128xf32>
      %cst_68 = arith.constant dense<0.000000e+00> : vector<16xf32>
      %135 = vector.multi_reduction <add>, %134, %cst_68 [1] : vector<16x128xf32> to vector<16xf32>
      %136 = vector.shape_cast %135 : vector<16xf32> to vector<16x1xf32>
      %cst_69 = arith.constant 3.125000e-02 : f32
      %137 = vector.broadcast %cst_69 : f32 to vector<16x1xf32>
      %138 = arith.mulf %133, %137 : vector<16x1xf32>
      %cst_70 = arith.constant 3.125000e-02 : f32
      %139 = vector.broadcast %cst_70 : f32 to vector<16x1xf32>
      %140 = arith.mulf %136, %139 : vector<16x1xf32>
      %141 = arith.mulf %138, %138 : vector<16x1xf32>
      %142 = arith.subf %140, %141 : vector<16x1xf32>
      %cst_71 = arith.constant 9.99999996E-13 : f32
      %143 = vector.broadcast %cst_71 : f32 to vector<16x1xf32>
      %144 = arith.addf %142, %143 : vector<16x1xf32>
      %145 = math.rsqrt %144 : vector<16x1xf32>
      %146 = vector.broadcast %138 : vector<16x1xf32> to vector<16x128xf32>
      %147 = arith.subf %129, %146 : vector<16x128xf32>
      %148 = vector.broadcast %145 : vector<16x1xf32> to vector<16x128xf32>
      %149 = arith.mulf %147, %148 : vector<16x128xf32>
      %150 = vector.broadcast %130 : vector<1x128xf32> to vector<16x128xf32>
      %151 = arith.mulf %149, %150 : vector<16x128xf32>
      %152 = vector.broadcast %131 : vector<1x128xf32> to vector<16x128xf32>
      %153 = arith.addf %151, %152 : vector<16x128xf32>
      %c0_72 = arith.constant 0 : index
      %c0_73 = arith.constant 0 : index
      %154 = vector.load %arg18[%c0_72, %c0_73] : memref<16x128xf32, #tpu.memory_space<vmem>>, vector<16x128xf32>
      tpu.vector_store %arg18[%c0_72, %c0_73], %153 {strides = array<i32>} : memref<16x128xf32, #tpu.memory_space<vmem>>, vector<16x128xf32>,
    } else {
    }
    %c0 = arith.constant 0 : index
    %c0_1 = arith.constant 0 : index
    %3 = vector.load %arg18[%c0, %c0_1] : memref<16x128xf32, #tpu.memory_space<vmem>>, vector<16x128xf32>
    %4 = arith.truncf %3 : vector<16x128xf32> to vector<16x128xbf16>
    %c0_2 = arith.constant 0 : index
    %c0_3 = arith.constant 0 : index
    %c0_4 = arith.constant 0 : index
    %5 = vector.load %arg4[%c0_2, %c0_3, %c0_4] : memref<1x128x96xbf16, #tpu.memory_space<vmem>>, vector<1x128x96xbf16>
    %6 = vector.shape_cast %5 : vector<1x128x96xbf16> to vector<128x96xbf16>
    %cst = arith.constant dense<0.000000e+00> : vector<16x96xf32>
    %7 = tpu.matmul %4, %6, %cst {dimension_numbers = #tpu.dot_dimension_numbers<[1], [0], [0], [1], [0, 0, 1, 1], [], []>} : vector<16x128xbf16>, vector<128x96xbf16>, vector<16x96xf32> -> vector<16x96xf32>
    %c0_5 = arith.constant 0 : index
    %c0_6 = arith.constant 0 : index
    %c0_7 = arith.constant 0 : index
    %8 = vector.load %arg5[%c0_5, %c0_6, %c0_7] : memref<1x1x96xf32, #tpu.memory_space<vmem>>, vector<1x1x96xf32>
    %9 = vector.shape_cast %8 : vector<1x1x96xf32> to vector<1x96xf32>
    %10 = vector.broadcast %9 : vector<1x96xf32> to vector<16x96xf32>
    %11 = arith.addf %7, %10 : vector<16x96xf32>
    %12 = vector.extract_strided_slice %11 {offsets = [0, 0], sizes = [16, 32], strides = [1, 1]} : vector<16x96xf32> to vector<16x32xf32>
    %13 = vector.shape_cast %12 : vector<16x32xf32> to vector<2x8x4x8xf32>
    %14 = tpu.transpose %13, [0, 2, 1, 3] : vector<2x8x4x8xf32> -> vector<2x4x8x8xf32>
    %15 = vector.shape_cast %14 : vector<2x4x8x8xf32> to vector<8x8x8xf32>
    %16 = vector.extract_strided_slice %11 {offsets = [0, 32], sizes = [16, 32], strides = [1, 1]} : vector<16x96xf32> to vector<16x32xf32>
    %17 = vector.shape_cast %16 : vector<16x32xf32> to vector<2x8x4x8xf32>
    %18 = tpu.transpose %17, [0, 2, 1, 3] : vector<2x8x4x8xf32> -> vector<2x4x8x8xf32>
    %19 = vector.shape_cast %18 : vector<2x4x8x8xf32> to vector<8x8x8xf32>
    %20 = vector.extract_strided_slice %11 {offsets = [0, 64], sizes = [16, 32], strides = [1, 1]} : vector<16x96xf32> to vector<16x32xf32>
    %21 = vector.shape_cast %20 : vector<16x32xf32> to vector<2x8x4x8xf32>
    %22 = tpu.transpose %21, [0, 2, 1, 3] : vector<2x8x4x8xf32> -> vector<2x4x8x8xf32>
    %23 = vector.shape_cast %22 : vector<2x4x8x8xf32> to vector<8x8x8xf32>
    "tpu.trace_start"() <{level = 10 : i32, message = "bqd,bkd->bqk"}> : () -> ()
    %cst_8 = arith.constant dense<0.000000e+00> : vector<8x8x8xf32>
    %24 = tpu.matmul %15, %19, %cst_8 {dimension_numbers = #tpu.dot_dimension_numbers<[2], [2], [1], [1], [0, 0, 0, 1, 1, 1], [0], [0]>} : vector<8x8x8xf32>, vector<8x8x8xf32>, vector<8x8x8xf32> -> vector<8x8x8xf32>
    "tpu.trace_stop"() : () -> ()
    %cst_9 = arith.constant dense<0xFF800000> : vector<8x8xf32>
    %25 = vector.multi_reduction <maximumf>, %24, %cst_9 [2] : vector<8x8x8xf32> to vector<8x8xf32>
    %26 = vector.shape_cast %25 : vector<8x8xf32> to vector<8x8x1xf32>
    %27 = vector.broadcast %26 : vector<8x8x1xf32> to vector<8x8x8xf32>
    %28 = arith.subf %24, %27 : vector<8x8x8xf32>
    %29 = math.exp %28 : vector<8x8x8xf32>
    %cst_10 = arith.constant dense<0.000000e+00> : vector<8x8xf32>
    %30 = vector.multi_reduction <add>, %29, %cst_10 [2] : vector<8x8x8xf32> to vector<8x8xf32>
    %31 = vector.shape_cast %30 : vector<8x8xf32> to vector<8x8x1xf32>
    %32 = tpu.reciprocal %31 {approx = true} : vector<8x8x1xf32> -> vector<8x8x1xf32>
    %33 = vector.broadcast %32 : vector<8x8x1xf32> to vector<8x8x8xf32>
    %34 = arith.mulf %29, %33 : vector<8x8x8xf32>
    "tpu.trace_start"() <{level = 10 : i32, message = "bqk,bkd->bqd"}> : () -> ()
    %cst_11 = arith.constant dense<0.000000e+00> : vector<8x8x8xf32>
    %35 = tpu.matmul %34, %23, %cst_11 {dimension_numbers = #tpu.dot_dimension_numbers<[2], [1], [1], [2], [0, 0, 0, 1, 1, 2], [0], [0]>} : vector<8x8x8xf32>, vector<8x8x8xf32>, vector<8x8x8xf32> -> vector<8x8x8xf32>
    "tpu.trace_stop"() : () -> ()
    %36 = vector.shape_cast %35 : vector<8x8x8xf32> to vector<2x4x8x8xf32>
    %37 = tpu.transpose %36, [0, 2, 1, 3] : vector<2x4x8x8xf32> -> vector<2x8x4x8xf32>
    %38 = vector.shape_cast %37 : vector<2x8x4x8xf32> to vector<16x32xf32>
    %39 = arith.truncf %38 : vector<16x32xf32> to vector<16x32xbf16>
    %c0_12 = arith.constant 0 : index
    %c0_13 = arith.constant 0 : index
    %c0_14 = arith.constant 0 : index
    %40 = vector.load %arg6[%c0_12, %c0_13, %c0_14] : memref<1x32x128xbf16, #tpu.memory_space<vmem>>, vector<1x32x128xbf16>
    %41 = vector.shape_cast %40 : vector<1x32x128xbf16> to vector<32x128xbf16>
    %cst_15 = arith.constant dense<0.000000e+00> : vector<16x128xf32>
    %42 = tpu.matmul %39, %41, %cst_15 {dimension_numbers = #tpu.dot_dimension_numbers<[1], [0], [0], [1], [0, 0, 1, 1], [], []>} : vector<16x32xbf16>, vector<32x128xbf16>, vector<16x128xf32> -> vector<16x128xf32>
    %c0_16 = arith.constant 0 : index
    %c0_17 = arith.constant 0 : index
    %c0_18 = arith.constant 0 : index
    %43 = vector.load %arg7[%c0_16, %c0_17, %c0_18] : memref<1x1x128xf32, #tpu.memory_space<vmem>>, vector<1x1x128xf32>
    %44 = vector.shape_cast %43 : vector<1x1x128xf32> to vector<1x128xf32>
    %45 = vector.broadcast %44 : vector<1x128xf32> to vector<16x128xf32>
    %46 = arith.addf %42, %45 : vector<16x128xf32>
    %47 = arith.addf %3, %46 : vector<16x128xf32>
    %c0_19 = arith.constant 0 : index
    %c0_20 = arith.constant 0 : index
    %c0_21 = arith.constant 0 : index
    %48 = vector.load %arg8[%c0_19, %c0_20, %c0_21] : memref<1x1x128xf32, #tpu.memory_space<vmem>>, vector<1x1x128xf32>
    %49 = vector.shape_cast %48 : vector<1x1x128xf32> to vector<1x128xf32>
    %c0_22 = arith.constant 0 : index
    %c0_23 = arith.constant 0 : index
    %c0_24 = arith.constant 0 : index
    %50 = vector.load %arg9[%c0_22, %c0_23, %c0_24] : memref<1x1x128xf32, #tpu.memory_space<vmem>>, vector<1x1x128xf32>
    %51 = vector.shape_cast %50 : vector<1x1x128xf32> to vector<1x128xf32>
    %cst_25 = arith.constant dense<0.000000e+00> : vector<16xf32>
    %52 = vector.multi_reduction <add>, %47, %cst_25 [1] : vector<16x128xf32> to vector<16xf32>
    %53 = vector.shape_cast %52 : vector<16xf32> to vector<16x1xf32>
    %54 = arith.mulf %47, %47 : vector<16x128xf32>
    %cst_26 = arith.constant dense<0.000000e+00> : vector<16xf32>
    %55 = vector.multi_reduction <add>, %54, %cst_26 [1] : vector<16x128xf32> to vector<16xf32>
    %56 = vector.shape_cast %55 : vector<16xf32> to vector<16x1xf32>
    %cst_27 = arith.constant 3.125000e-02 : f32
    %57 = vector.broadcast %cst_27 : f32 to vector<16x1xf32>
    %58 = arith.mulf %53, %57 : vector<16x1xf32>
    %cst_28 = arith.constant 3.125000e-02 : f32
    %59 = vector.broadcast %cst_28 : f32 to vector<16x1xf32>
    %60 = arith.mulf %56, %59 : vector<16x1xf32>
    %61 = arith.mulf %58, %58 : vector<16x1xf32>
    %62 = arith.subf %60, %61 : vector<16x1xf32>
    %cst_29 = arith.constant 9.99999996E-13 : f32
    %63 = vector.broadcast %cst_29 : f32 to vector<16x1xf32>
    %64 = arith.addf %62, %63 : vector<16x1xf32>
    %65 = math.rsqrt %64 : vector<16x1xf32>
    %66 = vector.broadcast %58 : vector<16x1xf32> to vector<16x128xf32>
    %67 = arith.subf %47, %66 : vector<16x128xf32>
    %68 = vector.broadcast %65 : vector<16x1xf32> to vector<16x128xf32>
    %69 = arith.mulf %67, %68 : vector<16x128xf32>
    %70 = vector.broadcast %49 : vector<1x128xf32> to vector<16x128xf32>
    %71 = arith.mulf %69, %70 : vector<16x128xf32>
    %72 = vector.broadcast %51 : vector<1x128xf32> to vector<16x128xf32>
    %73 = arith.addf %71, %72 : vector<16x128xf32>
    %74 = arith.truncf %73 : vector<16x128xf32> to vector<16x128xbf16>
    %c0_30 = arith.constant 0 : index
    %c0_31 = arith.constant 0 : index
    %c0_32 = arith.constant 0 : index
    %75 = vector.load %arg10[%c0_30, %c0_31, %c0_32] : memref<1x128x128xbf16, #tpu.memory_space<vmem>>, vector<1x128x128xbf16>
    %76 = vector.shape_cast %75 : vector<1x128x128xbf16> to vector<128x128xbf16>
    %cst_33 = arith.constant dense<0.000000e+00> : vector<16x128xf32>
    %77 = tpu.matmul %74, %76, %cst_33 {dimension_numbers = #tpu.dot_dimension_numbers<[1], [0], [0], [1], [0, 0, 1, 1], [], []>} : vector<16x128xbf16>, vector<128x128xbf16>, vector<16x128xf32> -> vector<16x128xf32>
    %c0_34 = arith.constant 0 : index
    %c0_35 = arith.constant 0 : index
    %c0_36 = arith.constant 0 : index
    %78 = vector.load %arg11[%c0_34, %c0_35, %c0_36] : memref<1x1x128xf32, #tpu.memory_space<vmem>>, vector<1x1x128xf32>
    %79 = vector.shape_cast %78 : vector<1x1x128xf32> to vector<1x128xf32>
    %80 = vector.broadcast %79 : vector<1x128xf32> to vector<16x128xf32>
    %81 = arith.addf %77, %80 : vector<16x128xf32>
    %cst_37 = arith.constant 5.000000e-01 : f32
    %82 = vector.broadcast %cst_37 : f32 to vector<16x128xf32>
    %83 = arith.mulf %82, %81 : vector<16x128xf32>
    %cst_38 = arith.constant 0.707106769 : f32
    %84 = vector.broadcast %cst_38 : f32 to vector<16x128xf32>
    %85 = arith.mulf %81, %84 : vector<16x128xf32>
    %86 = math.erf %85 : vector<16x128xf32>
    %cst_39 = arith.constant 1.000000e+00 : f32
    %87 = vector.broadcast %cst_39 : f32 to vector<16x128xf32>
    %88 = arith.addf %87, %86 : vector<16x128xf32>
    %89 = arith.mulf %83, %88 : vector<16x128xf32>
    %90 = arith.truncf %89 : vector<16x128xf32> to vector<16x128xbf16>
    %c0_40 = arith.constant 0 : index
    %c0_41 = arith.constant 0 : index
    %c0_42 = arith.constant 0 : index
    %91 = vector.load %arg12[%c0_40, %c0_41, %c0_42] : memref<1x128x128xbf16, #tpu.memory_space<vmem>>, vector<1x128x128xbf16>
    %92 = vector.shape_cast %91 : vector<1x128x128xbf16> to vector<128x128xbf16>
    %cst_43 = arith.constant dense<0.000000e+00> : vector<16x128xf32>
    %93 = tpu.matmul %90, %92, %cst_43 {dimension_numbers = #tpu.dot_dimension_numbers<[1], [0], [0], [1], [0, 0, 1, 1], [], []>} : vector<16x128xbf16>, vector<128x128xbf16>, vector<16x128xf32> -> vector<16x128xf32>
    %c0_44 = arith.constant 0 : index
    %c0_45 = arith.constant 0 : index
    %c0_46 = arith.constant 0 : index
    %94 = vector.load %arg13[%c0_44, %c0_45, %c0_46] : memref<1x1x128xf32, #tpu.memory_space<vmem>>, vector<1x1x128xf32>
    %95 = vector.shape_cast %94 : vector<1x1x128xf32> to vector<1x128xf32>
    %96 = vector.broadcast %95 : vector<1x128xf32> to vector<16x128xf32>
    %97 = arith.addf %93, %96 : vector<16x128xf32>
    %98 = arith.addf %73, %97 : vector<16x128xf32>
    %c0_47 = arith.constant 0 : index
    %c0_48 = arith.constant 0 : index
    %c0_49 = arith.constant 0 : index
    %99 = vector.load %arg14[%c0_47, %c0_48, %c0_49] : memref<1x1x128xf32, #tpu.memory_space<vmem>>, vector<1x1x128xf32>
    %100 = vector.shape_cast %99 : vector<1x1x128xf32> to vector<1x128xf32>
    %c0_50 = arith.constant 0 : index
    %c0_51 = arith.constant 0 : index
    %c0_52 = arith.constant 0 : index
    %101 = vector.load %arg15[%c0_50, %c0_51, %c0_52] : memref<1x1x128xf32, #tpu.memory_space<vmem>>, vector<1x1x128xf32>
    %102 = vector.shape_cast %101 : vector<1x1x128xf32> to vector<1x128xf32>
    %cst_53 = arith.constant dense<0.000000e+00> : vector<16xf32>
    %103 = vector.multi_reduction <add>, %98, %cst_53 [1] : vector<16x128xf32> to vector<16xf32>
    %104 = vector.shape_cast %103 : vector<16xf32> to vector<16x1xf32>
    %105 = arith.mulf %98, %98 : vector<16x128xf32>
    %cst_54 = arith.constant dense<0.000000e+00> : vector<16xf32>
    %106 = vector.multi_reduction <add>, %105, %cst_54 [1] : vector<16x128xf32> to vector<16xf32>
    %107 = vector.shape_cast %106 : vector<16xf32> to vector<16x1xf32>
    %cst_55 = arith.constant 3.125000e-02 : f32
    %108 = vector.broadcast %cst_55 : f32 to vector<16x1xf32>
    %109 = arith.mulf %104, %108 : vector<16x1xf32>
    %cst_56 = arith.constant 3.125000e-02 : f32
    %110 = vector.broadcast %cst_56 : f32 to vector<16x1xf32>
    %111 = arith.mulf %107, %110 : vector<16x1xf32>
    %112 = arith.mulf %109, %109 : vector<16x1xf32>
    %113 = arith.subf %111, %112 : vector<16x1xf32>
    %cst_57 = arith.constant 9.99999996E-13 : f32
    %114 = vector.broadcast %cst_57 : f32 to vector<16x1xf32>
    %115 = arith.addf %113, %114 : vector<16x1xf32>
    %116 = math.rsqrt %115 : vector<16x1xf32>
    %117 = vector.broadcast %109 : vector<16x1xf32> to vector<16x128xf32>
    %118 = arith.subf %98, %117 : vector<16x128xf32>
    %119 = vector.broadcast %116 : vector<16x1xf32> to vector<16x128xf32>
    %120 = arith.mulf %118, %119 : vector<16x128xf32>
    %121 = vector.broadcast %100 : vector<1x128xf32> to vector<16x128xf32>
    %122 = arith.mulf %120, %121 : vector<16x128xf32>
    %123 = vector.broadcast %102 : vector<1x128xf32> to vector<16x128xf32>
    %124 = arith.addf %122, %123 : vector<16x128xf32>
    %c0_58 = arith.constant 0 : index
    %c0_59 = arith.constant 0 : index
    %125 = vector.load %arg18[%c0_58, %c0_59] : memref<16x128xf32, #tpu.memory_space<vmem>>, vector<16x128xf32>
    tpu.vector_store %arg18[%c0_58, %c0_59], %124 {strides = array<i32>} : memref<16x128xf32, #tpu.memory_space<vmem>>, vector<16x128xf32>,
    %c1_i32 = arith.constant 1 : i32
    %126 = arith.cmpi eq, %arg0, %c1_i32 : i32
    %127 = arith.extui %126 : i1 to i32
    %c0_i32_60 = arith.constant 0 : i32
    %128 = arith.cmpi ne, %127, %c0_i32_60 : i32
    scf.if %128 {
      %129 = vector.shape_cast %124 : vector<16x128xf32> to vector<2x8x128xf32>
      %130 = vector.extract_strided_slice %129 {offsets = [0, 0, 0], sizes = [2, 1, 128], strides = [1, 1, 1]} : vector<2x8x128xf32> to vector<2x1x128xf32>
      %131 = vector.shape_cast %130 : vector<2x1x128xf32> to vector<2x128xf32>
      %132 = arith.truncf %131 : vector<2x128xf32> to vector<2x128xbf16>
      %c0_61 = arith.constant 0 : index
      %c0_62 = arith.constant 0 : index
      %133 = vector.load %arg16[%c0_61, %c0_62] : memref<128x128xbf16, #tpu.memory_space<vmem>>, vector<128x128xbf16>
      %cst_63 = arith.constant dense<0.000000e+00> : vector<2x128xf32>
      %134 = tpu.matmul %132, %133, %cst_63 {dimension_numbers = #tpu.dot_dimension_numbers<[1], [0], [0], [1], [0, 0, 1, 1], [], []>} : vector<2x128xbf16>, vector<128x128xbf16>, vector<2x128xf32> -> vector<2x128xf32>
      %c0_64 = arith.constant 0 : index
      %c0_65 = arith.constant 0 : index
      %135 = vector.load %arg17[%c0_64, %c0_65] : memref<1x128xf32, #tpu.memory_space<vmem>>, vector<1x128xf32>
      %136 = vector.broadcast %135 : vector<1x128xf32> to vector<2x128xf32>
      %137 = arith.addf %134, %136 : vector<2x128xf32>
      %138 = math.tanh %137 : vector<2x128xf32>
      %c0_66 = arith.constant 0 : index
      %c0_67 = arith.constant 0 : index
      %139 = vector.load %arg19[%c0_66, %c0_67] : memref<2x128xf32, #tpu.memory_space<vmem>>, vector<2x128xf32>
      tpu.vector_store %arg19[%c0_66, %c0_67], %138 {strides = array<i32>} : memref<2x128xf32, #tpu.memory_space<vmem>>, vector<2x128xf32>,
    } else {
    }
    return
  }
  func.func @transform_0(%arg0: i32) -> (i32, i32) {
    %c0_i32 = arith.constant 0 : i32
    %c0_i32_0 = arith.constant 0 : i32
    %c0_i32_1 = arith.constant 0 : i32
    return %c0_i32, %c0_i32_0 : i32, i32
  }
  func.func @transform_1(%arg0: i32) -> (i32, i32) {
    %c0_i32 = arith.constant 0 : i32
    %c0_i32_0 = arith.constant 0 : i32
    %c0_i32_1 = arith.constant 0 : i32
    return %c0_i32, %c0_i32_0 : i32, i32
  }
  func.func @transform_2(%arg0: i32) -> (i32, i32) {
    %c0_i32 = arith.constant 0 : i32
    %c0_i32_0 = arith.constant 0 : i32
    %c0_i32_1 = arith.constant 0 : i32
    return %c0_i32, %c0_i32_0 : i32, i32
  }
  func.func @transform_3(%arg0: i32) -> (i32, i32, i32) {
    %c0_i32 = arith.constant 0 : i32
    %c0_i32_0 = arith.constant 0 : i32
    %c0_i32_1 = arith.constant 0 : i32
    return %arg0, %c0_i32, %c0_i32_0 : i32, i32, i32
  }
  func.func @transform_4(%arg0: i32) -> (i32, i32, i32) {
    %c0_i32 = arith.constant 0 : i32
    %c0_i32_0 = arith.constant 0 : i32
    %c0_i32_1 = arith.constant 0 : i32
    return %arg0, %c0_i32, %c0_i32_0 : i32, i32, i32
  }
  func.func @transform_5(%arg0: i32) -> (i32, i32, i32) {
    %c0_i32 = arith.constant 0 : i32
    %c0_i32_0 = arith.constant 0 : i32
    %c0_i32_1 = arith.constant 0 : i32
    return %arg0, %c0_i32, %c0_i32_0 : i32, i32, i32
  }
  func.func @transform_6(%arg0: i32) -> (i32, i32, i32) {
    %c0_i32 = arith.constant 0 : i32
    %c0_i32_0 = arith.constant 0 : i32
    %c0_i32_1 = arith.constant 0 : i32
    return %arg0, %c0_i32, %c0_i32_0 : i32, i32, i32
  }
  func.func @transform_7(%arg0: i32) -> (i32, i32, i32) {
    %c0_i32 = arith.constant 0 : i32
    %c0_i32_0 = arith.constant 0 : i32
    %c0_i32_1 = arith.constant 0 : i32
    return %arg0, %c0_i32, %c0_i32_0 : i32, i32, i32
  }
  func.func @transform_8(%arg0: i32) -> (i32, i32, i32) {
    %c0_i32 = arith.constant 0 : i32
    %c0_i32_0 = arith.constant 0 : i32
    %c0_i32_1 = arith.constant 0 : i32
    return %arg0, %c0_i32, %c0_i32_0 : i32, i32, i32
  }
  func.func @transform_9(%arg0: i32) -> (i32, i32, i32) {
    %c0_i32 = arith.constant 0 : i32
    %c0_i32_0 = arith.constant 0 : i32
    %c0_i32_1 = arith.constant 0 : i32
    return %arg0, %c0_i32, %c0_i32_0 : i32, i32, i32
  }
  func.func @transform_10(%arg0: i32) -> (i32, i32, i32) {
    %c0_i32 = arith.constant 0 : i32
    %c0_i32_0 = arith.constant 0 : i32
    %c0_i32_1 = arith.constant 0 : i32
    return %arg0, %c0_i32, %c0_i32_0 : i32, i32, i32
  }
  func.func @transform_11(%arg0: i32) -> (i32, i32, i32) {
    %c0_i32 = arith.constant 0 : i32
    %c0_i32_0 = arith.constant 0 : i32
    %c0_i32_1 = arith.constant 0 : i32
    return %arg0, %c0_i32, %c0_i32_0 : i32, i32, i32
  }
  func.func @transform_12(%arg0: i32) -> (i32, i32, i32) {
    %c0_i32 = arith.constant 0 : i32
    %c0_i32_0 = arith.constant 0 : i32
    %c0_i32_1 = arith.constant 0 : i32
    return %arg0, %c0_i32, %c0_i32_0 : i32, i32, i32
  }
  func.func @transform_13(%arg0: i32) -> (i32, i32, i32) {
    %c0_i32 = arith.constant 0 : i32
    %c0_i32_0 = arith.constant 0 : i32
    %c0_i32_1 = arith.constant 0 : i32
    return %arg0, %c0_i32, %c0_i32_0 : i32, i32, i32
  }
  func.func @transform_14(%arg0: i32) -> (i32, i32, i32) {
    %c0_i32 = arith.constant 0 : i32
    %c0_i32_0 = arith.constant 0 : i32
    %c0_i32_1 = arith.constant 0 : i32
    return %arg0, %c0_i32, %c0_i32_0 : i32, i32, i32
  }
  func.func @transform_15(%arg0: i32) -> (i32, i32) {
    %c0_i32 = arith.constant 0 : i32
    %c0_i32_0 = arith.constant 0 : i32
    %c0_i32_1 = arith.constant 0 : i32
    return %c0_i32, %c0_i32_0 : i32, i32
  }
  func.func @transform_16(%arg0: i32) -> (i32, i32) {
    %c0_i32 = arith.constant 0 : i32
    %c0_i32_0 = arith.constant 0 : i32
    %c0_i32_1 = arith.constant 0 : i32
    return %c0_i32, %c0_i32_0 : i32, i32
  }
  func.func @transform_17(%arg0: i32) -> (i32, i32) {
    %c0_i32 = arith.constant 0 : i32
    %c0_i32_0 = arith.constant 0 : i32
    %c0_i32_1 = arith.constant 0 : i32
    return %c0_i32, %c0_i32_0 : i32, i32
  }
  func.func @transform_18(%arg0: i32) -> (i32, i32) {
    %c0_i32 = arith.constant 0 : i32
    %c0_i32_0 = arith.constant 0 : i32
    %c0_i32_1 = arith.constant 0 : i32
    return %c0_i32, %c0_i32_0 : i32, i32
  }
}

</mosaic_0001>

<llo_original>
// kernel: tpu_custom_call.1
$region0: #{tpu_custom_call.1}
  #allocation0 [shape = 'u32[]', space=smem, size = 0x4, offset = 0x4, fixed_abs, tag = 'smem constant byte address 0x4 - core index']
  #allocation1 [shape = 'u32[72,128]{1,0:T(1,128)}', space=vmem, size = 0x9000, scoped, tag = 'internal scratch']
  %s0 = inlined_call_operand.hbm [shape: f32[16,128], index: 0, kind: input, shape index: {}]
  %s1 = inlined_call_operand.hbm [shape: f32[1,128], index: 1, kind: input, shape index: {}]
  %s2 = inlined_call_operand.hbm [shape: f32[1,128], index: 2, kind: input, shape index: {}]
  %s3 = inlined_call_operand.vmem [shape: bf16[2,128,96], index: 3, kind: input, shape index: {}]
  %s4 = inlined_call_operand.vmem [shape: f32[2,1,96], index: 4, kind: input, shape index: {}]
  %s5 = inlined_call_operand.vmem [shape: bf16[2,32,128], index: 5, kind: input, shape index: {}]
  %s6 = inlined_call_operand.vmem [shape: f32[2,1,128], index: 6, kind: input, shape index: {}]
  %s7 = inlined_call_operand.vmem [shape: f32[2,1,128], index: 7, kind: input, shape index: {}]
  %s8 = inlined_call_operand.vmem [shape: f32[2,1,128], index: 8, kind: input, shape index: {}]
  %s9 = inlined_call_operand.vmem [shape: bf16[2,128,128], index: 9, kind: input, shape index: {}]
  %s10 = inlined_call_operand.hbm [shape: f32[2,1,128], index: 10, kind: input, shape index: {}]
  %s11 = inlined_call_operand.hbm [shape: bf16[2,128,128], index: 11, kind: input, shape index: {}]
  %s12 = inlined_call_operand.vmem [shape: f32[2,1,128], index: 12, kind: input, shape index: {}]
  %s13 = inlined_call_operand.hbm [shape: f32[2,1,128], index: 13, kind: input, shape index: {}]
  %s14 = inlined_call_operand.hbm [shape: f32[2,1,128], index: 14, kind: input, shape index: {}]
  %s15 = inlined_call_operand.vmem [shape: bf16[128,128], index: 15, kind: input, shape index: {}]
  %s16 = inlined_call_operand.vmem [shape: f32[1,128], index: 16, kind: input, shape index: {}]
  %s17 = inlined_call_operand.hbm [shape: f32[16,128], index: 17, kind: output, shape index: {0}]
  %s18 = inlined_call_operand.hbm [shape: f32[2,128], index: 18, kind: output, shape index: {1}]
  %19 = xla_tuple %s17, %s18
  %s20 = sld [smem:[#allocation0]]
  $region145: #{tpu_custom_call.1} parent=0
    _
  %s22 = ssub.s32 1, %s20
  %s23 = scalar_select 0, %s22, %s20
  $region1: #{tpu_custom_call.1} parent=0
    #allocation2 [shape = 'u8[8192]{0}', space=vmem, size = 0x2000, scoped, tag = 'input window, operand 0, single buffered']
    #allocation3 [shape = 's32[2]{0}', space=sflag, size = 0x8, scoped, tag = 'scoped memory for tpu_custom_call.1']
    #allocation4 [shape = 's32[2]{0}', space=sflag, size = 0x8, scoped, tag = 'scoped memory for tpu_custom_call.1']
    #allocation5 [shape = 'u8[512]{0}', space=vmem, size = 0x400, scoped, tag = 'input window, operand 1, single buffered']
    #allocation6 [shape = 's32[1]{0}', space=sflag, size = 0x4, scoped, tag = 'scoped memory for tpu_custom_call.1']
    #allocation7 [shape = 'u8[512]{0}', space=vmem, size = 0x400, scoped, tag = 'input window, operand 2, single buffered']
    #allocation8 [shape = 'u8[1024]{0}', space=vmem, size = 0x400, scoped, tag = 'input window, operand 10']
    #allocation9 [shape = 's32[2]{0}', space=sflag, size = 0x8, scoped, tag = 'scoped memory for tpu_custom_call.1']
    #allocation10 [shape = 'u8[65536]{0}', space=vmem, size = 0x10000, scoped, tag = 'input window, operand 11']
    #allocation11 [shape = 'u8[1024]{0}', space=vmem, size = 0x400, scoped, tag = 'input window, operand 13']
    #allocation12 [shape = 's32[2]{0}', space=sflag, size = 0x8, scoped, tag = 'scoped memory for tpu_custom_call.1']
    #allocation13 [shape = 'u8[1024]{0}', space=vmem, size = 0x400, scoped, tag = 'input window, operand 14']
    #allocation14 [shape = 'u8[8192]{0}', space=vmem, size = 0x2000, scoped, tag = 'output window, operand 0, single buffered']
    #allocation15 [shape = 'u8[1024]{0}', space=vmem, size = 0x400, scoped, tag = 'output window, operand 1, single buffered']
    #allocation16 [shape = 's32[1]{0}', space=sflag, size = 0x4, scoped, tag = 'scoped memory for tpu_custom_call.1']
    %24 = vsyncpa [#allocation3], 0
    %25 = vsyncpa [#allocation6], 0
    %26 = vsyncpa [#allocation9], 0
    %s27 = scalar_lea.sflag [#allocation9], 1
    %28 = vsyncpa %s27, 0
    %29 = vsyncpa [#allocation12], 0
    %s30 = scalar_lea.sflag [#allocation12], 1
    %31 = vsyncpa %s30, 0
    %32 = vsyncpa [#allocation4], 0
    %33 = vsyncpa [#allocation16], 0
    loop: start=0, step=1, limit=4
    $region2: #{tpu_custom_call.1} parent=1 // loop_pre_header
      _
    $region3: #{tpu_custom_call.1} parent=1 // loop_header
      %s35 = sphi 0, %s39
      %p36 = scmp.ge.s32.totalorder %s35, 4
      %s43 = sphi 0, %s43
      %s45 = sphi 0, %s43
      %s46 = sphi 0, %s45
      %s60 = sphi 0, %s46
      %s64 = sphi 0, %s64
      %s66 = sphi 0, %s64
      %s67 = sphi 0, %s66
      %s81 = sphi 0, %s67
      %s85 = sphi 0, %s85
      %s87 = sphi 0, %s85
      %s88 = sphi 0, %s87
      %s102 = sphi 0, %s88
      %s108 = sphi 0, %s110
      %s111 = sphi 0, %s108
      %s112 = sphi 0, %s111
      %s128 = sphi 0, %s112
      %s134 = sphi 0, %s136
      %s137 = sphi 0, %s134
      %s138 = sphi 0, %s137
      %s154 = sphi 0, %s138
      %s160 = sphi 0, %s162
      %s163 = sphi 0, %s160
      %s164 = sphi 0, %s163
      %s180 = sphi 0, %s164
      %s186 = sphi 0, %s188
      %s189 = sphi 0, %s186
      %s190 = sphi 0, %s189
      %s206 = sphi 0, %s190
      %s212 = sphi 0, %s214
      %s215 = sphi 0, %s212
      %s216 = sphi 0, %s215
      %s232 = sphi 0, %s216
      %s238 = sphi 0, %s240
      %s241 = sphi 0, %s238
      %s242 = sphi 0, %s241
      %s258 = sphi 0, %s242
      %s264 = sphi 0, %s266
      %s267 = sphi 0, %s264
      %s268 = sphi 0, %s267
      %s284 = sphi 0, %s268
      %s290 = sphi 0, %s292
      %s293 = sphi 0, %s290
      %s294 = sphi 0, %s293
      %s310 = sphi 0, %s294
      %s316 = sphi 0, %s318
      %s319 = sphi 0, %s316
      %s320 = sphi 0, %s319
      %s336 = sphi 0, %s320
      %s342 = sphi 0, %s344
      %s345 = sphi 0, %s342
      %s346 = sphi 0, %s345
      %s362 = sphi 0, %s346
      %s368 = sphi 0, %s370
      %s371 = sphi 0, %s368
      %s372 = sphi 0, %s371
      %s388 = sphi 0, %s372
      %s394 = sphi 0, %s396
      %s397 = sphi 0, %s394
      %s398 = sphi 0, %s397
      %s414 = sphi 0, %s398
      %s418 = sphi 0, %s418
      %s420 = sphi 0, %s418
      %s421 = sphi 0, %s420
      %s435 = sphi 0, %s421
      %s439 = sphi 0, %s439
      %s441 = sphi 0, %s439
      %s442 = sphi 0, %s441
      %s456 = sphi 0, %s442
      %s460 = sphi 0, %s460
      %s462 = sphi 0, %s460
      %s463 = sphi 0, %s462
      %s477 = sphi 0, %s463
      %s481 = sphi 0, %s481
      %s483 = sphi 0, %s481
      %s484 = sphi 0, %s483
      %s498 = sphi 0, %s484
    $region4: #{tpu_custom_call.1} parent=1 // loop_header_branch
      %38 = sbr.rel (%p36) target = $region8
    $region5: #{tpu_custom_call.1} parent=1 // loop_body
      %s40 = ssub.s32 %s35, 1
      %s41 = ssub.s32 %s35, 2
      %s42 = sadd.s32 %s35, 1
      %s44 = sadd.s32 %s43, 1
      %p47 = scmp.eq.s32.totalorder %s35, 1
      %p48 = scmp.ne.s32.totalorder %s43, %s45
      %p49 = scmp.eq.s32.totalorder %s35, 0
      %p50 = por %p48, %p49
      %p51 = scmp.ne.s32.totalorder %s43, %s45
      %p52 = scmp.eq.s32.totalorder %s40, 1
      %p53 = por %p51, %p52
      %p54 = scmp.ne.s32.totalorder %s45, %s46
      %p55 = scmp.eq.s32.totalorder %s40, 0
      %p56 = por %p54, %p55
      %p57 = scmp.ne.s32.totalorder %s45, %s46
      %p58 = scmp.eq.s32.totalorder %s41, 1
      %p59 = por %p57, %p58
      %p61 = scmp.ne.s32.totalorder %s46, %s60
      %p62 = scmp.eq.s32.totalorder %s41, 0
      %p63 = por %p61, %p62
      %s65 = sadd.s32 %s64, 1
      %p68 = scmp.eq.s32.totalorder %s35, 1
      %p69 = scmp.ne.s32.totalorder %s64, %s66
      %p70 = scmp.eq.s32.totalorder %s35, 0
      %p71 = por %p69, %p70
      %p72 = scmp.ne.s32.totalorder %s64, %s66
      %p73 = scmp.eq.s32.totalorder %s40, 1
      %p74 = por %p72, %p73
      %p75 = scmp.ne.s32.totalorder %s66, %s67
      %p76 = scmp.eq.s32.totalorder %s40, 0
      %p77 = por %p75, %p76
      %p78 = scmp.ne.s32.totalorder %s66, %s67
      %p79 = scmp.eq.s32.totalorder %s41, 1
      %p80 = por %p78, %p79
      %p82 = scmp.ne.s32.totalorder %s67, %s81
      %p83 = scmp.eq.s32.totalorder %s41, 0
      %p84 = por %p82, %p83
      %s86 = sadd.s32 %s85, 1
      %p89 = scmp.eq.s32.totalorder %s35, 1
      %p90 = scmp.ne.s32.totalorder %s85, %s87
      %p91 = scmp.eq.s32.totalorder %s35, 0
      %p92 = por %p90, %p91
      %p93 = scmp.ne.s32.totalorder %s85, %s87
      %p94 = scmp.eq.s32.totalorder %s40, 1
      %p95 = por %p93, %p94
      %p96 = scmp.ne.s32.totalorder %s87, %s88
      %p97 = scmp.eq.s32.totalorder %s40, 0
      %p98 = por %p96, %p97
      %p99 = scmp.ne.s32.totalorder %s87, %s88
      %p100 = scmp.eq.s32.totalorder %s41, 1
      %p101 = por %p99, %p100
      %p103 = scmp.ne.s32.totalorder %s88, %s102
      %p104 = scmp.eq.s32.totalorder %s41, 0
      %p105 = por %p103, %p104
      %s106 = ssub.s32 %s35, %s42
      %p107 = scmp.eq.s32.totalorder %s106, 0
      %s109 = sadd.s32 %s108, 1
      %s110 = scalar_select %p107, %s108, %s109
      %p113 = pneg %p107
      %p114 = scmp.eq.s32.totalorder %s35, 1
      %p115 = por %p113, %p114
      %p116 = scmp.ne.s32.totalorder %s108, %s111
      %p117 = scmp.eq.s32.totalorder %s35, 0
      %p118 = por %p116, %p117
      %p119 = scmp.ne.s32.totalorder %s108, %s111
      %p120 = scmp.eq.s32.totalorder %s40, 1
      %p121 = por %p119, %p120
      %p122 = scmp.ne.s32.totalorder %s111, %s112
      %p123 = scmp.eq.s32.totalorder %s40, 0
      %p124 = por %p122, %p123
      %p125 = scmp.ne.s32.totalorder %s111, %s112
      %p126 = scmp.eq.s32.totalorder %s41, 1
      %p127 = por %p125, %p126
      %p129 = scmp.ne.s32.totalorder %s112, %s128
      %p130 = scmp.eq.s32.totalorder %s41, 0
      %p131 = por %p129, %p130
      %s132 = ssub.s32 %s35, %s42
      %p133 = scmp.eq.s32.totalorder %s132, 0
      %s135 = sadd.s32 %s134, 1
      %s136 = scalar_select %p133, %s134, %s135
      %p139 = pneg %p133
      %p140 = scmp.eq.s32.totalorder %s35, 1
      %p141 = por %p139, %p140
      %p142 = scmp.ne.s32.totalorder %s134, %s137
      %p143 = scmp.eq.s32.totalorder %s35, 0
      %p144 = por %p142, %p143
      %p145 = scmp.ne.s32.totalorder %s134, %s137
      %p146 = scmp.eq.s32.totalorder %s40, 1
      %p147 = por %p145, %p146
      %p148 = scmp.ne.s32.totalorder %s137, %s138
      %p149 = scmp.eq.s32.totalorder %s40, 0
      %p150 = por %p148, %p149
      %p151 = scmp.ne.s32.totalorder %s137, %s138
      %p152 = scmp.eq.s32.totalorder %s41, 1
      %p153 = por %p151, %p152
      %p155 = scmp.ne.s32.totalorder %s138, %s154
      %p156 = scmp.eq.s32.totalorder %s41, 0
      %p157 = por %p155, %p156
      %s158 = ssub.s32 %s35, %s42
      %p159 = scmp.eq.s32.totalorder %s158, 0
      %s161 = sadd.s32 %s160, 1
      %s162 = scalar_select %p159, %s160, %s161
      %p165 = pneg %p159
      %p166 = scmp.eq.s32.totalorder %s35, 1
      %p167 = por %p165, %p166
      %p168 = scmp.ne.s32.totalorder %s160, %s163
      %p169 = scmp.eq.s32.totalorder %s35, 0
      %p170 = por %p168, %p169
      %p171 = scmp.ne.s32.totalorder %s160, %s163
      %p172 = scmp.eq.s32.totalorder %s40, 1
      %p173 = por %p171, %p172
      %p174 = scmp.ne.s32.totalorder %s163, %s164
      %p175 = scmp.eq.s32.totalorder %s40, 0
      %p176 = por %p174, %p175
      %p177 = scmp.ne.s32.totalorder %s163, %s164
      %p178 = scmp.eq.s32.totalorder %s41, 1
      %p179 = por %p177, %p178
      %p181 = scmp.ne.s32.totalorder %s164, %s180
      %p182 = scmp.eq.s32.totalorder %s41, 0
      %p183 = por %p181, %p182
      %s184 = ssub.s32 %s35, %s42
      %p185 = scmp.eq.s32.totalorder %s184, 0
      %s187 = sadd.s32 %s186, 1
      %s188 = scalar_select %p185, %s186, %s187
      %p191 = pneg %p185
      %p192 = scmp.eq.s32.totalorder %s35, 1
      %p193 = por %p191, %p192
      %p194 = scmp.ne.s32.totalorder %s186, %s189
      %p195 = scmp.eq.s32.totalorder %s35, 0
      %p196 = por %p194, %p195
      %p197 = scmp.ne.s32.totalorder %s186, %s189
      %p198 = scmp.eq.s32.totalorder %s40, 1
      %p199 = por %p197, %p198
      %p200 = scmp.ne.s32.totalorder %s189, %s190
      %p201 = scmp.eq.s32.totalorder %s40, 0
      %p202 = por %p200, %p201
      %p203 = scmp.ne.s32.totalorder %s189, %s190
      %p204 = scmp.eq.s32.totalorder %s41, 1
      %p205 = por %p203, %p204
      %p207 = scmp.ne.s32.totalorder %s190, %s206
      %p208 = scmp.eq.s32.totalorder %s41, 0
      %p209 = por %p207, %p208
      %s210 = ssub.s32 %s35, %s42
      %p211 = scmp.eq.s32.totalorder %s210, 0
      %s213 = sadd.s32 %s212, 1
      %s214 = scalar_select %p211, %s212, %s213
      %p217 = pneg %p211
      %p218 = scmp.eq.s32.totalorder %s35, 1
      %p219 = por %p217, %p218
      %p220 = scmp.ne.s32.totalorder %s212, %s215
      %p221 = scmp.eq.s32.totalorder %s35, 0
      %p222 = por %p220, %p221
      %p223 = scmp.ne.s32.totalorder %s212, %s215
      %p224 = scmp.eq.s32.totalorder %s40, 1
      %p225 = por %p223, %p224
      %p226 = scmp.ne.s32.totalorder %s215, %s216
      %p227 = scmp.eq.s32.totalorder %s40, 0
      %p228 = por %p226, %p227
      %p229 = scmp.ne.s32.totalorder %s215, %s216
      %p230 = scmp.eq.s32.totalorder %s41, 1
      %p231 = por %p229, %p230
      %p233 = scmp.ne.s32.totalorder %s216, %s232
      %p234 = scmp.eq.s32.totalorder %s41, 0
      %p235 = por %p233, %p234
      %s236 = ssub.s32 %s35, %s42
      %p237 = scmp.eq.s32.totalorder %s236, 0
      %s239 = sadd.s32 %s238, 1
      %s240 = scalar_select %p237, %s238, %s239
      %p243 = pneg %p237
      %p244 = scmp.eq.s32.totalorder %s35, 1
      %p245 = por %p243, %p244
      %p246 = scmp.ne.s32.totalorder %s238, %s241
      %p247 = scmp.eq.s32.totalorder %s35, 0
      %p248 = por %p246, %p247
      %p249 = scmp.ne.s32.totalorder %s238, %s241
      %p250 = scmp.eq.s32.totalorder %s40, 1
      %p251 = por %p249, %p250
      %p252 = scmp.ne.s32.totalorder %s241, %s242
      %p253 = scmp.eq.s32.totalorder %s40, 0
      %p254 = por %p252, %p253
      %p255 = scmp.ne.s32.totalorder %s241, %s242
      %p256 = scmp.eq.s32.totalorder %s41, 1
      %p257 = por %p255, %p256
      %p259 = scmp.ne.s32.totalorder %s242, %s258
      %p260 = scmp.eq.s32.totalorder %s41, 0
      %p261 = por %p259, %p260
      %s262 = ssub.s32 %s35, %s42
      %p263 = scmp.eq.s32.totalorder %s262, 0
      %s265 = sadd.s32 %s264, 1
      %s266 = scalar_select %p263, %s264, %s265
      %p269 = pneg %p263
      %p270 = scmp.eq.s32.totalorder %s35, 1
      %p271 = por %p269, %p270
      %p272 = scmp.ne.s32.totalorder %s264, %s267
      %p273 = scmp.eq.s32.totalorder %s35, 0
      %p274 = por %p272, %p273
      %p275 = scmp.ne.s32.totalorder %s264, %s267
      %p276 = scmp.eq.s32.totalorder %s40, 1
      %p277 = por %p275, %p276
      %p278 = scmp.ne.s32.totalorder %s267, %s268
      %p279 = scmp.eq.s32.totalorder %s40, 0
      %p280 = por %p278, %p279
      %p281 = scmp.ne.s32.totalorder %s267, %s268
      %p282 = scmp.eq.s32.totalorder %s41, 1
      %p283 = por %p281, %p282
      %p285 = scmp.ne.s32.totalorder %s268, %s284
      %p286 = scmp.eq.s32.totalorder %s41, 0
      %p287 = por %p285, %p286
      %s288 = ssub.s32 %s35, %s42
      %p289 = scmp.eq.s32.totalorder %s288, 0
      %s291 = sadd.s32 %s290, 1
      %s292 = scalar_select %p289, %s290, %s291
      %p295 = pneg %p289
      %p296 = scmp.eq.s32.totalorder %s35, 1
      %p297 = por %p295, %p296
      %p298 = scmp.ne.s32.totalorder %s290, %s293
      %p299 = scmp.eq.s32.totalorder %s35, 0
      %p300 = por %p298, %p299
      %p301 = scmp.ne.s32.totalorder %s290, %s293
      %p302 = scmp.eq.s32.totalorder %s40, 1
      %p303 = por %p301, %p302
      %p304 = scmp.ne.s32.totalorder %s293, %s294
      %p305 = scmp.eq.s32.totalorder %s40, 0
      %p306 = por %p304, %p305
      %p307 = scmp.ne.s32.totalorder %s293, %s294
      %p308 = scmp.eq.s32.totalorder %s41, 1
      %p309 = por %p307, %p308
      %p311 = scmp.ne.s32.totalorder %s294, %s310
      %p312 = scmp.eq.s32.totalorder %s41, 0
      %p313 = por %p311, %p312
      %s314 = ssub.s32 %s35, %s42
      %p315 = scmp.eq.s32.totalorder %s314, 0
      %s317 = sadd.s32 %s316, 1
      %s318 = scalar_select %p315, %s316, %s317
      %p321 = pneg %p315
      %p322 = scmp.eq.s32.totalorder %s35, 1
      %p323 = por %p321, %p322
      %p324 = scmp.ne.s32.totalorder %s316, %s319
      %p325 = scmp.eq.s32.totalorder %s35, 0
      %p326 = por %p324, %p325
      %p327 = scmp.ne.s32.totalorder %s316, %s319
      %p328 = scmp.eq.s32.totalorder %s40, 1
      %p329 = por %p327, %p328
      %p330 = scmp.ne.s32.totalorder %s319, %s320
      %p331 = scmp.eq.s32.totalorder %s40, 0
      %p332 = por %p330, %p331
      %p333 = scmp.ne.s32.totalorder %s319, %s320
      %p334 = scmp.eq.s32.totalorder %s41, 1
      %p335 = por %p333, %p334
      %p337 = scmp.ne.s32.totalorder %s320, %s336
      %p338 = scmp.eq.s32.totalorder %s41, 0
      %p339 = por %p337, %p338
      %s340 = ssub.s32 %s35, %s42
      %p341 = scmp.eq.s32.totalorder %s340, 0
      %s343 = sadd.s32 %s342, 1
      %s344 = scalar_select %p341, %s342, %s343
      %p347 = pneg %p341
      %p348 = scmp.eq.s32.totalorder %s35, 1
      %p349 = por %p347, %p348
      %p350 = scmp.ne.s32.totalorder %s342, %s345
      %p351 = scmp.eq.s32.totalorder %s35, 0
      %p352 = por %p350, %p351
      %p353 = scmp.ne.s32.totalorder %s342, %s345
      %p354 = scmp.eq.s32.totalorder %s40, 1
      %p355 = por %p353, %p354
      %p356 = scmp.ne.s32.totalorder %s345, %s346
      %p357 = scmp.eq.s32.totalorder %s40, 0
      %p358 = por %p356, %p357
      %p359 = scmp.ne.s32.totalorder %s345, %s346
      %p360 = scmp.eq.s32.totalorder %s41, 1
      %p361 = por %p359, %p360
      %p363 = scmp.ne.s32.totalorder %s346, %s362
      %p364 = scmp.eq.s32.totalorder %s41, 0
      %p365 = por %p363, %p364
      %s366 = ssub.s32 %s35, %s42
      %p367 = scmp.eq.s32.totalorder %s366, 0
      %s369 = sadd.s32 %s368, 1
      %s370 = scalar_select %p367, %s368, %s369
      %p373 = pneg %p367
      %p374 = scmp.eq.s32.totalorder %s35, 1
      %p375 = por %p373, %p374
      %p376 = scmp.ne.s32.totalorder %s368, %s371
      %p377 = scmp.eq.s32.totalorder %s35, 0
      %p378 = por %p376, %p377
      %p379 = scmp.ne.s32.totalorder %s368, %s371
      %p380 = scmp.eq.s32.totalorder %s40, 1
      %p381 = por %p379, %p380
      %p382 = scmp.ne.s32.totalorder %s371, %s372
      %p383 = scmp.eq.s32.totalorder %s40, 0
      %p384 = por %p382, %p383
      %p385 = scmp.ne.s32.totalorder %s371, %s372
      %p386 = scmp.eq.s32.totalorder %s41, 1
      %p387 = por %p385, %p386
      %p389 = scmp.ne.s32.totalorder %s372, %s388
      %p390 = scmp.eq.s32.totalorder %s41, 0
      %p391 = por %p389, %p390
      %s392 = ssub.s32 %s35, %s42
      %p393 = scmp.eq.s32.totalorder %s392, 0
      %s395 = sadd.s32 %s394, 1
      %s396 = scalar_select %p393, %s394, %s395
      %p399 = pneg %p393
      %p400 = scmp.eq.s32.totalorder %s35, 1
      %p401 = por %p399, %p400
      %p402 = scmp.ne.s32.totalorder %s394, %s397
      %p403 = scmp.eq.s32.totalorder %s35, 0
      %p404 = por %p402, %p403
      %p405 = scmp.ne.s32.totalorder %s394, %s397
      %p406 = scmp.eq.s32.totalorder %s40, 1
      %p407 = por %p405, %p406
      %p408 = scmp.ne.s32.totalorder %s397, %s398
      %p409 = scmp.eq.s32.totalorder %s40, 0
      %p410 = por %p408, %p409
      %p411 = scmp.ne.s32.totalorder %s397, %s398
      %p412 = scmp.eq.s32.totalorder %s41, 1
      %p413 = por %p411, %p412
      %p415 = scmp.ne.s32.totalorder %s398, %s414
      %p416 = scmp.eq.s32.totalorder %s41, 0
      %p417 = por %p415, %p416
      %s419 = sadd.s32 %s418, 1
      %p422 = scmp.eq.s32.totalorder %s35, 1
      %p423 = scmp.ne.s32.totalorder %s418, %s420
      %p424 = scmp.eq.s32.totalorder %s35, 0
      %p425 = por %p423, %p424
      %p426 = scmp.ne.s32.totalorder %s418, %s420
      %p427 = scmp.eq.s32.totalorder %s40, 1
      %p428 = por %p426, %p427
      %p429 = scmp.ne.s32.totalorder %s420, %s421
      %p430 = scmp.eq.s32.totalorder %s40, 0
      %p431 = por %p429, %p430
      %p432 = scmp.ne.s32.totalorder %s420, %s421
      %p433 = scmp.eq.s32.totalorder %s41, 1
      %p434 = por %p432, %p433
      %p436 = scmp.ne.s32.totalorder %s421, %s435
      %p437 = scmp.eq.s32.totalorder %s41, 0
      %p438 = por %p436, %p437
      %s440 = sadd.s32 %s439, 1
      %p443 = scmp.eq.s32.totalorder %s35, 1
      %p444 = scmp.ne.s32.totalorder %s439, %s441
      %p445 = scmp.eq.s32.totalorder %s35, 0
      %p446 = por %p444, %p445
      %p447 = scmp.ne.s32.totalorder %s439, %s441
      %p448 = scmp.eq.s32.totalorder %s40, 1
      %p449 = por %p447, %p448
      %p450 = scmp.ne.s32.totalorder %s441, %s442
      %p451 = scmp.eq.s32.totalorder %s40, 0
      %p452 = por %p450, %p451
      %p453 = scmp.ne.s32.totalorder %s441, %s442
      %p454 = scmp.eq.s32.totalorder %s41, 1
      %p455 = por %p453, %p454
      %p457 = scmp.ne.s32.totalorder %s442, %s456
      %p458 = scmp.eq.s32.totalorder %s41, 0
      %p459 = por %p457, %p458
      %s461 = sadd.s32 %s460, 1
      %p464 = scmp.eq.s32.totalorder %s35, 1
      %p465 = scmp.ne.s32.totalorder %s460, %s462
      %p466 = scmp.eq.s32.totalorder %s35, 0
      %p467 = por %p465, %p466
      %p468 = scmp.ne.s32.totalorder %s460, %s462
      %p469 = scmp.eq.s32.totalorder %s40, 1
      %p470 = por %p468, %p469
      %p471 = scmp.ne.s32.totalorder %s462, %s463
      %p472 = scmp.eq.s32.totalorder %s40, 0
      %p473 = por %p471, %p472
      %p474 = scmp.ne.s32.totalorder %s462, %s463
      %p475 = scmp.eq.s32.totalorder %s41, 1
      %p476 = por %p474, %p475
      %p478 = scmp.ne.s32.totalorder %s463, %s477
      %p479 = scmp.eq.s32.totalorder %s41, 0
      %p480 = por %p478, %p479
      %s482 = sadd.s32 %s481, 1
      %p485 = scmp.eq.s32.totalorder %s35, 1
      %p486 = scmp.ne.s32.totalorder %s481, %s483
      %p487 = scmp.eq.s32.totalorder %s35, 0
      %p488 = por %p486, %p487
      %p489 = scmp.ne.s32.totalorder %s481, %s483
      %p490 = scmp.eq.s32.totalorder %s40, 1
      %p491 = por %p489, %p490
      %p492 = scmp.ne.s32.totalorder %s483, %s484
      %p493 = scmp.eq.s32.totalorder %s40, 0
      %p494 = por %p492, %p493
      %p495 = scmp.ne.s32.totalorder %s483, %s484
      %p496 = scmp.eq.s32.totalorder %s41, 1
      %p497 = por %p495, %p496
      %p499 = scmp.ne.s32.totalorder %s484, %s498
      %p500 = scmp.eq.s32.totalorder %s41, 0
      %p501 = por %p499, %p500
      %p502 = scmp.le.s32.totalorder 1, %s35
      %p503 = scmp.lt.s32.totalorder %s35, 3
      %p504 = pnand %p502, %p503
      %p505 = pneg %p504
      // Predicated region
      $region9: #{tpu_custom_call.1} parent=5 // pred_check
        _
      $region10: #{tpu_custom_call.1} parent=5 // pred_check_branch
        %507 = sbr.rel (%p504) target = $region12
      $region11: #{tpu_custom_call.1} parent=5 // pred_region
        %s508 = ssub.s32 %s35, 1
        // Predicated region
        $region13: #{tpu_custom_call.1} parent=11 // pred_check
          %p509 = pneg %p56
        $region14: #{tpu_custom_call.1} parent=11 // pred_check_branch
          %511 = sbr.rel (%p509) target = $region16
        $region15: #{tpu_custom_call.1} parent=11 // pred_region
          %513 = vsyncadd [#allocation3], 0
          %s514 = sshll.u32 %s0, 4
          %s515 = int_to_ptr.hbm [resolvable:$true] %s514
          %s516 = sshll.u32 [#allocation2], 4
          %s517 = int_to_ptr.vmem [resolvable:$true] %s516
          %522 = dma.hbm_to_vmem [thread:$0]  %s515, 256, %s517, [#allocation3], 128, 128, 8
        $region16: #{tpu_custom_call.1} parent=11 // pred_fallthru
          _
        // Predicated region
        $region17: #{tpu_custom_call.1} parent=11 // pred_check
          %p523 = pneg %p77
        $region18: #{tpu_custom_call.1} parent=11 // pred_check_branch
          %525 = sbr.rel (%p523) target = $region20
        $region19: #{tpu_custom_call.1} parent=11 // pred_region
          %527 = vsyncadd [#allocation6], 0
          %s529 = sshll.u32 %s1, 4
          %s530 = int_to_ptr.hbm [resolvable:$true] %s529
          %s531 = sshll.u32 [#allocation5], 4
          %s532 = int_to_ptr.vmem [resolvable:$true] %s531
          %534 = dma.hbm_to_vmem [thread:$0]  %s530, 16, %s532, [#allocation6]
        $region20: #{tpu_custom_call.1} parent=11 // pred_fallthru
          _
        // Predicated region
        $region21: #{tpu_custom_call.1} parent=11 // pred_check
          %p535 = pneg %p98
        $region22: #{tpu_custom_call.1} parent=11 // pred_check_branch
          %537 = sbr.rel (%p535) target = $region24
        $region23: #{tpu_custom_call.1} parent=11 // pred_region
          %539 = vsyncadd [#allocation6], 0
          %s541 = sshll.u32 %s2, 4
          %s542 = int_to_ptr.hbm [resolvable:$true] %s541
          %s543 = sshll.u32 [#allocation7], 4
          %s544 = int_to_ptr.vmem [resolvable:$true] %s543
          %546 = dma.hbm_to_vmem [thread:$0]  %s542, 16, %s544, [#allocation6]
        $region24: #{tpu_custom_call.1} parent=11 // pred_fallthru
          _
        // Predicated region
        $region25: #{tpu_custom_call.1} parent=11 // pred_check
          %p547 = pneg %p431
        $region26: #{tpu_custom_call.1} parent=11 // pred_check_branch
          %549 = sbr.rel (%p547) target = $region28
        $region27: #{tpu_custom_call.1} parent=11 // pred_region
          _
        $region28: #{tpu_custom_call.1} parent=11 // pred_fallthru
          _
        // Predicated region
        $region29: #{tpu_custom_call.1} parent=11 // pred_check
          %p550 = pneg %p452
        $region30: #{tpu_custom_call.1} parent=11 // pred_check_branch
          %552 = sbr.rel (%p550) target = $region32
        $region31: #{tpu_custom_call.1} parent=11 // pred_region
          _
        $region32: #{tpu_custom_call.1} parent=11 // pred_fallthru
          _
      $region12: #{tpu_custom_call.1} parent=5 // pred_fallthru
        _
      %p553 = scmp.lt.s32.totalorder %s35, 2
      // Predicated region
      $region33: #{tpu_custom_call.1} parent=5 // pred_check
        %p554 = pneg %p553
      $region34: #{tpu_custom_call.1} parent=5 // pred_check_branch
        %556 = sbr.rel (%p554) target = $region36
      $region35: #{tpu_custom_call.1} parent=5 // pred_region
        // Predicated region
        $region37: #{tpu_custom_call.1} parent=35 // pred_check
          %p557 = pneg %p118
        $region38: #{tpu_custom_call.1} parent=35 // pred_check_branch
          %559 = sbr.rel (%p557) target = $region40
        $region39: #{tpu_custom_call.1} parent=35 // pred_region
          %p560 = scmp.lt.s32.totalorder %s35, 1
          %s561 = scalar_select %p560, %s35, 1
          %s562 = smul.addr %s561, 16
          %s563 = smul.addr %s562, 4
          %s564 = scalar_lea.vmem %s3, %s563
        $region40: #{tpu_custom_call.1} parent=35 // pred_fallthru
          _
        // Predicated region
        $region41: #{tpu_custom_call.1} parent=35 // pred_check
          %p565 = pneg %p144
        $region42: #{tpu_custom_call.1} parent=35 // pred_check_branch
          %567 = sbr.rel (%p565) target = $region44
        $region43: #{tpu_custom_call.1} parent=35 // pred_region
          %p568 = scmp.lt.s32.totalorder %s35, 1
          %s569 = scalar_select %p568, %s35, 1
          %s570 = scalar_lea.vmem %s4, %s569
        $region44: #{tpu_custom_call.1} parent=35 // pred_fallthru
          _
        // Predicated region
        $region45: #{tpu_custom_call.1} parent=35 // pred_check
          %p571 = pneg %p170
        $region46: #{tpu_custom_call.1} parent=35 // pred_check_branch
          %573 = sbr.rel (%p571) target = $region48
        $region47: #{tpu_custom_call.1} parent=35 // pred_region
          %p574 = scmp.lt.s32.totalorder %s35, 1
          %s575 = scalar_select %p574, %s35, 1
          %s576 = smul.addr %s575, 4
          %s577 = smul.addr %s576, 4
          %s578 = scalar_lea.vmem %s5, %s577
        $region48: #{tpu_custom_call.1} parent=35 // pred_fallthru
          _
        // Predicated region
        $region49: #{tpu_custom_call.1} parent=35 // pred_check
          %p579 = pneg %p196
        $region50: #{tpu_custom_call.1} parent=35 // pred_check_branch
          %581 = sbr.rel (%p579) target = $region52
        $region51: #{tpu_custom_call.1} parent=35 // pred_region
          %p582 = scmp.lt.s32.totalorder %s35, 1
          %s583 = scalar_select %p582, %s35, 1
          %s584 = scalar_lea.vmem %s6, %s583
        $region52: #{tpu_custom_call.1} parent=35 // pred_fallthru
          _
        // Predicated region
        $region53: #{tpu_custom_call.1} parent=35 // pred_check
          %p585 = pneg %p222
        $region54: #{tpu_custom_call.1} parent=35 // pred_check_branch
          %587 = sbr.rel (%p585) target = $region56
        $region55: #{tpu_custom_call.1} parent=35 // pred_region
          %p588 = scmp.lt.s32.totalorder %s35, 1
          %s589 = scalar_select %p588, %s35, 1
          %s590 = scalar_lea.vmem %s7, %s589
        $region56: #{tpu_custom_call.1} parent=35 // pred_fallthru
          _
        // Predicated region
        $region57: #{tpu_custom_call.1} parent=35 // pred_check
          %p591 = pneg %p248
        $region58: #{tpu_custom_call.1} parent=35 // pred_check_branch
          %593 = sbr.rel (%p591) target = $region60
        $region59: #{tpu_custom_call.1} parent=35 // pred_region
          %p594 = scmp.lt.s32.totalorder %s35, 1
          %s595 = scalar_select %p594, %s35, 1
          %s596 = scalar_lea.vmem %s8, %s595
        $region60: #{tpu_custom_call.1} parent=35 // pred_fallthru
          _
        // Predicated region
        $region61: #{tpu_custom_call.1} parent=35 // pred_check
          %p597 = pneg %p274
        $region62: #{tpu_custom_call.1} parent=35 // pred_check_branch
          %599 = sbr.rel (%p597) target = $region64
        $region63: #{tpu_custom_call.1} parent=35 // pred_region
          %p600 = scmp.lt.s32.totalorder %s35, 1
          %s601 = scalar_select %p600, %s35, 1
          %s602 = smul.addr %s601, 16
          %s603 = smul.addr %s602, 4
          %s604 = scalar_lea.vmem %s9, %s603
        $region64: #{tpu_custom_call.1} parent=35 // pred_fallthru
          _
        // Predicated region
        $region65: #{tpu_custom_call.1} parent=35 // pred_check
          %p605 = pneg %p300
        $region66: #{tpu_custom_call.1} parent=35 // pred_check_branch
          %607 = sbr.rel (%p605) target = $region68
        $region67: #{tpu_custom_call.1} parent=35 // pred_region
          %s608 = sand.u32 %s35, 1
          %s609 = scalar_lea.sflag [#allocation9], %s608
          %s610 = sand.u32 %s290, 1
          %s611 = scalar_lea.vmem [#allocation8], %s610
          %613 = vsyncadd %s609, 0
          %s614 = scalar_lea.hbm %s10, %s35
          %s616 = sshll.u32 %s614, 4
          %s617 = int_to_ptr.hbm [resolvable:$true] %s616
          %s618 = sshll.u32 %s611, 4
          %s619 = int_to_ptr.vmem [resolvable:$true] %s618
          %621 = dma.hbm_to_vmem [thread:$0]  %s617, 16, %s619, %s609
        $region68: #{tpu_custom_call.1} parent=35 // pred_fallthru
          _
        // Predicated region
        $region69: #{tpu_custom_call.1} parent=35 // pred_check
          %p622 = pneg %p326
        $region70: #{tpu_custom_call.1} parent=35 // pred_check_branch
          %624 = sbr.rel (%p622) target = $region72
        $region71: #{tpu_custom_call.1} parent=35 // pred_region
          %s625 = sand.u32 %s35, 1
          %s626 = scalar_lea.sflag [#allocation9], %s625
          %s627 = sand.u32 %s316, 1
          %s628 = smul.addr %s627, 64
          %s629 = scalar_lea.vmem [#allocation10], %s628
          %631 = vsyncadd %s626, 0
          %s632 = smul.addr %s35, 16
          %s633 = smul.addr %s632, 4
          %s634 = scalar_lea.hbm %s11, %s633
          %s635 = sshll.u32 %s634, 4
          %s636 = int_to_ptr.hbm [resolvable:$true] %s635
          %s637 = sshll.u32 %s629, 4
          %s638 = int_to_ptr.vmem [resolvable:$true] %s637
          %643 = dma.hbm_to_vmem [thread:$0]  %s636, 1024, %s638, %s626, 64, 64, 4
        $region72: #{tpu_custom_call.1} parent=35 // pred_fallthru
          _
        // Predicated region
        $region73: #{tpu_custom_call.1} parent=35 // pred_check
          %p644 = pneg %p352
        $region74: #{tpu_custom_call.1} parent=35 // pred_check_branch
          %646 = sbr.rel (%p644) target = $region76
        $region75: #{tpu_custom_call.1} parent=35 // pred_region
          %p647 = scmp.lt.s32.totalorder %s35, 1
          %s648 = scalar_select %p647, %s35, 1
          %s649 = scalar_lea.vmem %s12, %s648
        $region76: #{tpu_custom_call.1} parent=35 // pred_fallthru
          _
        // Predicated region
        $region77: #{tpu_custom_call.1} parent=35 // pred_check
          %p650 = pneg %p378
        $region78: #{tpu_custom_call.1} parent=35 // pred_check_branch
          %652 = sbr.rel (%p650) target = $region80
        $region79: #{tpu_custom_call.1} parent=35 // pred_region
          %s653 = sand.u32 %s35, 1
          %s654 = scalar_lea.sflag [#allocation12], %s653
          %s655 = sand.u32 %s368, 1
          %s656 = scalar_lea.vmem [#allocation11], %s655
          %658 = vsyncadd %s654, 0
          %s659 = scalar_lea.hbm %s13, %s35
          %s661 = sshll.u32 %s659, 4
          %s662 = int_to_ptr.hbm [resolvable:$true] %s661
          %s663 = sshll.u32 %s656, 4
          %s664 = int_to_ptr.vmem [resolvable:$true] %s663
          %666 = dma.hbm_to_vmem [thread:$0]  %s662, 16, %s664, %s654
        $region80: #{tpu_custom_call.1} parent=35 // pred_fallthru
          _
        // Predicated region
        $region81: #{tpu_custom_call.1} parent=35 // pred_check
          %p667 = pneg %p404
        $region82: #{tpu_custom_call.1} parent=35 // pred_check_branch
          %669 = sbr.rel (%p667) target = $region84
        $region83: #{tpu_custom_call.1} parent=35 // pred_region
          %s670 = sand.u32 %s35, 1
          %s671 = scalar_lea.sflag [#allocation12], %s670
          %s672 = sand.u32 %s394, 1
          %s673 = scalar_lea.vmem [#allocation13], %s672
          %675 = vsyncadd %s671, 0
          %s676 = scalar_lea.hbm %s14, %s35
          %s678 = sshll.u32 %s676, 4
          %s679 = int_to_ptr.hbm [resolvable:$true] %s678
          %s680 = sshll.u32 %s673, 4
          %s681 = int_to_ptr.vmem [resolvable:$true] %s680
          %683 = dma.hbm_to_vmem [thread:$0]  %s679, 16, %s681, %s671
        $region84: #{tpu_custom_call.1} parent=35 // pred_fallthru
          _
      $region36: #{tpu_custom_call.1} parent=5 // pred_fallthru
        _
      %p684 = scmp.le.s32.totalorder 1, %s35
      %p685 = scmp.lt.s32.totalorder %s35, 3
      %p686 = pnand %p684, %p685
      %p687 = pneg %p686
      // Predicated region
      $region85: #{tpu_custom_call.1} parent=5 // pred_check
        _
      $region86: #{tpu_custom_call.1} parent=5 // pred_check_branch
        %689 = sbr.rel (%p686) target = $region88
      $region87: #{tpu_custom_call.1} parent=5 // pred_region
        %s690 = ssub.s32 %s35, 1
        // Predicated region
        $region89: #{tpu_custom_call.1} parent=87 // pred_check
          %p691 = pneg %p56
        $region90: #{tpu_custom_call.1} parent=87 // pred_check_branch
          %693 = sbr.rel (%p691) target = $region92
        $region91: #{tpu_custom_call.1} parent=87 // pred_region
          %695 = dma.done [#allocation3], 256
        $region92: #{tpu_custom_call.1} parent=87 // pred_fallthru
          _
        // Predicated region
        $region93: #{tpu_custom_call.1} parent=87 // pred_check
          %p696 = pneg %p77
        $region94: #{tpu_custom_call.1} parent=87 // pred_check_branch
          %698 = sbr.rel (%p696) target = $region96
        $region95: #{tpu_custom_call.1} parent=87 // pred_region
          %700 = dma.done [#allocation6], 16
        $region96: #{tpu_custom_call.1} parent=87 // pred_fallthru
          _
        // Predicated region
        $region97: #{tpu_custom_call.1} parent=87 // pred_check
          %p701 = pneg %p98
        $region98: #{tpu_custom_call.1} parent=87 // pred_check_branch
          %703 = sbr.rel (%p701) target = $region100
        $region99: #{tpu_custom_call.1} parent=87 // pred_region
          %705 = dma.done [#allocation6], 16
        $region100: #{tpu_custom_call.1} parent=87 // pred_fallthru
          _
        %s706 = sand.u32 %s40, 1
        %s707 = scalar_lea.sflag [#allocation9], %s706
        %s708 = sand.u32 %s293, 1
        %s709 = scalar_lea.vmem [#allocation8], %s708
        // Predicated region
        $region101: #{tpu_custom_call.1} parent=87 // pred_check
          %p710 = pneg %p306
        $region102: #{tpu_custom_call.1} parent=87 // pred_check_branch
          %712 = sbr.rel (%p710) target = $region104
        $region103: #{tpu_custom_call.1} parent=87 // pred_region
          %714 = dma.done %s707, 16
        $region104: #{tpu_custom_call.1} parent=87 // pred_fallthru
          _
        %s715 = sand.u32 %s40, 1
        %s716 = scalar_lea.sflag [#allocation9], %s715
        %s717 = sand.u32 %s319, 1
        %s718 = smul.addr %s717, 64
        %s719 = scalar_lea.vmem [#allocation10], %s718
        // Predicated region
        $region105: #{tpu_custom_call.1} parent=87 // pred_check
          %p720 = pneg %p332
        $region106: #{tpu_custom_call.1} parent=87 // pred_check_branch
          %722 = sbr.rel (%p720) target = $region108
        $region107: #{tpu_custom_call.1} parent=87 // pred_region
          %724 = dma.done %s716, 1024
        $region108: #{tpu_custom_call.1} parent=87 // pred_fallthru
          _
        %s725 = sand.u32 %s40, 1
        %s726 = scalar_lea.sflag [#allocation12], %s725
        %s727 = sand.u32 %s371, 1
        %s728 = scalar_lea.vmem [#allocation11], %s727
        // Predicated region
        $region109: #{tpu_custom_call.1} parent=87 // pred_check
          %p729 = pneg %p384
        $region110: #{tpu_custom_call.1} parent=87 // pred_check_branch
          %731 = sbr.rel (%p729) target = $region112
        $region111: #{tpu_custom_call.1} parent=87 // pred_region
          %733 = dma.done %s726, 16
        $region112: #{tpu_custom_call.1} parent=87 // pred_fallthru
          _
        %s734 = sand.u32 %s40, 1
        %s735 = scalar_lea.sflag [#allocation12], %s734
        %s736 = sand.u32 %s397, 1
        %s737 = scalar_lea.vmem [#allocation13], %s736
        // Predicated region
        $region113: #{tpu_custom_call.1} parent=87 // pred_check
          %p738 = pneg %p410
        $region114: #{tpu_custom_call.1} parent=87 // pred_check_branch
          %740 = sbr.rel (%p738) target = $region116
        $region115: #{tpu_custom_call.1} parent=87 // pred_region
          %742 = dma.done %s735, 16
        $region116: #{tpu_custom_call.1} parent=87 // pred_fallthru
          _
        %p743 = pneg %p56
        %p744 = pneg %p53
        %p745 = pneg %p77
        %p746 = pneg %p74
        %p747 = pneg %p98
        %p748 = pneg %p95
        %p749 = scmp.lt.s32.totalorder %s40, 1
        %s750 = scalar_select %p749, %s40, 1
        %s751 = smul.addr %s750, 16
        %s752 = smul.addr %s751, 4
        %s753 = scalar_lea.vmem %s3, %s752
        %p754 = pneg %p124
        %p755 = pneg %p121
        %p756 = scmp.lt.s32.totalorder %s40, 1
        %s757 = scalar_select %p756, %s40, 1
        %s758 = scalar_lea.vmem %s4, %s757
        %p759 = pneg %p150
        %p760 = pneg %p147
        %p761 = scmp.lt.s32.totalorder %s40, 1
        %s762 = scalar_select %p761, %s40, 1
        %s763 = smul.addr %s762, 4
        %s764 = smul.addr %s763, 4
        %s765 = scalar_lea.vmem %s5, %s764
        %p766 = pneg %p176
        %p767 = pneg %p173
        %p768 = scmp.lt.s32.totalorder %s40, 1
        %s769 = scalar_select %p768, %s40, 1
        %s770 = scalar_lea.vmem %s6, %s769
        %p771 = pneg %p202
        %p772 = pneg %p199
        %p773 = scmp.lt.s32.totalorder %s40, 1
        %s774 = scalar_select %p773, %s40, 1
        %s775 = scalar_lea.vmem %s7, %s774
        %p776 = pneg %p228
        %p777 = pneg %p225
        %p778 = scmp.lt.s32.totalorder %s40, 1
        %s779 = scalar_select %p778, %s40, 1
        %s780 = scalar_lea.vmem %s8, %s779
        %p781 = pneg %p254
        %p782 = pneg %p251
        %p783 = scmp.lt.s32.totalorder %s40, 1
        %s784 = scalar_select %p783, %s40, 1
        %s785 = smul.addr %s784, 16
        %s786 = smul.addr %s785, 4
        %s787 = scalar_lea.vmem %s9, %s786
        %p788 = pneg %p280
        %p789 = pneg %p277
        %s790 = sand.u32 %s40, 1
        %s791 = scalar_lea.sflag [#allocation9], %s790
        %s792 = sand.u32 %s293, 1
        %s793 = scalar_lea.vmem [#allocation8], %s792
        %p794 = pneg %p306
        %p795 = pneg %p303
        %s796 = sand.u32 %s40, 1
        %s797 = scalar_lea.sflag [#allocation9], %s796
        %s798 = sand.u32 %s319, 1
        %s799 = smul.addr %s798, 64
        %s800 = scalar_lea.vmem [#allocation10], %s799
        %p801 = pneg %p332
        %p802 = pneg %p329
        %p803 = scmp.lt.s32.totalorder %s40, 1
        %s804 = scalar_select %p803, %s40, 1
        %s805 = scalar_lea.vmem %s12, %s804
        %p806 = pneg %p358
        %p807 = pneg %p355
        %s808 = sand.u32 %s40, 1
        %s809 = scalar_lea.sflag [#allocation12], %s808
        %s810 = sand.u32 %s371, 1
        %s811 = scalar_lea.vmem [#allocation11], %s810
        %p812 = pneg %p384
        %p813 = pneg %p381
        %s814 = sand.u32 %s40, 1
        %s815 = scalar_lea.sflag [#allocation12], %s814
        %s816 = sand.u32 %s397, 1
        %s817 = scalar_lea.vmem [#allocation13], %s816
        %p818 = pneg %p410
        %p819 = pneg %p407
        %p820 = pneg %p431
        %p821 = pneg %p428
        %p822 = pneg %p452
        %p823 = pneg %p449
        %p824 = pneg %p473
        %p825 = pneg %p470
        %p826 = pneg %p494
        %p827 = pneg %p491
        %p828 = scmp.lt.s32.totalorder %s40, 1
        %s829 = scalar_select %p828, %s40, 1
        %s830 = smul.addr %s829, 16
        %s831 = smul.addr %s830, 4
        %s832 = scalar_lea.vmem %s3, %s831
        %p833 = scmp.lt.s32.totalorder %s40, 1
        %s834 = scalar_select %p833, %s40, 1
        %s835 = scalar_lea.vmem %s4, %s834
        %p836 = scmp.lt.s32.totalorder %s40, 1
        %s837 = scalar_select %p836, %s40, 1
        %s838 = smul.addr %s837, 4
        %s839 = smul.addr %s838, 4
        %s840 = scalar_lea.vmem %s5, %s839
        %p841 = scmp.lt.s32.totalorder %s40, 1
        %s842 = scalar_select %p841, %s40, 1
        %s843 = scalar_lea.vmem %s6, %s842
        %p844 = scmp.lt.s32.totalorder %s40, 1
        %s845 = scalar_select %p844, %s40, 1
        %s846 = scalar_lea.vmem %s7, %s845
        %p847 = scmp.lt.s32.totalorder %s40, 1
        %s848 = scalar_select %p847, %s40, 1
        %s849 = scalar_lea.vmem %s8, %s848
        %p850 = scmp.lt.s32.totalorder %s40, 1
        %s851 = scalar_select %p850, %s40, 1
        %s852 = smul.addr %s851, 16
        %s853 = smul.addr %s852, 4
        %s854 = scalar_lea.vmem %s9, %s853
        %p855 = scmp.lt.s32.totalorder %s40, 1
        %s856 = scalar_select %p855, %s40, 1
        %s857 = scalar_lea.vmem %s12, %s856
        %p859 = scmp.eq.s32.totalorder %s40, 0
        // Predicated region
        $region117: #{tpu_custom_call.1} parent=87 // pred_check
          %p860 = pneg %p859
        $region118: #{tpu_custom_call.1} parent=87 // pred_check_branch
          %862 = sbr.rel (%p860) target = $region120
        $region119: #{tpu_custom_call.1} parent=87 // pred_region
          %v863 = vld [vmem:[#allocation2] sm:$0xff]
          %v864 = vld [vmem:[#allocation2 + $0x8] sm:$0xff]
          %v865 = vld [vmem:[#allocation5] sm:$0x1]
          %v866 = vld [vmem:[#allocation7] sm:$0x1]
          %867 = vadd.xlane.f32.xlu0 %v863
          %v868 = vpop.xlane.xlu0 %867
          %869 = vadd.xlane.f32.xlu0 %v864
          %v870 = vpop.xlane.xlu0 %869
          %v871 = vmul.f32 %v863, %v863
          %v872 = vmul.f32 %v864, %v864
          %873 = vadd.xlane.f32.xlu0 %v871
          %v874 = vpop.xlane.xlu0 %873
          %875 = vadd.xlane.f32.xlu0 %v872
          %v876 = vpop.xlane.xlu0 %875
          %v877 = vmul.f32 %v868, 0.03125
          %v878 = vmul.f32 %v870, 0.03125
          %v879 = vmul.f32 %v874, 0.03125
          %v880 = vmul.f32 %v876, 0.03125
          %v881 = vmul.f32 %v877, %v877
          %v882 = vmul.f32 %v878, %v878
          %v883 = vsub.f32 %v879, %v881
          %v884 = vsub.f32 %v880, %v882
          %v885 = vadd.f32 %v883, 1e-12
          %v886 = vadd.f32 %v884, 1e-12
          %v887 = vrsqrt.pop %v885
          %v888 = vmul.f32 %v887, %v885
          %v889 = vmul.f32 %v888, %v887
          %v890 = vmul.f32 0.5, %v889
          %v891 = vsub.f32 1.5, %v890
          %v892 = vmul.f32 %v887, %v891
          %vm893 = vweird.f32 %v885
          %vm894 = vweird.f32 %v887
          %vm895 = vmor %vm893, %vm894
          %v896 = vsel %vm895, %v887, %v892
          %v897 = vrsqrt.pop %v886
          %v898 = vmul.f32 %v897, %v886
          %v899 = vmul.f32 %v898, %v897
          %v900 = vmul.f32 0.5, %v899
          %v901 = vsub.f32 1.5, %v900
          %v902 = vmul.f32 %v897, %v901
          %vm903 = vweird.f32 %v886
          %vm904 = vweird.f32 %v897
          %vm905 = vmor %vm903, %vm904
          %v906 = vsel %vm905, %v897, %v902
          %v907 = vsub.f32 %v863, %v877
          %v908 = vsub.f32 %v864, %v878
          %v909 = vmul.f32 %v907, %v896
          %v910 = vmul.f32 %v908, %v906
          %v912 = vperm.slane %v865, 0
          %v914 = vmul.f32 %v909, %v912
          %v915 = vmul.f32 %v910, %v912
          %v917 = vperm.slane %v866, 0
          %v919 = vadd.f32 %v914, %v917
          %v920 = vadd.f32 %v915, %v917
          %921 = vst [vmem:[#allocation14] sm:$0xff] %v919
          %922 = vst [vmem:[#allocation14 + $0x8] sm:$0xff] %v920
        $region120: #{tpu_custom_call.1} parent=87 // pred_fallthru
          _
        %v923 = vld [vmem:[#allocation14] sm:$0xff]
        %v924 = vld [vmem:[#allocation14 + $0x8] sm:$0xff]
        %v925 = vpack.c.bf16 %v924, %v923
        %v926 = vld [vmem:[%s832] sm:$0xf]
        %v927 = vld [vmem:[%s832 + $0x4] sm:$0xf]
        %v928 = vld [vmem:[%s832 + $0x8] sm:$0xf]
        %v929 = vld [vmem:[%s832 + $0xc] sm:$0xf]
        %v930 = vld [vmem:[%s832 + $0x10] sm:$0xf]
        %v931 = vld [vmem:[%s832 + $0x14] sm:$0xf]
        %v932 = vld [vmem:[%s832 + $0x18] sm:$0xf]
        %v933 = vld [vmem:[%s832 + $0x1c] sm:$0xf]
        %v934 = vld [vmem:[%s832 + $0x20] sm:$0xf]
        %v935 = vld [vmem:[%s832 + $0x24] sm:$0xf]
        %v936 = vld [vmem:[%s832 + $0x28] sm:$0xf]
        %v937 = vld [vmem:[%s832 + $0x2c] sm:$0xf]
        %v938 = vld [vmem:[%s832 + $0x30] sm:$0xf]
        %v939 = vld [vmem:[%s832 + $0x34] sm:$0xf]
        %v940 = vld [vmem:[%s832 + $0x38] sm:$0xf]
        %v941 = vld [vmem:[%s832 + $0x3c] sm:$0xf]
        %v942 = vld [vmem:[%s835] sm:$0x1]
        %v944 = vperm.slane %v942, 0
        %v962 = vunpack.c.l.b16 %v926
        %v963 = vunpack.c.l.b16 %v927
        %v964 = vunpack.c.l.b16 %v928
        %v965 = vunpack.c.l.b16 %v929
        %v966 = vunpack.c.l.b16 %v930
        %v967 = vunpack.c.l.b16 %v931
        %v968 = vunpack.c.l.b16 %v932
        %v969 = vunpack.c.l.b16 %v933
        %v970 = vunpack.c.l.b16 %v934
        %v971 = vunpack.c.l.b16 %v935
        %v972 = vunpack.c.l.b16 %v936
        %v973 = vunpack.c.l.b16 %v937
        %v974 = vunpack.c.l.b16 %v938
        %v975 = vunpack.c.l.b16 %v939
        %v976 = vunpack.c.l.b16 %v940
        %v977 = vunpack.c.l.b16 %v941
        %v978 = vpack.c.b16 %v963, %v962
        %v979 = vpack.c.b16 %v965, %v964
        %v980 = vpack.c.b16 %v967, %v966
        %v981 = vpack.c.b16 %v969, %v968
        %v982 = vpack.c.b16 %v971, %v970
        %v983 = vpack.c.b16 %v973, %v972
        %v984 = vpack.c.b16 %v975, %v974
        %v985 = vpack.c.b16 %v977, %v976
        %994 = vmatpush.bf16.msra.mxu0 %v985
        %995 = vmatpush.bf16.msra.mxu0 %v984
        %996 = vmatpush.bf16.msra.mxu0 %v983
        %997 = vmatpush.bf16.msra.mxu0 %v982
        %998 = vmatpush.bf16.msra.mxu0 %v981
        %999 = vmatpush.bf16.msra.mxu0 %v980
        %1000 = vmatpush.bf16.msra.mxu0 %v979
        %1001 = vmatpush.bf16.msra.mxu0 %v978
        %1002 = vmatmul.bf16.gmra.mxu0 %v925
        %v1003 = vpop.f32.mrf.mxu0
        %v1004 = vadd.f32 %v944, %v1003
        %v1005 = vpop.f32.mrf.mxu0
        %v1006 = vadd.f32 %v944, %v1005
        %1007 = vdwg.mxu0
        %1010 = vrot.lane.b32.xlu0 %v1004, 120
        %v1011 = vpop.permute.xlu0 %1010
        %1012 = vrot.lane.b32.xlu0 %v1006, 120
        %v1013 = vpop.permute.xlu0 %1012
        %1016 = vrot.lane.b32.xlu0 %v1004, 112
        %v1017 = vpop.permute.xlu0 %1016
        %1018 = vrot.lane.b32.xlu0 %v1006, 112
        %v1019 = vpop.permute.xlu0 %1018
        %1022 = vrot.lane.b32.xlu0 %v1004, 104
        %v1023 = vpop.permute.xlu0 %1022
        %1024 = vrot.lane.b32.xlu0 %v1006, 104
        %v1025 = vpop.permute.xlu0 %1024
        %v1028 = vrot.slane %v1017, 4
        %vm1029 = vcmask 1047556
        %v1030 = vsel %vm1029, %v1028, %v1004
        %v1031 = vrot.slane %v1004, 4
        %v1032 = vsel %vm1029, %v1017, %v1031
        %v1034 = vunpack.c.l.s4 1983009808
        %v1035 = vunpack.c.0.s8 %v1034
        %v1036 = vperm.slane %v1030, %v1035
        %v1038 = vunpack.c.l.s4 1983009808
        %v1039 = vunpack.c.0.s8 %v1038
        %v1040 = vperm.slane %v1032, %v1039
        %v1041 = vrot.slane %v1023, 4
        %v1042 = vsel %vm1029, %v1041, %v1011
        %v1043 = vrot.slane %v1011, 4
        %v1044 = vsel %vm1029, %v1023, %v1043
        %v1046 = vunpack.c.l.s4 1983009808
        %v1047 = vunpack.c.0.s8 %v1046
        %v1048 = vperm.slane %v1042, %v1047
        %v1050 = vunpack.c.l.s4 1983009808
        %v1051 = vunpack.c.0.s8 %v1050
        %v1052 = vperm.slane %v1044, %v1051
        %v1053 = vrot.slane %v1048, 4
        %v1054 = vsel %vm1029, %v1053, %v1036
        %v1055 = vrot.slane %v1036, 4
        %v1056 = vsel %vm1029, %v1048, %v1055
        %v1058 = vunpack.c.l.s4 1934713408
        %v1059 = vunpack.c.0.s8 %v1058
        %v1060 = vperm.slane %v1054, %v1059
        %v1062 = vunpack.c.l.s4 1934713408
        %v1063 = vunpack.c.0.s8 %v1062
        %v1064 = vperm.slane %v1056, %v1063
        %v1065 = vrot.slane %v1052, 4
        %v1066 = vsel %vm1029, %v1065, %v1040
        %v1067 = vrot.slane %v1040, 4
        %v1068 = vsel %vm1029, %v1052, %v1067
        %v1070 = vunpack.c.l.s4 1934713408
        %v1071 = vunpack.c.0.s8 %v1070
        %v1072 = vperm.slane %v1066, %v1071
        %v1074 = vunpack.c.l.s4 1934713408
        %v1075 = vunpack.c.0.s8 %v1074
        %v1076 = vperm.slane %v1068, %v1075
        %v1077 = vrot.slane %v1060, 4
        %v1078 = vsel %vm1029, 0.0, %v1077
        %v1079 = vrot.slane %v1064, 4
        %v1080 = vsel %vm1029, 0.0, %v1079
        %v1081 = vrot.slane %v1072, 4
        %v1082 = vsel %vm1029, 0.0, %v1081
        %v1083 = vrot.slane %v1076, 4
        %v1084 = vsel %vm1029, 0.0, %v1083
        %v1085 = vrot.slane %v1019, 4
        %v1086 = vsel %vm1029, %v1085, %v1006
        %v1087 = vrot.slane %v1006, 4
        %v1088 = vsel %vm1029, %v1019, %v1087
        %v1090 = vunpack.c.l.s4 1983009808
        %v1091 = vunpack.c.0.s8 %v1090
        %v1092 = vperm.slane %v1086, %v1091
        %v1094 = vunpack.c.l.s4 1983009808
        %v1095 = vunpack.c.0.s8 %v1094
        %v1096 = vperm.slane %v1088, %v1095
        %v1097 = vrot.slane %v1025, 4
        %v1098 = vsel %vm1029, %v1097, %v1013
        %v1099 = vrot.slane %v1013, 4
        %v1100 = vsel %vm1029, %v1025, %v1099
        %v1102 = vunpack.c.l.s4 1983009808
        %v1103 = vunpack.c.0.s8 %v1102
        %v1104 = vperm.slane %v1098, %v1103
        %v1106 = vunpack.c.l.s4 1983009808
        %v1107 = vunpack.c.0.s8 %v1106
        %v1108 = vperm.slane %v1100, %v1107
        %v1109 = vrot.slane %v1104, 4
        %v1110 = vsel %vm1029, %v1109, %v1092
        %v1111 = vrot.slane %v1092, 4
        %v1112 = vsel %vm1029, %v1104, %v1111
        %v1114 = vunpack.c.l.s4 1934713408
        %v1115 = vunpack.c.0.s8 %v1114
        %v1116 = vperm.slane %v1110, %v1115
        %v1118 = vunpack.c.l.s4 1934713408
        %v1119 = vunpack.c.0.s8 %v1118
        %v1120 = vperm.slane %v1112, %v1119
        %v1121 = vrot.slane %v1108, 4
        %v1122 = vsel %vm1029, %v1121, %v1096
        %v1123 = vrot.slane %v1096, 4
        %v1124 = vsel %vm1029, %v1108, %v1123
        %v1126 = vunpack.c.l.s4 1934713408
        %v1127 = vunpack.c.0.s8 %v1126
        %v1128 = vperm.slane %v1122, %v1127
        %v1130 = vunpack.c.l.s4 1934713408
        %v1131 = vunpack.c.0.s8 %v1130
        %v1132 = vperm.slane %v1124, %v1131
        %v1133 = vrot.slane %v1116, 4
        %v1134 = vsel %vm1029, 0.0, %v1133
        %v1135 = vrot.slane %v1120, 4
        %v1136 = vsel %vm1029, 0.0, %v1135
        %v1137 = vrot.slane %v1128, 4
        %v1138 = vsel %vm1029, 0.0, %v1137
        %v1139 = vrot.slane %v1132, 4
        %v1140 = vsel %vm1029, 0.0, %v1139
        %v1141 = vsel %vm1029, %v1079, %v1060
        %v1143 = vunpack.c.l.s4 1983009808
        %v1144 = vunpack.c.0.s8 %v1143
        %v1145 = vperm.slane %v1141, %v1144
        %v1146 = vrot.slane %v1080, 4
        %v1147 = vsel %vm1029, %v1146, %v1078
        %v1149 = vunpack.c.l.s4 1983009808
        %v1150 = vunpack.c.0.s8 %v1149
        %v1151 = vperm.slane %v1147, %v1150
        %v1152 = vsel %vm1029, %v1083, %v1072
        %v1154 = vunpack.c.l.s4 1983009808
        %v1155 = vunpack.c.0.s8 %v1154
        %v1156 = vperm.slane %v1152, %v1155
        %v1157 = vrot.slane %v1084, 4
        %v1158 = vsel %vm1029, %v1157, %v1082
        %v1160 = vunpack.c.l.s4 1983009808
        %v1161 = vunpack.c.0.s8 %v1160
        %v1162 = vperm.slane %v1158, %v1161
        %v1163 = vrot.slane %v1151, 4
        %v1164 = vsel %vm1029, %v1163, %v1145
        %v1165 = vrot.slane %v1145, 4
        %v1166 = vsel %vm1029, %v1151, %v1165
        %v1168 = vunpack.c.l.s4 1934713408
        %v1169 = vunpack.c.0.s8 %v1168
        %v1170 = vperm.slane %v1164, %v1169
        %v1172 = vunpack.c.l.s4 1934713408
        %v1173 = vunpack.c.0.s8 %v1172
        %v1174 = vperm.slane %v1166, %v1173
        %v1175 = vrot.slane %v1162, 4
        %v1176 = vsel %vm1029, %v1175, %v1156
        %v1177 = vrot.slane %v1156, 4
        %v1178 = vsel %vm1029, %v1162, %v1177
        %v1180 = vunpack.c.l.s4 1934713408
        %v1181 = vunpack.c.0.s8 %v1180
        %v1182 = vperm.slane %v1176, %v1181
        %v1184 = vunpack.c.l.s4 1934713408
        %v1185 = vunpack.c.0.s8 %v1184
        %v1186 = vperm.slane %v1178, %v1185
        %v1187 = vrot.slane %v1182, 4
        %v1188 = vsel %vm1029, %v1187, %v1170
        %v1189 = vrot.slane %v1170, 4
        %v1190 = vsel %vm1029, %v1182, %v1189
        %v1191 = vrot.slane %v1186, 4
        %v1192 = vsel %vm1029, %v1191, %v1174
        %v1193 = vrot.slane %v1174, 4
        %v1194 = vsel %vm1029, %v1186, %v1193
        %v1195 = vsel %vm1029, %v1135, %v1116
        %v1197 = vunpack.c.l.s4 1983009808
        %v1198 = vunpack.c.0.s8 %v1197
        %v1199 = vperm.slane %v1195, %v1198
        %v1200 = vrot.slane %v1136, 4
        %v1201 = vsel %vm1029, %v1200, %v1134
        %v1203 = vunpack.c.l.s4 1983009808
        %v1204 = vunpack.c.0.s8 %v1203
        %v1205 = vperm.slane %v1201, %v1204
        %v1206 = vsel %vm1029, %v1139, %v1128
        %v1208 = vunpack.c.l.s4 1983009808
        %v1209 = vunpack.c.0.s8 %v1208
        %v1210 = vperm.slane %v1206, %v1209
        %v1211 = vrot.slane %v1140, 4
        %v1212 = vsel %vm1029, %v1211, %v1138
        %v1214 = vunpack.c.l.s4 1983009808
        %v1215 = vunpack.c.0.s8 %v1214
        %v1216 = vperm.slane %v1212, %v1215
        %v1217 = vrot.slane %v1205, 4
        %v1218 = vsel %vm1029, %v1217, %v1199
        %v1219 = vrot.slane %v1199, 4
        %v1220 = vsel %vm1029, %v1205, %v1219
        %v1222 = vunpack.c.l.s4 1934713408
        %v1223 = vunpack.c.0.s8 %v1222
        %v1224 = vperm.slane %v1218, %v1223
        %v1226 = vunpack.c.l.s4 1934713408
        %v1227 = vunpack.c.0.s8 %v1226
        %v1228 = vperm.slane %v1220, %v1227
        %v1229 = vrot.slane %v1216, 4
        %v1230 = vsel %vm1029, %v1229, %v1210
        %v1231 = vrot.slane %v1210, 4
        %v1232 = vsel %vm1029, %v1216, %v1231
        %v1234 = vunpack.c.l.s4 1934713408
        %v1235 = vunpack.c.0.s8 %v1234
        %v1236 = vperm.slane %v1230, %v1235
        %v1238 = vunpack.c.l.s4 1934713408
        %v1239 = vunpack.c.0.s8 %v1238
        %v1240 = vperm.slane %v1232, %v1239
        %v1241 = vrot.slane %v1236, 4
        %v1242 = vsel %vm1029, %v1241, %v1224
        %v1243 = vrot.slane %v1224, 4
        %v1244 = vsel %vm1029, %v1236, %v1243
        %v1245 = vrot.slane %v1240, 4
        %v1246 = vsel %vm1029, %v1245, %v1228
        %v1247 = vrot.slane %v1228, 4
        %v1248 = vsel %vm1029, %v1240, %v1247
        %1249 = vrot.lane.b32.xlu0 %v1004, 96
        %v1250 = vpop.permute.xlu0 %1249
        %1251 = vrot.lane.b32.xlu0 %v1006, 96
        %v1252 = vpop.permute.xlu0 %1251
        %1253 = vrot.lane.b32.xlu0 %v1011, 96
        %v1254 = vpop.permute.xlu0 %1253
        %1255 = vrot.lane.b32.xlu0 %v1013, 96
        %v1256 = vpop.permute.xlu0 %1255
        %1257 = vrot.lane.b32.xlu0 %v1017, 96
        %v1258 = vpop.permute.xlu0 %1257
        %1259 = vrot.lane.b32.xlu0 %v1019, 96
        %v1260 = vpop.permute.xlu0 %1259
        %1261 = vrot.lane.b32.xlu0 %v1023, 96
        %v1262 = vpop.permute.xlu0 %1261
        %1263 = vrot.lane.b32.xlu0 %v1025, 96
        %v1264 = vpop.permute.xlu0 %1263
        %v1273 = vrot.slane %v1258, 4
        %v1274 = vsel %vm1029, %v1273, %v1250
        %v1275 = vrot.slane %v1250, 4
        %v1276 = vsel %vm1029, %v1258, %v1275
        %v1278 = vunpack.c.l.s4 1983009808
        %v1279 = vunpack.c.0.s8 %v1278
        %v1280 = vperm.slane %v1274, %v1279
        %v1282 = vunpack.c.l.s4 1983009808
        %v1283 = vunpack.c.0.s8 %v1282
        %v1284 = vperm.slane %v1276, %v1283
        %v1285 = vrot.slane %v1262, 4
        %v1286 = vsel %vm1029, %v1285, %v1254
        %v1287 = vrot.slane %v1254, 4
        %v1288 = vsel %vm1029, %v1262, %v1287
        %v1290 = vunpack.c.l.s4 1983009808
        %v1291 = vunpack.c.0.s8 %v1290
        %v1292 = vperm.slane %v1286, %v1291
        %v1294 = vunpack.c.l.s4 1983009808
        %v1295 = vunpack.c.0.s8 %v1294
        %v1296 = vperm.slane %v1288, %v1295
        %v1297 = vrot.slane %v1292, 4
        %v1298 = vsel %vm1029, %v1297, %v1280
        %v1299 = vrot.slane %v1280, 4
        %v1300 = vsel %vm1029, %v1292, %v1299
        %v1302 = vunpack.c.l.s4 1934713408
        %v1303 = vunpack.c.0.s8 %v1302
        %v1304 = vperm.slane %v1298, %v1303
        %v1306 = vunpack.c.l.s4 1934713408
        %v1307 = vunpack.c.0.s8 %v1306
        %v1308 = vperm.slane %v1300, %v1307
        %v1309 = vrot.slane %v1296, 4
        %v1310 = vsel %vm1029, %v1309, %v1284
        %v1311 = vrot.slane %v1284, 4
        %v1312 = vsel %vm1029, %v1296, %v1311
        %v1314 = vunpack.c.l.s4 1934713408
        %v1315 = vunpack.c.0.s8 %v1314
        %v1316 = vperm.slane %v1310, %v1315
        %v1318 = vunpack.c.l.s4 1934713408
        %v1319 = vunpack.c.0.s8 %v1318
        %v1320 = vperm.slane %v1312, %v1319
        %v1321 = vrot.slane %v1304, 4
        %v1322 = vsel %vm1029, 0.0, %v1321
        %v1323 = vrot.slane %v1308, 4
        %v1324 = vsel %vm1029, 0.0, %v1323
        %v1325 = vrot.slane %v1316, 4
        %v1326 = vsel %vm1029, 0.0, %v1325
        %v1327 = vrot.slane %v1320, 4
        %v1328 = vsel %vm1029, 0.0, %v1327
        %v1329 = vrot.slane %v1260, 4
        %v1330 = vsel %vm1029, %v1329, %v1252
        %v1331 = vrot.slane %v1252, 4
        %v1332 = vsel %vm1029, %v1260, %v1331
        %v1334 = vunpack.c.l.s4 1983009808
        %v1335 = vunpack.c.0.s8 %v1334
        %v1336 = vperm.slane %v1330, %v1335
        %v1338 = vunpack.c.l.s4 1983009808
        %v1339 = vunpack.c.0.s8 %v1338
        %v1340 = vperm.slane %v1332, %v1339
        %v1341 = vrot.slane %v1264, 4
        %v1342 = vsel %vm1029, %v1341, %v1256
        %v1343 = vrot.slane %v1256, 4
        %v1344 = vsel %vm1029, %v1264, %v1343
        %v1346 = vunpack.c.l.s4 1983009808
        %v1347 = vunpack.c.0.s8 %v1346
        %v1348 = vperm.slane %v1342, %v1347
        %v1350 = vunpack.c.l.s4 1983009808
        %v1351 = vunpack.c.0.s8 %v1350
        %v1352 = vperm.slane %v1344, %v1351
        %v1353 = vrot.slane %v1348, 4
        %v1354 = vsel %vm1029, %v1353, %v1336
        %v1355 = vrot.slane %v1336, 4
        %v1356 = vsel %vm1029, %v1348, %v1355
        %v1358 = vunpack.c.l.s4 1934713408
        %v1359 = vunpack.c.0.s8 %v1358
        %v1360 = vperm.slane %v1354, %v1359
        %v1362 = vunpack.c.l.s4 1934713408
        %v1363 = vunpack.c.0.s8 %v1362
        %v1364 = vperm.slane %v1356, %v1363
        %v1365 = vrot.slane %v1352, 4
        %v1366 = vsel %vm1029, %v1365, %v1340
        %v1367 = vrot.slane %v1340, 4
        %v1368 = vsel %vm1029, %v1352, %v1367
        %v1370 = vunpack.c.l.s4 1934713408
        %v1371 = vunpack.c.0.s8 %v1370
        %v1372 = vperm.slane %v1366, %v1371
        %v1374 = vunpack.c.l.s4 1934713408
        %v1375 = vunpack.c.0.s8 %v1374
        %v1376 = vperm.slane %v1368, %v1375
        %v1377 = vrot.slane %v1360, 4
        %v1378 = vsel %vm1029, 0.0, %v1377
        %v1379 = vrot.slane %v1364, 4
        %v1380 = vsel %vm1029, 0.0, %v1379
        %v1381 = vrot.slane %v1372, 4
        %v1382 = vsel %vm1029, 0.0, %v1381
        %v1383 = vrot.slane %v1376, 4
        %v1384 = vsel %vm1029, 0.0, %v1383
        %v1385 = vsel %vm1029, %v1323, %v1304
        %v1387 = vunpack.c.l.s4 1983009808
        %v1388 = vunpack.c.0.s8 %v1387
        %v1389 = vperm.slane %v1385, %v1388
        %v1390 = vrot.slane %v1324, 4
        %v1391 = vsel %vm1029, %v1390, %v1322
        %v1393 = vunpack.c.l.s4 1983009808
        %v1394 = vunpack.c.0.s8 %v1393
        %v1395 = vperm.slane %v1391, %v1394
        %v1396 = vsel %vm1029, %v1327, %v1316
        %v1398 = vunpack.c.l.s4 1983009808
        %v1399 = vunpack.c.0.s8 %v1398
        %v1400 = vperm.slane %v1396, %v1399
        %v1401 = vrot.slane %v1328, 4
        %v1402 = vsel %vm1029, %v1401, %v1326
        %v1404 = vunpack.c.l.s4 1983009808
        %v1405 = vunpack.c.0.s8 %v1404
        %v1406 = vperm.slane %v1402, %v1405
        %v1407 = vrot.slane %v1395, 4
        %v1408 = vsel %vm1029, %v1407, %v1389
        %v1409 = vrot.slane %v1389, 4
        %v1410 = vsel %vm1029, %v1395, %v1409
        %v1412 = vunpack.c.l.s4 1934713408
        %v1413 = vunpack.c.0.s8 %v1412
        %v1414 = vperm.slane %v1408, %v1413
        %v1416 = vunpack.c.l.s4 1934713408
        %v1417 = vunpack.c.0.s8 %v1416
        %v1418 = vperm.slane %v1410, %v1417
        %v1419 = vrot.slane %v1406, 4
        %v1420 = vsel %vm1029, %v1419, %v1400
        %v1421 = vrot.slane %v1400, 4
        %v1422 = vsel %vm1029, %v1406, %v1421
        %v1424 = vunpack.c.l.s4 1934713408
        %v1425 = vunpack.c.0.s8 %v1424
        %v1426 = vperm.slane %v1420, %v1425
        %v1428 = vunpack.c.l.s4 1934713408
        %v1429 = vunpack.c.0.s8 %v1428
        %v1430 = vperm.slane %v1422, %v1429
        %v1431 = vrot.slane %v1426, 4
        %v1432 = vsel %vm1029, %v1431, %v1414
        %v1433 = vrot.slane %v1414, 4
        %v1434 = vsel %vm1029, %v1426, %v1433
        %v1435 = vrot.slane %v1430, 4
        %v1436 = vsel %vm1029, %v1435, %v1418
        %v1437 = vrot.slane %v1418, 4
        %v1438 = vsel %vm1029, %v1430, %v1437
        %v1439 = vsel %vm1029, %v1379, %v1360
        %v1441 = vunpack.c.l.s4 1983009808
        %v1442 = vunpack.c.0.s8 %v1441
        %v1443 = vperm.slane %v1439, %v1442
        %v1444 = vrot.slane %v1380, 4
        %v1445 = vsel %vm1029, %v1444, %v1378
        %v1447 = vunpack.c.l.s4 1983009808
        %v1448 = vunpack.c.0.s8 %v1447
        %v1449 = vperm.slane %v1445, %v1448
        %v1450 = vsel %vm1029, %v1383, %v1372
        %v1452 = vunpack.c.l.s4 1983009808
        %v1453 = vunpack.c.0.s8 %v1452
        %v1454 = vperm.slane %v1450, %v1453
        %v1455 = vrot.slane %v1384, 4
        %v1456 = vsel %vm1029, %v1455, %v1382
        %v1458 = vunpack.c.l.s4 1983009808
        %v1459 = vunpack.c.0.s8 %v1458
        %v1460 = vperm.slane %v1456, %v1459
        %v1461 = vrot.slane %v1449, 4
        %v1462 = vsel %vm1029, %v1461, %v1443
        %v1463 = vrot.slane %v1443, 4
        %v1464 = vsel %vm1029, %v1449, %v1463
        %v1466 = vunpack.c.l.s4 1934713408
        %v1467 = vunpack.c.0.s8 %v1466
        %v1468 = vperm.slane %v1462, %v1467
        %v1470 = vunpack.c.l.s4 1934713408
        %v1471 = vunpack.c.0.s8 %v1470
        %v1472 = vperm.slane %v1464, %v1471
        %v1473 = vrot.slane %v1460, 4
        %v1474 = vsel %vm1029, %v1473, %v1454
        %v1475 = vrot.slane %v1454, 4
        %v1476 = vsel %vm1029, %v1460, %v1475
        %v1478 = vunpack.c.l.s4 1934713408
        %v1479 = vunpack.c.0.s8 %v1478
        %v1480 = vperm.slane %v1474, %v1479
        %v1482 = vunpack.c.l.s4 1934713408
        %v1483 = vunpack.c.0.s8 %v1482
        %v1484 = vperm.slane %v1476, %v1483
        %v1485 = vrot.slane %v1480, 4
        %v1486 = vsel %vm1029, %v1485, %v1468
        %v1487 = vrot.slane %v1468, 4
        %v1488 = vsel %vm1029, %v1480, %v1487
        %v1489 = vrot.slane %v1484, 4
        %v1490 = vsel %vm1029, %v1489, %v1472
        %v1491 = vrot.slane %v1472, 4
        %v1492 = vsel %vm1029, %v1484, %v1491
        %1493 = vrot.lane.b32.xlu0 %v1004, 64
        %v1494 = vpop.permute.xlu0 %1493
        %1495 = vrot.lane.b32.xlu0 %v1006, 64
        %v1496 = vpop.permute.xlu0 %1495
        %1497 = vrot.lane.b32.xlu0 %v1011, 64
        %v1498 = vpop.permute.xlu0 %1497
        %1499 = vrot.lane.b32.xlu0 %v1013, 64
        %v1500 = vpop.permute.xlu0 %1499
        %1501 = vrot.lane.b32.xlu0 %v1017, 64
        %v1502 = vpop.permute.xlu0 %1501
        %1503 = vrot.lane.b32.xlu0 %v1019, 64
        %v1504 = vpop.permute.xlu0 %1503
        %1505 = vrot.lane.b32.xlu0 %v1023, 64
        %v1506 = vpop.permute.xlu0 %1505
        %1507 = vrot.lane.b32.xlu0 %v1025, 64
        %v1508 = vpop.permute.xlu0 %1507
        %v1517 = vrot.slane %v1502, 4
        %v1518 = vsel %vm1029, %v1517, %v1494
        %v1519 = vrot.slane %v1494, 4
        %v1520 = vsel %vm1029, %v1502, %v1519
        %v1522 = vunpack.c.l.s4 1983009808
        %v1523 = vunpack.c.0.s8 %v1522
        %v1524 = vperm.slane %v1518, %v1523
        %v1526 = vunpack.c.l.s4 1983009808
        %v1527 = vunpack.c.0.s8 %v1526
        %v1528 = vperm.slane %v1520, %v1527
        %v1529 = vrot.slane %v1506, 4
        %v1530 = vsel %vm1029, %v1529, %v1498
        %v1531 = vrot.slane %v1498, 4
        %v1532 = vsel %vm1029, %v1506, %v1531
        %v1534 = vunpack.c.l.s4 1983009808
        %v1535 = vunpack.c.0.s8 %v1534
        %v1536 = vperm.slane %v1530, %v1535
        %v1538 = vunpack.c.l.s4 1983009808
        %v1539 = vunpack.c.0.s8 %v1538
        %v1540 = vperm.slane %v1532, %v1539
        %v1541 = vrot.slane %v1536, 4
        %v1542 = vsel %vm1029, %v1541, %v1524
        %v1543 = vrot.slane %v1524, 4
        %v1544 = vsel %vm1029, %v1536, %v1543
        %v1546 = vunpack.c.l.s4 1934713408
        %v1547 = vunpack.c.0.s8 %v1546
        %v1548 = vperm.slane %v1542, %v1547
        %v1550 = vunpack.c.l.s4 1934713408
        %v1551 = vunpack.c.0.s8 %v1550
        %v1552 = vperm.slane %v1544, %v1551
        %v1553 = vrot.slane %v1540, 4
        %v1554 = vsel %vm1029, %v1553, %v1528
        %v1555 = vrot.slane %v1528, 4
        %v1556 = vsel %vm1029, %v1540, %v1555
        %v1558 = vunpack.c.l.s4 1934713408
        %v1559 = vunpack.c.0.s8 %v1558
        %v1560 = vperm.slane %v1554, %v1559
        %v1562 = vunpack.c.l.s4 1934713408
        %v1563 = vunpack.c.0.s8 %v1562
        %v1564 = vperm.slane %v1556, %v1563
        %v1565 = vrot.slane %v1548, 4
        %v1566 = vsel %vm1029, 0.0, %v1565
        %v1567 = vrot.slane %v1552, 4
        %v1568 = vsel %vm1029, 0.0, %v1567
        %v1569 = vrot.slane %v1560, 4
        %v1570 = vsel %vm1029, 0.0, %v1569
        %v1571 = vrot.slane %v1564, 4
        %v1572 = vsel %vm1029, 0.0, %v1571
        %v1573 = vrot.slane %v1504, 4
        %v1574 = vsel %vm1029, %v1573, %v1496
        %v1575 = vrot.slane %v1496, 4
        %v1576 = vsel %vm1029, %v1504, %v1575
        %v1578 = vunpack.c.l.s4 1983009808
        %v1579 = vunpack.c.0.s8 %v1578
        %v1580 = vperm.slane %v1574, %v1579
        %v1582 = vunpack.c.l.s4 1983009808
        %v1583 = vunpack.c.0.s8 %v1582
        %v1584 = vperm.slane %v1576, %v1583
        %v1585 = vrot.slane %v1508, 4
        %v1586 = vsel %vm1029, %v1585, %v1500
        %v1587 = vrot.slane %v1500, 4
        %v1588 = vsel %vm1029, %v1508, %v1587
        %v1590 = vunpack.c.l.s4 1983009808
        %v1591 = vunpack.c.0.s8 %v1590
        %v1592 = vperm.slane %v1586, %v1591
        %v1594 = vunpack.c.l.s4 1983009808
        %v1595 = vunpack.c.0.s8 %v1594
        %v1596 = vperm.slane %v1588, %v1595
        %v1597 = vrot.slane %v1592, 4
        %v1598 = vsel %vm1029, %v1597, %v1580
        %v1599 = vrot.slane %v1580, 4
        %v1600 = vsel %vm1029, %v1592, %v1599
        %v1602 = vunpack.c.l.s4 1934713408
        %v1603 = vunpack.c.0.s8 %v1602
        %v1604 = vperm.slane %v1598, %v1603
        %v1606 = vunpack.c.l.s4 1934713408
        %v1607 = vunpack.c.0.s8 %v1606
        %v1608 = vperm.slane %v1600, %v1607
        %v1609 = vrot.slane %v1596, 4
        %v1610 = vsel %vm1029, %v1609, %v1584
        %v1611 = vrot.slane %v1584, 4
        %v1612 = vsel %vm1029, %v1596, %v1611
        %v1614 = vunpack.c.l.s4 1934713408
        %v1615 = vunpack.c.0.s8 %v1614
        %v1616 = vperm.slane %v1610, %v1615
        %v1618 = vunpack.c.l.s4 1934713408
        %v1619 = vunpack.c.0.s8 %v1618
        %v1620 = vperm.slane %v1612, %v1619
        %v1621 = vrot.slane %v1604, 4
        %v1622 = vsel %vm1029, 0.0, %v1621
        %v1623 = vrot.slane %v1608, 4
        %v1624 = vsel %vm1029, 0.0, %v1623
        %v1625 = vrot.slane %v1616, 4
        %v1626 = vsel %vm1029, 0.0, %v1625
        %v1627 = vrot.slane %v1620, 4
        %v1628 = vsel %vm1029, 0.0, %v1627
        %v1629 = vsel %vm1029, %v1567, %v1548
        %v1631 = vunpack.c.l.s4 1983009808
        %v1632 = vunpack.c.0.s8 %v1631
        %v1633 = vperm.slane %v1629, %v1632
        %v1634 = vrot.slane %v1568, 4
        %v1635 = vsel %vm1029, %v1634, %v1566
        %v1637 = vunpack.c.l.s4 1983009808
        %v1638 = vunpack.c.0.s8 %v1637
        %v1639 = vperm.slane %v1635, %v1638
        %v1640 = vsel %vm1029, %v1571, %v1560
        %v1642 = vunpack.c.l.s4 1983009808
        %v1643 = vunpack.c.0.s8 %v1642
        %v1644 = vperm.slane %v1640, %v1643
        %v1645 = vrot.slane %v1572, 4
        %v1646 = vsel %vm1029, %v1645, %v1570
        %v1648 = vunpack.c.l.s4 1983009808
        %v1649 = vunpack.c.0.s8 %v1648
        %v1650 = vperm.slane %v1646, %v1649
        %v1651 = vrot.slane %v1639, 4
        %v1652 = vsel %vm1029, %v1651, %v1633
        %v1653 = vrot.slane %v1633, 4
        %v1654 = vsel %vm1029, %v1639, %v1653
        %v1656 = vunpack.c.l.s4 1934713408
        %v1657 = vunpack.c.0.s8 %v1656
        %v1658 = vperm.slane %v1652, %v1657
        %v1660 = vunpack.c.l.s4 1934713408
        %v1661 = vunpack.c.0.s8 %v1660
        %v1662 = vperm.slane %v1654, %v1661
        %v1663 = vrot.slane %v1650, 4
        %v1664 = vsel %vm1029, %v1663, %v1644
        %v1665 = vrot.slane %v1644, 4
        %v1666 = vsel %vm1029, %v1650, %v1665
        %v1668 = vunpack.c.l.s4 1934713408
        %v1669 = vunpack.c.0.s8 %v1668
        %v1670 = vperm.slane %v1664, %v1669
        %v1672 = vunpack.c.l.s4 1934713408
        %v1673 = vunpack.c.0.s8 %v1672
        %v1674 = vperm.slane %v1666, %v1673
        %v1675 = vrot.slane %v1670, 4
        %v1676 = vsel %vm1029, %v1675, %v1658
        %v1677 = vrot.slane %v1658, 4
        %v1678 = vsel %vm1029, %v1670, %v1677
        %v1679 = vrot.slane %v1674, 4
        %v1680 = vsel %vm1029, %v1679, %v1662
        %v1681 = vrot.slane %v1662, 4
        %v1682 = vsel %vm1029, %v1674, %v1681
        %v1683 = vsel %vm1029, %v1623, %v1604
        %v1685 = vunpack.c.l.s4 1983009808
        %v1686 = vunpack.c.0.s8 %v1685
        %v1687 = vperm.slane %v1683, %v1686
        %v1688 = vrot.slane %v1624, 4
        %v1689 = vsel %vm1029, %v1688, %v1622
        %v1691 = vunpack.c.l.s4 1983009808
        %v1692 = vunpack.c.0.s8 %v1691
        %v1693 = vperm.slane %v1689, %v1692
        %v1694 = vsel %vm1029, %v1627, %v1616
        %v1696 = vunpack.c.l.s4 1983009808
        %v1697 = vunpack.c.0.s8 %v1696
        %v1698 = vperm.slane %v1694, %v1697
        %v1699 = vrot.slane %v1628, 4
        %v1700 = vsel %vm1029, %v1699, %v1626
        %v1702 = vunpack.c.l.s4 1983009808
        %v1703 = vunpack.c.0.s8 %v1702
        %v1704 = vperm.slane %v1700, %v1703
        %v1705 = vrot.slane %v1693, 4
        %v1706 = vsel %vm1029, %v1705, %v1687
        %v1707 = vrot.slane %v1687, 4
        %v1708 = vsel %vm1029, %v1693, %v1707
        %v1710 = vunpack.c.l.s4 1934713408
        %v1711 = vunpack.c.0.s8 %v1710
        %v1712 = vperm.slane %v1706, %v1711
        %v1714 = vunpack.c.l.s4 1934713408
        %v1715 = vunpack.c.0.s8 %v1714
        %v1716 = vperm.slane %v1708, %v1715
        %v1717 = vrot.slane %v1704, 4
        %v1718 = vsel %vm1029, %v1717, %v1698
        %v1719 = vrot.slane %v1698, 4
        %v1720 = vsel %vm1029, %v1704, %v1719
        %v1722 = vunpack.c.l.s4 1934713408
        %v1723 = vunpack.c.0.s8 %v1722
        %v1724 = vperm.slane %v1718, %v1723
        %v1726 = vunpack.c.l.s4 1934713408
        %v1727 = vunpack.c.0.s8 %v1726
        %v1728 = vperm.slane %v1720, %v1727
        %v1729 = vrot.slane %v1724, 4
        %v1730 = vsel %vm1029, %v1729, %v1712
        %v1731 = vrot.slane %v1712, 4
        %v1732 = vsel %vm1029, %v1724, %v1731
        %v1733 = vrot.slane %v1728, 4
        %v1734 = vsel %vm1029, %v1733, %v1716
        %v1735 = vrot.slane %v1716, 4
        %v1736 = vsel %vm1029, %v1728, %v1735
        %vm1737 = vcmask 64512
        %v1739 = vsel %vm1737, %v1188, 0
        %v1742 = vsel %vm1737, %v1432, 0
        %1744 = vmatpush.xpose.msra.mxu0 0.0
        %1745 = vmatpush.xpose.msra.mxu0 0.0
        %1746 = vmatpush.xpose.msra.mxu0 0.0
        %1747 = vmatpush.xpose.msra.mxu0 0.0
        %1748 = vmatpush.xpose.msra.mxu0 0.0
        %1749 = vmatpush.xpose.msra.mxu0 0.0
        %1750 = vmatpush.xpose.msra.mxu0 0.0
        %1751 = vmatpush.xpose.msra.mxu0 0.0
        %1752 = vmatpush.xpose.msra.mxu0 0.0
        %1753 = vmatpush.xpose.msra.mxu0 0.0
        %1754 = vmatpush.xpose.msra.mxu0 0.0
        %1755 = vmatpush.xpose.msra.mxu0 0.0
        %1756 = vmatpush.xpose.msra.mxu0 0.0
        %1757 = vmatpush.xpose.msra.mxu0 0.0
        %1758 = vmatpush.xpose.msra.mxu0 0.0
        %1759 = vmatpush.xpose.msra.mxu0 %v1742
        %1760 = vmatmul.f32.gmra.mxu0 %v1739
        %v1761 = vpop.f32.mrf.mxu0
        %v1762 = vadd.f32 0.0, %v1761
        %1763 = vdwg.mxu0
        %v1765 = vsel %vm1737, %v1190, 0
        %v1768 = vsel %vm1737, %v1434, 0
        %1770 = vmatpush.xpose.msra.mxu0 0.0
        %1771 = vmatpush.xpose.msra.mxu0 0.0
        %1772 = vmatpush.xpose.msra.mxu0 0.0
        %1773 = vmatpush.xpose.msra.mxu0 0.0
        %1774 = vmatpush.xpose.msra.mxu0 0.0
        %1775 = vmatpush.xpose.msra.mxu0 0.0
        %1776 = vmatpush.xpose.msra.mxu0 0.0
        %1777 = vmatpush.xpose.msra.mxu0 0.0
        %1778 = vmatpush.xpose.msra.mxu0 0.0
        %1779 = vmatpush.xpose.msra.mxu0 0.0
        %1780 = vmatpush.xpose.msra.mxu0 0.0
        %1781 = vmatpush.xpose.msra.mxu0 0.0
        %1782 = vmatpush.xpose.msra.mxu0 0.0
        %1783 = vmatpush.xpose.msra.mxu0 0.0
        %1784 = vmatpush.xpose.msra.mxu0 0.0
        %1785 = vmatpush.xpose.msra.mxu0 %v1768
        %1786 = vmatmul.f32.gmra.mxu0 %v1765
        %v1787 = vpop.f32.mrf.mxu0
        %v1788 = vadd.f32 0.0, %v1787
        %1789 = vdwg.mxu0
        %v1791 = vsel %vm1737, %v1192, 0
        %v1794 = vsel %vm1737, %v1436, 0
        %1796 = vmatpush.xpose.msra.mxu0 0.0
        %1797 = vmatpush.xpose.msra.mxu0 0.0
        %1798 = vmatpush.xpose.msra.mxu0 0.0
        %1799 = vmatpush.xpose.msra.mxu0 0.0
        %1800 = vmatpush.xpose.msra.mxu0 0.0
        %1801 = vmatpush.xpose.msra.mxu0 0.0
        %1802 = vmatpush.xpose.msra.mxu0 0.0
        %1803 = vmatpush.xpose.msra.mxu0 0.0
        %1804 = vmatpush.xpose.msra.mxu0 0.0
        %1805 = vmatpush.xpose.msra.mxu0 0.0
        %1806 = vmatpush.xpose.msra.mxu0 0.0
        %1807 = vmatpush.xpose.msra.mxu0 0.0
        %1808 = vmatpush.xpose.msra.mxu0 0.0
        %1809 = vmatpush.xpose.msra.mxu0 0.0
        %1810 = vmatpush.xpose.msra.mxu0 0.0
        %1811 = vmatpush.xpose.msra.mxu0 %v1794
        %1812 = vmatmul.f32.gmra.mxu0 %v1791
        %v1813 = vpop.f32.mrf.mxu0
        %v1814 = vadd.f32 0.0, %v1813
        %1815 = vdwg.mxu0
        %v1817 = vsel %vm1737, %v1194, 0
        %v1820 = vsel %vm1737, %v1438, 0
        %1822 = vmatpush.xpose.msra.mxu0 0.0
        %1823 = vmatpush.xpose.msra.mxu0 0.0
        %1824 = vmatpush.xpose.msra.mxu0 0.0
        %1825 = vmatpush.xpose.msra.mxu0 0.0
        %1826 = vmatpush.xpose.msra.mxu0 0.0
        %1827 = vmatpush.xpose.msra.mxu0 0.0
        %1828 = vmatpush.xpose.msra.mxu0 0.0
        %1829 = vmatpush.xpose.msra.mxu0 0.0
        %1830 = vmatpush.xpose.msra.mxu0 0.0
        %1831 = vmatpush.xpose.msra.mxu0 0.0
        %1832 = vmatpush.xpose.msra.mxu0 0.0
        %1833 = vmatpush.xpose.msra.mxu0 0.0
        %1834 = vmatpush.xpose.msra.mxu0 0.0
        %1835 = vmatpush.xpose.msra.mxu0 0.0
        %1836 = vmatpush.xpose.msra.mxu0 0.0
        %1837 = vmatpush.xpose.msra.mxu0 %v1820
        %1838 = vmatmul.f32.gmra.mxu0 %v1817
        %v1839 = vpop.f32.mrf.mxu0
        %v1840 = vadd.f32 0.0, %v1839
        %1841 = vdwg.mxu0
        %v1843 = vsel %vm1737, %v1242, 0
        %v1846 = vsel %vm1737, %v1486, 0
        %1848 = vmatpush.xpose.msra.mxu0 0.0
        %1849 = vmatpush.xpose.msra.mxu0 0.0
        %1850 = vmatpush.xpose.msra.mxu0 0.0
        %1851 = vmatpush.xpose.msra.mxu0 0.0
        %1852 = vmatpush.xpose.msra.mxu0 0.0
        %1853 = vmatpush.xpose.msra.mxu0 0.0
        %1854 = vmatpush.xpose.msra.mxu0 0.0
        %1855 = vmatpush.xpose.msra.mxu0 0.0
        %1856 = vmatpush.xpose.msra.mxu0 0.0
        %1857 = vmatpush.xpose.msra.mxu0 0.0
        %1858 = vmatpush.xpose.msra.mxu0 0.0
        %1859 = vmatpush.xpose.msra.mxu0 0.0
        %1860 = vmatpush.xpose.msra.mxu0 0.0
        %1861 = vmatpush.xpose.msra.mxu0 0.0
        %1862 = vmatpush.xpose.msra.mxu0 0.0
        %1863 = vmatpush.xpose.msra.mxu0 %v1846
        %1864 = vmatmul.f32.gmra.mxu0 %v1843
        %v1865 = vpop.f32.mrf.mxu0
        %v1866 = vadd.f32 0.0, %v1865
        %1867 = vdwg.mxu0
        %v1869 = vsel %vm1737, %v1244, 0
        %v1872 = vsel %vm1737, %v1488, 0
        %1874 = vmatpush.xpose.msra.mxu0 0.0
        %1875 = vmatpush.xpose.msra.mxu0 0.0
        %1876 = vmatpush.xpose.msra.mxu0 0.0
        %1877 = vmatpush.xpose.msra.mxu0 0.0
        %1878 = vmatpush.xpose.msra.mxu0 0.0
        %1879 = vmatpush.xpose.msra.mxu0 0.0
        %1880 = vmatpush.xpose.msra.mxu0 0.0
        %1881 = vmatpush.xpose.msra.mxu0 0.0
        %1882 = vmatpush.xpose.msra.mxu0 0.0
        %1883 = vmatpush.xpose.msra.mxu0 0.0
        %1884 = vmatpush.xpose.msra.mxu0 0.0
        %1885 = vmatpush.xpose.msra.mxu0 0.0
        %1886 = vmatpush.xpose.msra.mxu0 0.0
        %1887 = vmatpush.xpose.msra.mxu0 0.0
        %1888 = vmatpush.xpose.msra.mxu0 0.0
        %1889 = vmatpush.xpose.msra.mxu0 %v1872
        %1890 = vmatmul.f32.gmra.mxu0 %v1869
        %v1891 = vpop.f32.mrf.mxu0
        %v1892 = vadd.f32 0.0, %v1891
        %1893 = vdwg.mxu0
        %v1895 = vsel %vm1737, %v1246, 0
        %v1898 = vsel %vm1737, %v1490, 0
        %1900 = vmatpush.xpose.msra.mxu0 0.0
        %1901 = vmatpush.xpose.msra.mxu0 0.0
        %1902 = vmatpush.xpose.msra.mxu0 0.0
        %1903 = vmatpush.xpose.msra.mxu0 0.0
        %1904 = vmatpush.xpose.msra.mxu0 0.0
        %1905 = vmatpush.xpose.msra.mxu0 0.0
        %1906 = vmatpush.xpose.msra.mxu0 0.0
        %1907 = vmatpush.xpose.msra.mxu0 0.0
        %1908 = vmatpush.xpose.msra.mxu0 0.0
        %1909 = vmatpush.xpose.msra.mxu0 0.0
        %1910 = vmatpush.xpose.msra.mxu0 0.0
        %1911 = vmatpush.xpose.msra.mxu0 0.0
        %1912 = vmatpush.xpose.msra.mxu0 0.0
        %1913 = vmatpush.xpose.msra.mxu0 0.0
        %1914 = vmatpush.xpose.msra.mxu0 0.0
        %1915 = vmatpush.xpose.msra.mxu0 %v1898
        %1916 = vmatmul.f32.gmra.mxu0 %v1895
        %v1917 = vpop.f32.mrf.mxu0
        %v1918 = vadd.f32 0.0, %v1917
        %1919 = vdwg.mxu0
        %v1921 = vsel %vm1737, %v1248, 0
        %v1924 = vsel %vm1737, %v1492, 0
        %1926 = vmatpush.xpose.msra.mxu0 0.0
        %1927 = vmatpush.xpose.msra.mxu0 0.0
        %1928 = vmatpush.xpose.msra.mxu0 0.0
        %1929 = vmatpush.xpose.msra.mxu0 0.0
        %1930 = vmatpush.xpose.msra.mxu0 0.0
        %1931 = vmatpush.xpose.msra.mxu0 0.0
        %1932 = vmatpush.xpose.msra.mxu0 0.0
        %1933 = vmatpush.xpose.msra.mxu0 0.0
        %1934 = vmatpush.xpose.msra.mxu0 0.0
        %1935 = vmatpush.xpose.msra.mxu0 0.0
        %1936 = vmatpush.xpose.msra.mxu0 0.0
        %1937 = vmatpush.xpose.msra.mxu0 0.0
        %1938 = vmatpush.xpose.msra.mxu0 0.0
        %1939 = vmatpush.xpose.msra.mxu0 0.0
        %1940 = vmatpush.xpose.msra.mxu0 0.0
        %1941 = vmatpush.xpose.msra.mxu0 %v1924
        %1942 = vmatmul.f32.gmra.mxu0 %v1921
        %v1943 = vpop.f32.mrf.mxu0
        %v1944 = vadd.f32 0.0, %v1943
        %1945 = vdwg.mxu0
        %v1946 = vsel %vm1737, %v1762, -inf
        %1947 = vmax.xlane.f32.xlu0 %v1946
        %v1948 = vpop.xlane.xlu0 %1947
        %v1949 = vsel %vm1737, %v1788, -inf
        %1950 = vmax.xlane.f32.xlu0 %v1949
        %v1951 = vpop.xlane.xlu0 %1950
        %v1952 = vsel %vm1737, %v1814, -inf
        %1953 = vmax.xlane.f32.xlu0 %v1952
        %v1954 = vpop.xlane.xlu0 %1953
        %v1955 = vsel %vm1737, %v1840, -inf
        %1956 = vmax.xlane.f32.xlu0 %v1955
        %v1957 = vpop.xlane.xlu0 %1956
        %v1958 = vsel %vm1737, %v1866, -inf
        %1959 = vmax.xlane.f32.xlu0 %v1958
        %v1960 = vpop.xlane.xlu0 %1959
        %v1961 = vsel %vm1737, %v1892, -inf
        %1962 = vmax.xlane.f32.xlu0 %v1961
        %v1963 = vpop.xlane.xlu0 %1962
        %v1964 = vsel %vm1737, %v1918, -inf
        %1965 = vmax.xlane.f32.xlu0 %v1964
        %v1966 = vpop.xlane.xlu0 %1965
        %v1967 = vsel %vm1737, %v1944, -inf
        %1968 = vmax.xlane.f32.xlu0 %v1967
        %v1969 = vpop.xlane.xlu0 %1968
        %v1970 = vsub.f32 %v1762, %v1948
        %v1971 = vsub.f32 %v1788, %v1951
        %v1972 = vsub.f32 %v1814, %v1954
        %v1973 = vsub.f32 %v1840, %v1957
        %v1974 = vsub.f32 %v1866, %v1960
        %v1975 = vsub.f32 %v1892, %v1963
        %v1976 = vsub.f32 %v1918, %v1966
        %v1977 = vsub.f32 %v1944, %v1969
        %v1978 = vmul.f32 %v1970, 1.442695
        %v1979 = vpow.pop %v1978
        %v1980 = vmul.f32 %v1971, 1.442695
        %v1981 = vpow.pop %v1980
        %v1982 = vmul.f32 %v1972, 1.442695
        %v1983 = vpow.pop %v1982
        %v1984 = vmul.f32 %v1973, 1.442695
        %v1985 = vpow.pop %v1984
        %v1986 = vmul.f32 %v1974, 1.442695
        %v1987 = vpow.pop %v1986
        %v1988 = vmul.f32 %v1975, 1.442695
        %v1989 = vpow.pop %v1988
        %v1990 = vmul.f32 %v1976, 1.442695
        %v1991 = vpow.pop %v1990
        %v1992 = vmul.f32 %v1977, 1.442695
        %v1993 = vpow.pop %v1992
        %v1994 = vsel %vm1737, %v1979, 0.0
        %1995 = vadd.xlane.f32.xlu0 %v1994
        %v1996 = vpop.xlane.xlu0 %1995
        %v1997 = vsel %vm1737, %v1981, 0.0
        %1998 = vadd.xlane.f32.xlu0 %v1997
        %v1999 = vpop.xlane.xlu0 %1998
        %v2000 = vsel %vm1737, %v1983, 0.0
        %2001 = vadd.xlane.f32.xlu0 %v2000
        %v2002 = vpop.xlane.xlu0 %2001
        %v2003 = vsel %vm1737, %v1985, 0.0
        %2004 = vadd.xlane.f32.xlu0 %v2003
        %v2005 = vpop.xlane.xlu0 %2004
        %v2006 = vsel %vm1737, %v1987, 0.0
        %2007 = vadd.xlane.f32.xlu0 %v2006
        %v2008 = vpop.xlane.xlu0 %2007
        %v2009 = vsel %vm1737, %v1989, 0.0
        %2010 = vadd.xlane.f32.xlu0 %v2009
        %v2011 = vpop.xlane.xlu0 %2010
        %v2012 = vsel %vm1737, %v1991, 0.0
        %2013 = vadd.xlane.f32.xlu0 %v2012
        %v2014 = vpop.xlane.xlu0 %2013
        %v2015 = vsel %vm1737, %v1993, 0.0
        %2016 = vadd.xlane.f32.xlu0 %v2015
        %v2017 = vpop.xlane.xlu0 %2016
        %v2018 = vrcp.pop %v1996
        %v2019 = vrcp.pop %v1999
        %v2020 = vrcp.pop %v2002
        %v2021 = vrcp.pop %v2005
        %v2022 = vrcp.pop %v2008
        %v2023 = vrcp.pop %v2011
        %v2024 = vrcp.pop %v2014
        %v2025 = vrcp.pop %v2017
        %v2026 = vmul.f32 %v1979, %v2018
        %v2027 = vmul.f32 %v1981, %v2019
        %v2028 = vmul.f32 %v1983, %v2020
        %v2029 = vmul.f32 %v1985, %v2021
        %v2030 = vmul.f32 %v1987, %v2022
        %v2031 = vmul.f32 %v1989, %v2023
        %v2032 = vmul.f32 %v1991, %v2024
        %v2033 = vmul.f32 %v1993, %v2025
        %v2035 = vsel %vm1737, %v2026, 0
        %2037 = vmatpush.msra.mxu0 0.0
        %2038 = vmatpush.msra.mxu0 0.0
        %2039 = vmatpush.msra.mxu0 0.0
        %2040 = vmatpush.msra.mxu0 0.0
        %2041 = vmatpush.msra.mxu0 0.0
        %2042 = vmatpush.msra.mxu0 0.0
        %2043 = vmatpush.msra.mxu0 0.0
        %2044 = vmatpush.msra.mxu0 0.0
        %2045 = vmatpush.msra.mxu0 0.0
        %2046 = vmatpush.msra.mxu0 0.0
        %2047 = vmatpush.msra.mxu0 0.0
        %2048 = vmatpush.msra.mxu0 0.0
        %2049 = vmatpush.msra.mxu0 0.0
        %2050 = vmatpush.msra.mxu0 0.0
        %2051 = vmatpush.msra.mxu0 0.0
        %2052 = vmatpush.msra.mxu0 %v1676
        %2053 = vmatmul.f32.gmra.mxu0 %v2035
        %v2054 = vpop.f32.mrf.mxu0
        %v2055 = vadd.f32 0.0, %v2054
        %2056 = vdwg.mxu0
        %v2058 = vsel %vm1737, %v2027, 0
        %2060 = vmatpush.msra.mxu0 0.0
        %2061 = vmatpush.msra.mxu0 0.0
        %2062 = vmatpush.msra.mxu0 0.0
        %2063 = vmatpush.msra.mxu0 0.0
        %2064 = vmatpush.msra.mxu0 0.0
        %2065 = vmatpush.msra.mxu0 0.0
        %2066 = vmatpush.msra.mxu0 0.0
        %2067 = vmatpush.msra.mxu0 0.0
        %2068 = vmatpush.msra.mxu0 0.0
        %2069 = vmatpush.msra.mxu0 0.0
        %2070 = vmatpush.msra.mxu0 0.0
        %2071 = vmatpush.msra.mxu0 0.0
        %2072 = vmatpush.msra.mxu0 0.0
        %2073 = vmatpush.msra.mxu0 0.0
        %2074 = vmatpush.msra.mxu0 0.0
        %2075 = vmatpush.msra.mxu0 %v1678
        %2076 = vmatmul.f32.gmra.mxu0 %v2058
        %v2077 = vpop.f32.mrf.mxu0
        %v2078 = vadd.f32 0.0, %v2077
        %2079 = vdwg.mxu0
        %v2081 = vsel %vm1737, %v2028, 0
        %2083 = vmatpush.msra.mxu0 0.0
        %2084 = vmatpush.msra.mxu0 0.0
        %2085 = vmatpush.msra.mxu0 0.0
        %2086 = vmatpush.msra.mxu0 0.0
        %2087 = vmatpush.msra.mxu0 0.0
        %2088 = vmatpush.msra.mxu0 0.0
        %2089 = vmatpush.msra.mxu0 0.0
        %2090 = vmatpush.msra.mxu0 0.0
        %2091 = vmatpush.msra.mxu0 0.0
        %2092 = vmatpush.msra.mxu0 0.0
        %2093 = vmatpush.msra.mxu0 0.0
        %2094 = vmatpush.msra.mxu0 0.0
        %2095 = vmatpush.msra.mxu0 0.0
        %2096 = vmatpush.msra.mxu0 0.0
        %2097 = vmatpush.msra.mxu0 0.0
        %2098 = vmatpush.msra.mxu0 %v1680
        %2099 = vmatmul.f32.gmra.mxu0 %v2081
        %v2100 = vpop.f32.mrf.mxu0
        %v2101 = vadd.f32 0.0, %v2100
        %2102 = vdwg.mxu0
        %v2104 = vsel %vm1737, %v2029, 0
        %2106 = vmatpush.msra.mxu0 0.0
        %2107 = vmatpush.msra.mxu0 0.0
        %2108 = vmatpush.msra.mxu0 0.0
        %2109 = vmatpush.msra.mxu0 0.0
        %2110 = vmatpush.msra.mxu0 0.0
        %2111 = vmatpush.msra.mxu0 0.0
        %2112 = vmatpush.msra.mxu0 0.0
        %2113 = vmatpush.msra.mxu0 0.0
        %2114 = vmatpush.msra.mxu0 0.0
        %2115 = vmatpush.msra.mxu0 0.0
        %2116 = vmatpush.msra.mxu0 0.0
        %2117 = vmatpush.msra.mxu0 0.0
        %2118 = vmatpush.msra.mxu0 0.0
        %2119 = vmatpush.msra.mxu0 0.0
        %2120 = vmatpush.msra.mxu0 0.0
        %2121 = vmatpush.msra.mxu0 %v1682
        %2122 = vmatmul.f32.gmra.mxu0 %v2104
        %v2123 = vpop.f32.mrf.mxu0
        %v2124 = vadd.f32 0.0, %v2123
        %2125 = vdwg.mxu0
        %v2127 = vsel %vm1737, %v2030, 0
        %2129 = vmatpush.msra.mxu0 0.0
        %2130 = vmatpush.msra.mxu0 0.0
        %2131 = vmatpush.msra.mxu0 0.0
        %2132 = vmatpush.msra.mxu0 0.0
        %2133 = vmatpush.msra.mxu0 0.0
        %2134 = vmatpush.msra.mxu0 0.0
        %2135 = vmatpush.msra.mxu0 0.0
        %2136 = vmatpush.msra.mxu0 0.0
        %2137 = vmatpush.msra.mxu0 0.0
        %2138 = vmatpush.msra.mxu0 0.0
        %2139 = vmatpush.msra.mxu0 0.0
        %2140 = vmatpush.msra.mxu0 0.0
        %2141 = vmatpush.msra.mxu0 0.0
        %2142 = vmatpush.msra.mxu0 0.0
        %2143 = vmatpush.msra.mxu0 0.0
        %2144 = vmatpush.msra.mxu0 %v1730
        %2145 = vmatmul.f32.gmra.mxu0 %v2127
        %v2146 = vpop.f32.mrf.mxu0
        %v2147 = vadd.f32 0.0, %v2146
        %2148 = vdwg.mxu0
        %v2150 = vsel %vm1737, %v2031, 0
        %2152 = vmatpush.msra.mxu0 0.0
        %2153 = vmatpush.msra.mxu0 0.0
        %2154 = vmatpush.msra.mxu0 0.0
        %2155 = vmatpush.msra.mxu0 0.0
        %2156 = vmatpush.msra.mxu0 0.0
        %2157 = vmatpush.msra.mxu0 0.0
        %2158 = vmatpush.msra.mxu0 0.0
        %2159 = vmatpush.msra.mxu0 0.0
        %2160 = vmatpush.msra.mxu0 0.0
        %2161 = vmatpush.msra.mxu0 0.0
        %2162 = vmatpush.msra.mxu0 0.0
        %2163 = vmatpush.msra.mxu0 0.0
        %2164 = vmatpush.msra.mxu0 0.0
        %2165 = vmatpush.msra.mxu0 0.0
        %2166 = vmatpush.msra.mxu0 0.0
        %2167 = vmatpush.msra.mxu0 %v1732
        %2168 = vmatmul.f32.gmra.mxu0 %v2150
        %v2169 = vpop.f32.mrf.mxu0
        %v2170 = vadd.f32 0.0, %v2169
        %2171 = vdwg.mxu0
        %v2173 = vsel %vm1737, %v2032, 0
        %2175 = vmatpush.msra.mxu0 0.0
        %2176 = vmatpush.msra.mxu0 0.0
        %2177 = vmatpush.msra.mxu0 0.0
        %2178 = vmatpush.msra.mxu0 0.0
        %2179 = vmatpush.msra.mxu0 0.0
        %2180 = vmatpush.msra.mxu0 0.0
        %2181 = vmatpush.msra.mxu0 0.0
        %2182 = vmatpush.msra.mxu0 0.0
        %2183 = vmatpush.msra.mxu0 0.0
        %2184 = vmatpush.msra.mxu0 0.0
        %2185 = vmatpush.msra.mxu0 0.0
        %2186 = vmatpush.msra.mxu0 0.0
        %2187 = vmatpush.msra.mxu0 0.0
        %2188 = vmatpush.msra.mxu0 0.0
        %2189 = vmatpush.msra.mxu0 0.0
        %2190 = vmatpush.msra.mxu0 %v1734
        %2191 = vmatmul.f32.gmra.mxu0 %v2173
        %v2192 = vpop.f32.mrf.mxu0
        %v2193 = vadd.f32 0.0, %v2192
        %2194 = vdwg.mxu0
        %v2196 = vsel %vm1737, %v2033, 0
        %2198 = vmatpush.msra.mxu0 0.0
        %2199 = vmatpush.msra.mxu0 0.0
        %2200 = vmatpush.msra.mxu0 0.0
        %2201 = vmatpush.msra.mxu0 0.0
        %2202 = vmatpush.msra.mxu0 0.0
        %2203 = vmatpush.msra.mxu0 0.0
        %2204 = vmatpush.msra.mxu0 0.0
        %2205 = vmatpush.msra.mxu0 0.0
        %2206 = vmatpush.msra.mxu0 0.0
        %2207 = vmatpush.msra.mxu0 0.0
        %2208 = vmatpush.msra.mxu0 0.0
        %2209 = vmatpush.msra.mxu0 0.0
        %2210 = vmatpush.msra.mxu0 0.0
        %2211 = vmatpush.msra.mxu0 0.0
        %2212 = vmatpush.msra.mxu0 0.0
        %2213 = vmatpush.msra.mxu0 %v1736
        %2214 = vmatmul.f32.gmra.mxu0 %v2196
        %v2215 = vpop.f32.mrf.mxu0
        %v2216 = vadd.f32 0.0, %v2215
        %2217 = vdwg.mxu0
        %v2218 = vrot.slane %v2101, 4
        %v2219 = vsel %vm1029, %v2218, %v2055
        %v2220 = vrot.slane %v2055, 4
        %v2221 = vsel %vm1029, %v2101, %v2220
        %v2223 = vunpack.c.l.s4 1983009808
        %v2224 = vunpack.c.0.s8 %v2223
        %v2225 = vperm.slane %v2219, %v2224
        %v2227 = vunpack.c.l.s4 1983009808
        %v2228 = vunpack.c.0.s8 %v2227
        %v2229 = vperm.slane %v2221, %v2228
        %v2230 = vrot.slane %v2124, 4
        %v2231 = vsel %vm1029, %v2230, %v2078
        %v2232 = vrot.slane %v2078, 4
        %v2233 = vsel %vm1029, %v2124, %v2232
        %v2235 = vunpack.c.l.s4 1983009808
        %v2236 = vunpack.c.0.s8 %v2235
        %v2237 = vperm.slane %v2231, %v2236
        %v2239 = vunpack.c.l.s4 1983009808
        %v2240 = vunpack.c.0.s8 %v2239
        %v2241 = vperm.slane %v2233, %v2240
        %v2242 = vrot.slane %v2237, 4
        %v2243 = vsel %vm1029, %v2242, %v2225
        %v2244 = vrot.slane %v2225, 4
        %v2245 = vsel %vm1029, %v2237, %v2244
        %v2247 = vunpack.c.l.s4 1934713408
        %v2248 = vunpack.c.0.s8 %v2247
        %v2249 = vperm.slane %v2243, %v2248
        %v2251 = vunpack.c.l.s4 1934713408
        %v2252 = vunpack.c.0.s8 %v2251
        %v2253 = vperm.slane %v2245, %v2252
        %v2254 = vrot.slane %v2241, 4
        %v2255 = vsel %vm1029, %v2254, %v2229
        %v2256 = vrot.slane %v2229, 4
        %v2257 = vsel %vm1029, %v2241, %v2256
        %v2259 = vunpack.c.l.s4 1934713408
        %v2260 = vunpack.c.0.s8 %v2259
        %v2261 = vperm.slane %v2255, %v2260
        %v2263 = vunpack.c.l.s4 1934713408
        %v2264 = vunpack.c.0.s8 %v2263
        %v2265 = vperm.slane %v2257, %v2264
        %v2266 = vrot.slane %v2249, 4
        %v2267 = vsel %vm1029, 0.0, %v2266
        %v2268 = vrot.slane %v2253, 4
        %v2269 = vsel %vm1029, 0.0, %v2268
        %v2270 = vrot.slane %v2261, 4
        %v2271 = vsel %vm1029, 0.0, %v2270
        %v2272 = vrot.slane %v2265, 4
        %v2273 = vsel %vm1029, 0.0, %v2272
        %v2274 = vrot.slane %v2193, 4
        %v2275 = vsel %vm1029, %v2274, %v2147
        %v2276 = vrot.slane %v2147, 4
        %v2277 = vsel %vm1029, %v2193, %v2276
        %v2279 = vunpack.c.l.s4 1983009808
        %v2280 = vunpack.c.0.s8 %v2279
        %v2281 = vperm.slane %v2275, %v2280
        %v2283 = vunpack.c.l.s4 1983009808
        %v2284 = vunpack.c.0.s8 %v2283
        %v2285 = vperm.slane %v2277, %v2284
        %v2286 = vrot.slane %v2216, 4
        %v2287 = vsel %vm1029, %v2286, %v2170
        %v2288 = vrot.slane %v2170, 4
        %v2289 = vsel %vm1029, %v2216, %v2288
        %v2291 = vunpack.c.l.s4 1983009808
        %v2292 = vunpack.c.0.s8 %v2291
        %v2293 = vperm.slane %v2287, %v2292
        %v2295 = vunpack.c.l.s4 1983009808
        %v2296 = vunpack.c.0.s8 %v2295
        %v2297 = vperm.slane %v2289, %v2296
        %v2298 = vrot.slane %v2293, 4
        %v2299 = vsel %vm1029, %v2298, %v2281
        %v2300 = vrot.slane %v2281, 4
        %v2301 = vsel %vm1029, %v2293, %v2300
        %v2303 = vunpack.c.l.s4 1934713408
        %v2304 = vunpack.c.0.s8 %v2303
        %v2305 = vperm.slane %v2299, %v2304
        %v2307 = vunpack.c.l.s4 1934713408
        %v2308 = vunpack.c.0.s8 %v2307
        %v2309 = vperm.slane %v2301, %v2308
        %v2310 = vrot.slane %v2297, 4
        %v2311 = vsel %vm1029, %v2310, %v2285
        %v2312 = vrot.slane %v2285, 4
        %v2313 = vsel %vm1029, %v2297, %v2312
        %v2315 = vunpack.c.l.s4 1934713408
        %v2316 = vunpack.c.0.s8 %v2315
        %v2317 = vperm.slane %v2311, %v2316
        %v2319 = vunpack.c.l.s4 1934713408
        %v2320 = vunpack.c.0.s8 %v2319
        %v2321 = vperm.slane %v2313, %v2320
        %v2322 = vrot.slane %v2305, 4
        %v2323 = vsel %vm1029, 0.0, %v2322
        %v2324 = vrot.slane %v2309, 4
        %v2325 = vsel %vm1029, 0.0, %v2324
        %v2326 = vrot.slane %v2317, 4
        %v2327 = vsel %vm1029, 0.0, %v2326
        %v2328 = vrot.slane %v2321, 4
        %v2329 = vsel %vm1029, 0.0, %v2328
        %v2330 = vsel %vm1029, %v2268, %v2249
        %v2332 = vunpack.c.l.s4 1983009808
        %v2333 = vunpack.c.0.s8 %v2332
        %v2334 = vperm.slane %v2330, %v2333
        %v2335 = vrot.slane %v2269, 4
        %v2336 = vsel %vm1029, %v2335, %v2267
        %v2338 = vunpack.c.l.s4 1983009808
        %v2339 = vunpack.c.0.s8 %v2338
        %v2340 = vperm.slane %v2336, %v2339
        %v2341 = vsel %vm1029, %v2272, %v2261
        %v2343 = vunpack.c.l.s4 1983009808
        %v2344 = vunpack.c.0.s8 %v2343
        %v2345 = vperm.slane %v2341, %v2344
        %v2346 = vrot.slane %v2273, 4
        %v2347 = vsel %vm1029, %v2346, %v2271
        %v2349 = vunpack.c.l.s4 1983009808
        %v2350 = vunpack.c.0.s8 %v2349
        %v2351 = vperm.slane %v2347, %v2350
        %v2352 = vrot.slane %v2340, 4
        %v2353 = vsel %vm1029, %v2352, %v2334
        %v2354 = vrot.slane %v2334, 4
        %v2355 = vsel %vm1029, %v2340, %v2354
        %v2357 = vunpack.c.l.s4 1934713408
        %v2358 = vunpack.c.0.s8 %v2357
        %v2359 = vperm.slane %v2353, %v2358
        %v2361 = vunpack.c.l.s4 1934713408
        %v2362 = vunpack.c.0.s8 %v2361
        %v2363 = vperm.slane %v2355, %v2362
        %v2364 = vrot.slane %v2351, 4
        %v2365 = vsel %vm1029, %v2364, %v2345
        %v2366 = vrot.slane %v2345, 4
        %v2367 = vsel %vm1029, %v2351, %v2366
        %v2369 = vunpack.c.l.s4 1934713408
        %v2370 = vunpack.c.0.s8 %v2369
        %v2371 = vperm.slane %v2365, %v2370
        %v2373 = vunpack.c.l.s4 1934713408
        %v2374 = vunpack.c.0.s8 %v2373
        %v2375 = vperm.slane %v2367, %v2374
        %v2376 = vrot.slane %v2371, 4
        %v2377 = vsel %vm1029, %v2376, %v2359
        %v2378 = vrot.slane %v2359, 4
        %v2379 = vsel %vm1029, %v2371, %v2378
        %v2380 = vrot.slane %v2375, 4
        %v2381 = vsel %vm1029, %v2380, %v2363
        %v2382 = vrot.slane %v2363, 4
        %v2383 = vsel %vm1029, %v2375, %v2382
        %v2384 = vsel %vm1029, %v2324, %v2305
        %v2386 = vunpack.c.l.s4 1983009808
        %v2387 = vunpack.c.0.s8 %v2386
        %v2388 = vperm.slane %v2384, %v2387
        %v2389 = vrot.slane %v2325, 4
        %v2390 = vsel %vm1029, %v2389, %v2323
        %v2392 = vunpack.c.l.s4 1983009808
        %v2393 = vunpack.c.0.s8 %v2392
        %v2394 = vperm.slane %v2390, %v2393
        %v2395 = vsel %vm1029, %v2328, %v2317
        %v2397 = vunpack.c.l.s4 1983009808
        %v2398 = vunpack.c.0.s8 %v2397
        %v2399 = vperm.slane %v2395, %v2398
        %v2400 = vrot.slane %v2329, 4
        %v2401 = vsel %vm1029, %v2400, %v2327
        %v2403 = vunpack.c.l.s4 1983009808
        %v2404 = vunpack.c.0.s8 %v2403
        %v2405 = vperm.slane %v2401, %v2404
        %v2406 = vrot.slane %v2394, 4
        %v2407 = vsel %vm1029, %v2406, %v2388
        %v2408 = vrot.slane %v2388, 4
        %v2409 = vsel %vm1029, %v2394, %v2408
        %v2411 = vunpack.c.l.s4 1934713408
        %v2412 = vunpack.c.0.s8 %v2411
        %v2413 = vperm.slane %v2407, %v2412
        %v2415 = vunpack.c.l.s4 1934713408
        %v2416 = vunpack.c.0.s8 %v2415
        %v2417 = vperm.slane %v2409, %v2416
        %v2418 = vrot.slane %v2405, 4
        %v2419 = vsel %vm1029, %v2418, %v2399
        %v2420 = vrot.slane %v2399, 4
        %v2421 = vsel %vm1029, %v2405, %v2420
        %v2423 = vunpack.c.l.s4 1934713408
        %v2424 = vunpack.c.0.s8 %v2423
        %v2425 = vperm.slane %v2419, %v2424
        %v2427 = vunpack.c.l.s4 1934713408
        %v2428 = vunpack.c.0.s8 %v2427
        %v2429 = vperm.slane %v2421, %v2428
        %v2430 = vrot.slane %v2425, 4
        %v2431 = vsel %vm1029, %v2430, %v2413
        %v2432 = vrot.slane %v2413, 4
        %v2433 = vsel %vm1029, %v2425, %v2432
        %v2434 = vrot.slane %v2429, 4
        %v2435 = vsel %vm1029, %v2434, %v2417
        %v2436 = vrot.slane %v2417, 4
        %v2437 = vsel %vm1029, %v2429, %v2436
        %2440 = vrot.lane.b32.xlu0 %v2379, 8
        %v2441 = vpop.permute.xlu0 %2440
        %2442 = vrot.lane.b32.xlu0 %v2433, 8
        %v2443 = vpop.permute.xlu0 %2442
        %2448 = vrot.lane.b32.xlu0 %v2381, 16
        %v2449 = vpop.permute.xlu0 %2448
        %2450 = vrot.lane.b32.xlu0 %v2435, 16
        %v2451 = vpop.permute.xlu0 %2450
        %2456 = vrot.lane.b32.xlu0 %v2383, 24
        %v2457 = vpop.permute.xlu0 %2456
        %2458 = vrot.lane.b32.xlu0 %v2437, 24
        %v2459 = vpop.permute.xlu0 %2458
        %v2462 = vsel %vm1737, %v2377, %v2441
        %v2463 = vsel %vm1737, %v2431, %v2443
        %vm2464 = vcmask 130048
        %v2465 = vsel %vm2464, %v2462, %v2449
        %v2466 = vsel %vm2464, %v2463, %v2451
        %vm2467 = vcmask 195584
        %v2468 = vsel %vm2467, %v2465, %v2457
        %v2469 = vsel %vm2467, %v2466, %v2459
        %v2470 = vpack.c.bf16 %v2469, %v2468
        %v2471 = vld [vmem:[%s840] sm:$0xf]
        %v2472 = vld [vmem:[%s840 + $0x4] sm:$0xf]
        %v2473 = vld [vmem:[%s840 + $0x8] sm:$0xf]
        %v2474 = vld [vmem:[%s840 + $0xc] sm:$0xf]
        %v2475 = vld [vmem:[%s843] sm:$0x1]
        %v2477 = vperm.slane %v2475, 0
        %v2483 = vunpack.c.l.b16 %v2471
        %v2484 = vunpack.c.l.b16 %v2472
        %v2485 = vunpack.c.l.b16 %v2473
        %v2486 = vunpack.c.l.b16 %v2474
        %v2487 = vpack.c.b16 %v2484, %v2483
        %v2488 = vpack.c.b16 %v2486, %v2485
        %vm2491 = vcmask 261120
        %v2493 = vsel %vm2491, %v2470, 0
        %2495 = vmatpush.bf16.msra.mxu0 0
        %2496 = vmatpush.bf16.msra.mxu0 0
        %2497 = vmatpush.bf16.msra.mxu0 0
        %2498 = vmatpush.bf16.msra.mxu0 0
        %2499 = vmatpush.bf16.msra.mxu0 0
        %2500 = vmatpush.bf16.msra.mxu0 0
        %2501 = vmatpush.bf16.msra.mxu0 %v2488
        %2502 = vmatpush.bf16.msra.mxu0 %v2487
        %2503 = vmatmul.bf16.gmra.mxu0 %v2493
        %v2504 = vpop.f32.mrf.mxu0
        %v2505 = vadd.f32 %v2477, %v2504
        %v2506 = vpop.f32.mrf.mxu0
        %v2507 = vadd.f32 %v2477, %v2506
        %2508 = vdwg.mxu0
        %v2509 = vadd.f32 %v923, %v2505
        %v2510 = vadd.f32 %v924, %v2507
        %v2511 = vld [vmem:[%s846] sm:$0x1]
        %v2512 = vld [vmem:[%s849] sm:$0x1]
        %2513 = vadd.xlane.f32.xlu0 %v2509
        %v2514 = vpop.xlane.xlu0 %2513
        %2515 = vadd.xlane.f32.xlu0 %v2510
        %v2516 = vpop.xlane.xlu0 %2515
        %v2517 = vmul.f32 %v2509, %v2509
        %v2518 = vmul.f32 %v2510, %v2510
        %2519 = vadd.xlane.f32.xlu0 %v2517
        %v2520 = vpop.xlane.xlu0 %2519
        %2521 = vadd.xlane.f32.xlu0 %v2518
        %v2522 = vpop.xlane.xlu0 %2521
        %v2523 = vmul.f32 %v2514, 0.03125
        %v2524 = vmul.f32 %v2516, 0.03125
        %v2525 = vmul.f32 %v2520, 0.03125
        %v2526 = vmul.f32 %v2522, 0.03125
        %v2527 = vmul.f32 %v2523, %v2523
        %v2528 = vmul.f32 %v2524, %v2524
        %v2529 = vsub.f32 %v2525, %v2527
        %v2530 = vsub.f32 %v2526, %v2528
        %v2531 = vadd.f32 %v2529, 1e-12
        %v2532 = vadd.f32 %v2530, 1e-12
        %v2533 = vrsqrt.pop %v2531
        %v2534 = vmul.f32 %v2533, %v2531
        %v2535 = vmul.f32 %v2534, %v2533
        %v2536 = vmul.f32 0.5, %v2535
        %v2537 = vsub.f32 1.5, %v2536
        %v2538 = vmul.f32 %v2533, %v2537
        %vm2539 = vweird.f32 %v2531
        %vm2540 = vweird.f32 %v2533
        %vm2541 = vmor %vm2539, %vm2540
        %v2542 = vsel %vm2541, %v2533, %v2538
        %v2543 = vrsqrt.pop %v2532
        %v2544 = vmul.f32 %v2543, %v2532
        %v2545 = vmul.f32 %v2544, %v2543
        %v2546 = vmul.f32 0.5, %v2545
        %v2547 = vsub.f32 1.5, %v2546
        %v2548 = vmul.f32 %v2543, %v2547
        %vm2549 = vweird.f32 %v2532
        %vm2550 = vweird.f32 %v2543
        %vm2551 = vmor %vm2549, %vm2550
        %v2552 = vsel %vm2551, %v2543, %v2548
        %v2553 = vsub.f32 %v2509, %v2523
        %v2554 = vsub.f32 %v2510, %v2524
        %v2555 = vmul.f32 %v2553, %v2542
        %v2556 = vmul.f32 %v2554, %v2552
        %v2558 = vperm.slane %v2511, 0
        %v2560 = vmul.f32 %v2555, %v2558
        %v2561 = vmul.f32 %v2556, %v2558
        %v2563 = vperm.slane %v2512, 0
        %v2565 = vadd.f32 %v2560, %v2563
        %v2566 = vadd.f32 %v2561, %v2563
        %v2567 = vpack.c.bf16 %v2566, %v2565
        %v2568 = vld [vmem:[%s854] sm:$0xf]
        %v2569 = vld [vmem:[%s854 + $0x4] sm:$0xf]
        %v2570 = vld [vmem:[%s854 + $0x8] sm:$0xf]
        %v2571 = vld [vmem:[%s854 + $0xc] sm:$0xf]
        %v2572 = vld [vmem:[%s854 + $0x10] sm:$0xf]
        %v2573 = vld [vmem:[%s854 + $0x14] sm:$0xf]
        %v2574 = vld [vmem:[%s854 + $0x18] sm:$0xf]
        %v2575 = vld [vmem:[%s854 + $0x1c] sm:$0xf]
        %v2576 = vld [vmem:[%s854 + $0x20] sm:$0xf]
        %v2577 = vld [vmem:[%s854 + $0x24] sm:$0xf]
        %v2578 = vld [vmem:[%s854 + $0x28] sm:$0xf]
        %v2579 = vld [vmem:[%s854 + $0x2c] sm:$0xf]
        %v2580 = vld [vmem:[%s854 + $0x30] sm:$0xf]
        %v2581 = vld [vmem:[%s854 + $0x34] sm:$0xf]
        %v2582 = vld [vmem:[%s854 + $0x38] sm:$0xf]
        %v2583 = vld [vmem:[%s854 + $0x3c] sm:$0xf]
        %v2584 = vld [vmem:[%s709] sm:$0x1]
        %v2586 = vperm.slane %v2584, 0
        %v2604 = vunpack.c.l.b16 %v2568
        %v2605 = vunpack.c.l.b16 %v2569
        %v2606 = vunpack.c.l.b16 %v2570
        %v2607 = vunpack.c.l.b16 %v2571
        %v2608 = vunpack.c.l.b16 %v2572
        %v2609 = vunpack.c.l.b16 %v2573
        %v2610 = vunpack.c.l.b16 %v2574
        %v2611 = vunpack.c.l.b16 %v2575
        %v2612 = vunpack.c.l.b16 %v2576
        %v2613 = vunpack.c.l.b16 %v2577
        %v2614 = vunpack.c.l.b16 %v2578
        %v2615 = vunpack.c.l.b16 %v2579
        %v2616 = vunpack.c.l.b16 %v2580
        %v2617 = vunpack.c.l.b16 %v2581
        %v2618 = vunpack.c.l.b16 %v2582
        %v2619 = vunpack.c.l.b16 %v2583
        %v2620 = vpack.c.b16 %v2605, %v2604
        %v2621 = vpack.c.b16 %v2607, %v2606
        %v2622 = vpack.c.b16 %v2609, %v2608
        %v2623 = vpack.c.b16 %v2611, %v2610
        %v2624 = vpack.c.b16 %v2613, %v2612
        %v2625 = vpack.c.b16 %v2615, %v2614
        %v2626 = vpack.c.b16 %v2617, %v2616
        %v2627 = vpack.c.b16 %v2619, %v2618
        %2636 = vmatpush.bf16.msra.mxu0 %v2627
        %2637 = vmatpush.bf16.msra.mxu0 %v2626
        %2638 = vmatpush.bf16.msra.mxu0 %v2625
        %2639 = vmatpush.bf16.msra.mxu0 %v2624
        %2640 = vmatpush.bf16.msra.mxu0 %v2623
        %2641 = vmatpush.bf16.msra.mxu0 %v2622
        %2642 = vmatpush.bf16.msra.mxu0 %v2621
        %2643 = vmatpush.bf16.msra.mxu0 %v2620
        %2644 = vmatmul.bf16.gmra.mxu0 %v2567
        %v2645 = vpop.f32.mrf.mxu0
        %v2646 = vadd.f32 %v2586, %v2645
        %v2647 = vpop.f32.mrf.mxu0
        %v2648 = vadd.f32 %v2586, %v2647
        %2649 = vdwg.mxu0
        %v2650 = vmul.f32 %v2646, 0.5
        %v2651 = vmul.f32 %v2648, 0.5
        %v2652 = vmul.f32 %v2646, 0.70710677
        %v2653 = vmul.f32 %v2648, 0.70710677
        %v2654 = vmul.f32 %v2652, %v2652
        %v2655 = vmin.f32 16.0, %v2654
        %v2656 = vmul.f32 %v2655, 2.1237322e-06
        %v2657 = vadd.f32 %v2656, 0.00028619796
        %v2658 = vmul.f32 %v2655, %v2657
        %v2659 = vadd.f32 %v2658, 0.0036580483
        %v2660 = vmul.f32 %v2655, %v2659
        %v2661 = vadd.f32 %v2660, 0.05243302
        %v2662 = vmul.f32 %v2655, %v2661
        %v2663 = vadd.f32 %v2662, 0.18741608
        %v2664 = vmul.f32 %v2655, %v2663
        %v2665 = vadd.f32 %v2664, 1.1283791
        %v2666 = vmul.f32 %v2652, %v2665
        %v2667 = vmul.f32 %v2655, 3.8918573e-05
        %v2668 = vadd.f32 %v2667, 0.001143296
        %v2669 = vmul.f32 %v2655, %v2668
        %v2670 = vadd.f32 %v2669, 0.014752088
        %v2671 = vmul.f32 %v2655, %v2670
        %v2672 = vadd.f32 %v2671, 0.112945676
        %v2673 = vmul.f32 %v2655, %v2672
        %v2674 = vadd.f32 %v2673, 0.4994258
        %v2675 = vmul.f32 %v2655, %v2674
        %v2676 = vadd.f32 %v2675, 1.0
        %v2677 = vrcp.pop %v2676
        %v2678 = vmul.f32 %v2676, %v2677
        %v2679 = vsub.f32 1.0, %v2678
        %v2680 = vmul.f32 %v2677, %v2679
        %v2681 = vadd.f32 %v2677, %v2680
        %vm2682 = vweird.f32 %v2676
        %vm2683 = vweird.f32 %v2677
        %vm2684 = vmor %vm2682, %vm2683
        %v2685 = vsel %vm2684, %v2677, %v2681
        %v2686 = vand.u32 2147483647, %v2676
        %vm2687 = vcmp.eq.f32.partialorder %v2686, 8.507059e+37
        %v2688 = vand.u32 %v2676, 2147483648
        %v2689 = vor.u32 1.1754944e-38, %v2688
        %v2690 = vsel %vm2687, %v2689, %v2685
        %v2691 = vmul.f32 %v2666, %v2690
        %v2692 = vmin.f32 %v2691, 1.0
        %v2693 = vmax.f32 %v2692, -1.0
        %v2694 = vmul.f32 %v2653, %v2653
        %v2695 = vmin.f32 16.0, %v2694
        %v2696 = vmul.f32 %v2695, 2.1237322e-06
        %v2697 = vadd.f32 %v2696, 0.00028619796
        %v2698 = vmul.f32 %v2695, %v2697
        %v2699 = vadd.f32 %v2698, 0.0036580483
        %v2700 = vmul.f32 %v2695, %v2699
        %v2701 = vadd.f32 %v2700, 0.05243302
        %v2702 = vmul.f32 %v2695, %v2701
        %v2703 = vadd.f32 %v2702, 0.18741608
        %v2704 = vmul.f32 %v2695, %v2703
        %v2705 = vadd.f32 %v2704, 1.1283791
        %v2706 = vmul.f32 %v2653, %v2705
        %v2707 = vmul.f32 %v2695, 3.8918573e-05
        %v2708 = vadd.f32 %v2707, 0.001143296
        %v2709 = vmul.f32 %v2695, %v2708
        %v2710 = vadd.f32 %v2709, 0.014752088
        %v2711 = vmul.f32 %v2695, %v2710
        %v2712 = vadd.f32 %v2711, 0.112945676
        %v2713 = vmul.f32 %v2695, %v2712
        %v2714 = vadd.f32 %v2713, 0.4994258
        %v2715 = vmul.f32 %v2695, %v2714
        %v2716 = vadd.f32 %v2715, 1.0
        %v2717 = vrcp.pop %v2716
        %v2718 = vmul.f32 %v2716, %v2717
        %v2719 = vsub.f32 1.0, %v2718
        %v2720 = vmul.f32 %v2717, %v2719
        %v2721 = vadd.f32 %v2717, %v2720
        %vm2722 = vweird.f32 %v2716
        %vm2723 = vweird.f32 %v2717
        %vm2724 = vmor %vm2722, %vm2723
        %v2725 = vsel %vm2724, %v2717, %v2721
        %v2726 = vand.u32 2147483647, %v2716
        %vm2727 = vcmp.eq.f32.partialorder %v2726, 8.507059e+37
        %v2728 = vand.u32 %v2716, 2147483648
        %v2729 = vor.u32 1.1754944e-38, %v2728
        %v2730 = vsel %vm2727, %v2729, %v2725
        %v2731 = vmul.f32 %v2706, %v2730
        %v2732 = vmin.f32 %v2731, 1.0
        %v2733 = vmax.f32 %v2732, -1.0
        %v2734 = vadd.f32 %v2693, 1.0
        %v2735 = vadd.f32 %v2733, 1.0
        %v2736 = vmul.f32 %v2650, %v2734
        %v2737 = vmul.f32 %v2651, %v2735
        %v2738 = vpack.c.bf16 %v2737, %v2736
        %v2739 = vld [vmem:[%s719] sm:$0xf]
        %v2740 = vld [vmem:[%s719 + $0x4] sm:$0xf]
        %v2741 = vld [vmem:[%s719 + $0x8] sm:$0xf]
        %v2742 = vld [vmem:[%s719 + $0xc] sm:$0xf]
        %v2743 = vld [vmem:[%s719 + $0x10] sm:$0xf]
        %v2744 = vld [vmem:[%s719 + $0x14] sm:$0xf]
        %v2745 = vld [vmem:[%s719 + $0x18] sm:$0xf]
        %v2746 = vld [vmem:[%s719 + $0x1c] sm:$0xf]
        %v2747 = vld [vmem:[%s719 + $0x20] sm:$0xf]
        %v2748 = vld [vmem:[%s719 + $0x24] sm:$0xf]
        %v2749 = vld [vmem:[%s719 + $0x28] sm:$0xf]
        %v2750 = vld [vmem:[%s719 + $0x2c] sm:$0xf]
        %v2751 = vld [vmem:[%s719 + $0x30] sm:$0xf]
        %v2752 = vld [vmem:[%s719 + $0x34] sm:$0xf]
        %v2753 = vld [vmem:[%s719 + $0x38] sm:$0xf]
        %v2754 = vld [vmem:[%s719 + $0x3c] sm:$0xf]
        %v2755 = vld [vmem:[%s857] sm:$0x1]
        %v2757 = vperm.slane %v2755, 0
        %v2775 = vunpack.c.l.b16 %v2739
        %v2776 = vunpack.c.l.b16 %v2740
        %v2777 = vunpack.c.l.b16 %v2741
        %v2778 = vunpack.c.l.b16 %v2742
        %v2779 = vunpack.c.l.b16 %v2743
        %v2780 = vunpack.c.l.b16 %v2744
        %v2781 = vunpack.c.l.b16 %v2745
        %v2782 = vunpack.c.l.b16 %v2746
        %v2783 = vunpack.c.l.b16 %v2747
        %v2784 = vunpack.c.l.b16 %v2748
        %v2785 = vunpack.c.l.b16 %v2749
        %v2786 = vunpack.c.l.b16 %v2750
        %v2787 = vunpack.c.l.b16 %v2751
        %v2788 = vunpack.c.l.b16 %v2752
        %v2789 = vunpack.c.l.b16 %v2753
        %v2790 = vunpack.c.l.b16 %v2754
        %v2791 = vpack.c.b16 %v2776, %v2775
        %v2792 = vpack.c.b16 %v2778, %v2777
        %v2793 = vpack.c.b16 %v2780, %v2779
        %v2794 = vpack.c.b16 %v2782, %v2781
        %v2795 = vpack.c.b16 %v2784, %v2783
        %v2796 = vpack.c.b16 %v2786, %v2785
        %v2797 = vpack.c.b16 %v2788, %v2787
        %v2798 = vpack.c.b16 %v2790, %v2789
        %2807 = vmatpush.bf16.msra.mxu0 %v2798
        %2808 = vmatpush.bf16.msra.mxu0 %v2797
        %2809 = vmatpush.bf16.msra.mxu0 %v2796
        %2810 = vmatpush.bf16.msra.mxu0 %v2795
        %2811 = vmatpush.bf16.msra.mxu0 %v2794
        %2812 = vmatpush.bf16.msra.mxu0 %v2793
        %2813 = vmatpush.bf16.msra.mxu0 %v2792
        %2814 = vmatpush.bf16.msra.mxu0 %v2791
        %2815 = vmatmul.bf16.gmra.mxu0 %v2738
        %v2816 = vpop.f32.mrf.mxu0
        %v2817 = vadd.f32 %v2757, %v2816
        %v2818 = vpop.f32.mrf.mxu0
        %v2819 = vadd.f32 %v2757, %v2818
        %2820 = vdwg.mxu0
        %v2821 = vadd.f32 %v2565, %v2817
        %v2822 = vadd.f32 %v2566, %v2819
        %v2823 = vld [vmem:[%s728] sm:$0x1]
        %v2824 = vld [vmem:[%s737] sm:$0x1]
        %2825 = vadd.xlane.f32.xlu0 %v2821
        %v2826 = vpop.xlane.xlu0 %2825
        %2827 = vadd.xlane.f32.xlu0 %v2822
        %v2828 = vpop.xlane.xlu0 %2827
        %v2829 = vmul.f32 %v2821, %v2821
        %v2830 = vmul.f32 %v2822, %v2822
        %2831 = vadd.xlane.f32.xlu0 %v2829
        %v2832 = vpop.xlane.xlu0 %2831
        %2833 = vadd.xlane.f32.xlu0 %v2830
        %v2834 = vpop.xlane.xlu0 %2833
        %v2835 = vmul.f32 %v2826, 0.03125
        %v2836 = vmul.f32 %v2828, 0.03125
        %v2837 = vmul.f32 %v2832, 0.03125
        %v2838 = vmul.f32 %v2834, 0.03125
        %v2839 = vmul.f32 %v2835, %v2835
        %v2840 = vmul.f32 %v2836, %v2836
        %v2841 = vsub.f32 %v2837, %v2839
        %v2842 = vsub.f32 %v2838, %v2840
        %v2843 = vadd.f32 %v2841, 1e-12
        %v2844 = vadd.f32 %v2842, 1e-12
        %v2845 = vrsqrt.pop %v2843
        %v2846 = vmul.f32 %v2845, %v2843
        %v2847 = vmul.f32 %v2846, %v2845
        %v2848 = vmul.f32 0.5, %v2847
        %v2849 = vsub.f32 1.5, %v2848
        %v2850 = vmul.f32 %v2845, %v2849
        %vm2851 = vweird.f32 %v2843
        %vm2852 = vweird.f32 %v2845
        %vm2853 = vmor %vm2851, %vm2852
        %v2854 = vsel %vm2853, %v2845, %v2850
        %v2855 = vrsqrt.pop %v2844
        %v2856 = vmul.f32 %v2855, %v2844
        %v2857 = vmul.f32 %v2856, %v2855
        %v2858 = vmul.f32 0.5, %v2857
        %v2859 = vsub.f32 1.5, %v2858
        %v2860 = vmul.f32 %v2855, %v2859
        %vm2861 = vweird.f32 %v2844
        %vm2862 = vweird.f32 %v2855
        %vm2863 = vmor %vm2861, %vm2862
        %v2864 = vsel %vm2863, %v2855, %v2860
        %v2865 = vsub.f32 %v2821, %v2835
        %v2866 = vsub.f32 %v2822, %v2836
        %v2867 = vmul.f32 %v2865, %v2854
        %v2868 = vmul.f32 %v2866, %v2864
        %v2870 = vperm.slane %v2823, 0
        %v2872 = vmul.f32 %v2867, %v2870
        %v2873 = vmul.f32 %v2868, %v2870
        %v2875 = vperm.slane %v2824, 0
        %v2877 = vadd.f32 %v2872, %v2875
        %v2878 = vadd.f32 %v2873, %v2875
        %2879 = vst [vmem:[#allocation14] sm:$0xff] %v2877
        %2880 = vst [vmem:[#allocation14 + $0x8] sm:$0xff] %v2878
        %p2881 = scmp.eq.s32.totalorder %s40, 1
        // Predicated region
        $region121: #{tpu_custom_call.1} parent=87 // pred_check
          %p2882 = pneg %p2881
        $region122: #{tpu_custom_call.1} parent=87 // pred_check_branch
          %2884 = sbr.rel (%p2882) target = $region124
        $region123: #{tpu_custom_call.1} parent=87 // pred_region
          %v2885 = vpack.c.bf16 %v2877, %v2877
          %v2886 = vpack.c.bf16 %v2878, %v2878
          %v2887 = vld [vmem:[%s15] sm:$0xf]
          %v2888 = vld [vmem:[%s15 + $0x4] sm:$0xf]
          %v2889 = vld [vmem:[%s15 + $0x8] sm:$0xf]
          %v2890 = vld [vmem:[%s15 + $0xc] sm:$0xf]
          %v2891 = vld [vmem:[%s15 + $0x10] sm:$0xf]
          %v2892 = vld [vmem:[%s15 + $0x14] sm:$0xf]
          %v2893 = vld [vmem:[%s15 + $0x18] sm:$0xf]
          %v2894 = vld [vmem:[%s15 + $0x1c] sm:$0xf]
          %v2895 = vld [vmem:[%s15 + $0x20] sm:$0xf]
          %v2896 = vld [vmem:[%s15 + $0x24] sm:$0xf]
          %v2897 = vld [vmem:[%s15 + $0x28] sm:$0xf]
          %v2898 = vld [vmem:[%s15 + $0x2c] sm:$0xf]
          %v2899 = vld [vmem:[%s15 + $0x30] sm:$0xf]
          %v2900 = vld [vmem:[%s15 + $0x34] sm:$0xf]
          %v2901 = vld [vmem:[%s15 + $0x38] sm:$0xf]
          %v2902 = vld [vmem:[%s15 + $0x3c] sm:$0xf]
          %v2903 = vld [vmem:[%s16] sm:$0x1]
          %v2905 = vperm.slane %v2903, 0
          %v2909 = vunpack.c.l.b16 %v2885
          %v2910 = vunpack.c.l.b16 %v2886
          %v2911 = vrot.slane %v2910, 7
          %vm2912 = vcmask 1041409
          %v2913 = vsel %vm2912, %v2911, %v2909
          %v2914 = vpack.c.b16 %v2913, %v2913
          %v2932 = vunpack.c.l.b16 %v2887
          %v2933 = vunpack.c.l.b16 %v2888
          %v2934 = vunpack.c.l.b16 %v2889
          %v2935 = vunpack.c.l.b16 %v2890
          %v2936 = vunpack.c.l.b16 %v2891
          %v2937 = vunpack.c.l.b16 %v2892
          %v2938 = vunpack.c.l.b16 %v2893
          %v2939 = vunpack.c.l.b16 %v2894
          %v2940 = vunpack.c.l.b16 %v2895
          %v2941 = vunpack.c.l.b16 %v2896
          %v2942 = vunpack.c.l.b16 %v2897
          %v2943 = vunpack.c.l.b16 %v2898
          %v2944 = vunpack.c.l.b16 %v2899
          %v2945 = vunpack.c.l.b16 %v2900
          %v2946 = vunpack.c.l.b16 %v2901
          %v2947 = vunpack.c.l.b16 %v2902
          %v2948 = vpack.c.b16 %v2933, %v2932
          %v2949 = vpack.c.b16 %v2935, %v2934
          %v2950 = vpack.c.b16 %v2937, %v2936
          %v2951 = vpack.c.b16 %v2939, %v2938
          %v2952 = vpack.c.b16 %v2941, %v2940
          %v2953 = vpack.c.b16 %v2943, %v2942
          %v2954 = vpack.c.b16 %v2945, %v2944
          %v2955 = vpack.c.b16 %v2947, %v2946
          %2964 = vmatpush.bf16.msra.mxu0 %v2955
          %2965 = vmatpush.bf16.msra.mxu0 %v2954
          %2966 = vmatpush.bf16.msra.mxu0 %v2953
          %2967 = vmatpush.bf16.msra.mxu0 %v2952
          %2968 = vmatpush.bf16.msra.mxu0 %v2951
          %2969 = vmatpush.bf16.msra.mxu0 %v2950
          %2970 = vmatpush.bf16.msra.mxu0 %v2949
          %2971 = vmatpush.bf16.msra.mxu0 %v2948
          %2972 = vmatmul.bf16.gmra.mxu0 %v2914
          %v2973 = vpop.f32.mrf.mxu0
          %v2974 = vadd.f32 %v2905, %v2973
          %v2975 = vpop.f32.mrf.mxu0
          %2976 = vdwg.mxu0
          %v2977 = vtanh.pop %v2974
          %2978 = vst [vmem:[#allocation15] sm:$0x3] %v2977
        $region124: #{tpu_custom_call.1} parent=87 // pred_fallthru
          _
        // Predicated region
        $region125: #{tpu_custom_call.1} parent=87 // pred_check
          %p2979 = pneg %p470
        $region126: #{tpu_custom_call.1} parent=87 // pred_check_branch
          %2981 = sbr.rel (%p2979) target = $region128
        $region127: #{tpu_custom_call.1} parent=87 // pred_region
          %2983 = vsyncadd [#allocation4], 0
          %s2984 = sshll.u32 [#allocation14], 4
          %s2985 = int_to_ptr.vmem [resolvable:$true] %s2984
          %s2986 = sshll.u32 %s17, 4
          %s2987 = int_to_ptr.hbm [resolvable:$true] %s2986
          %2992 = dma.vmem_to_hbm [thread:$0]  %s2985, 256, %s2987, [#allocation4], 128, 128, 8
        $region128: #{tpu_custom_call.1} parent=87 // pred_fallthru
          _
        // Predicated region
        $region129: #{tpu_custom_call.1} parent=87 // pred_check
          %p2993 = pneg %p491
        $region130: #{tpu_custom_call.1} parent=87 // pred_check_branch
          %2995 = sbr.rel (%p2993) target = $region132
        $region131: #{tpu_custom_call.1} parent=87 // pred_region
          %2997 = vsyncadd [#allocation16], 0
          %s2999 = sshll.u32 [#allocation15], 4
          %s3000 = int_to_ptr.vmem [resolvable:$true] %s2999
          %s3001 = sshll.u32 %s18, 4
          %s3002 = int_to_ptr.hbm [resolvable:$true] %s3001
          %3004 = dma.vmem_to_hbm [thread:$0]  %s3000, 32, %s3002, [#allocation16]
        $region132: #{tpu_custom_call.1} parent=87 // pred_fallthru
          _
        // Predicated region
        $region133: #{tpu_custom_call.1} parent=87 // pred_check
          %p3005 = pneg %p470
        $region134: #{tpu_custom_call.1} parent=87 // pred_check_branch
          %3007 = sbr.rel (%p3005) target = $region136
        $region135: #{tpu_custom_call.1} parent=87 // pred_region
          %3009 = dma.done [#allocation4], 256
        $region136: #{tpu_custom_call.1} parent=87 // pred_fallthru
          _
        // Predicated region
        $region137: #{tpu_custom_call.1} parent=87 // pred_check
          %p3010 = pneg %p491
        $region138: #{tpu_custom_call.1} parent=87 // pred_check_branch
          %3012 = sbr.rel (%p3010) target = $region140
        $region139: #{tpu_custom_call.1} parent=87 // pred_region
          %3014 = dma.done [#allocation16], 32
        $region140: #{tpu_custom_call.1} parent=87 // pred_fallthru
          _
      $region88: #{tpu_custom_call.1} parent=5 // pred_fallthru
        _
      %p3015 = scmp.le.s32.totalorder 2, %s35
      // Predicated region
      $region141: #{tpu_custom_call.1} parent=5 // pred_check
        %p3016 = pneg %p3015
      $region142: #{tpu_custom_call.1} parent=5 // pred_check_branch
        %3018 = sbr.rel (%p3016) target = $region144
      $region143: #{tpu_custom_call.1} parent=5 // pred_region
        %s3019 = ssub.s32 %s35, 2
      $region144: #{tpu_custom_call.1} parent=5 // pred_fallthru
        _
    $region6: #{tpu_custom_call.1} parent=1 // loop_footer
      %s39 = sadd.s32 1, %s35
    $region7: #{tpu_custom_call.1} parent=1 // loop_footer_branch
      %34 = sbr.rel target = $region3
    $region8: #{tpu_custom_call.1} parent=1 // loop_exit
      _
    %3020 = vsyncpa [#allocation3], 1
    %s3021 = scalar_lea.sflag [#allocation3], 1
    %3022 = vsyncpa %s3021, 1
    %3023 = vsyncpa [#allocation6], 1
    %3024 = vsyncpa [#allocation9], 1
    %s3025 = scalar_lea.sflag [#allocation9], 1
    %3026 = vsyncpa %s3025, 1
    %3027 = vsyncpa [#allocation12], 1
    %s3028 = scalar_lea.sflag [#allocation12], 1
    %3029 = vsyncpa %s3028, 1
    %3030 = vsyncpa [#allocation4], 1
    %s3031 = scalar_lea.sflag [#allocation4], 1
    %3032 = vsyncpa %s3031, 1
    %3033 = vsyncpa [#allocation16], 1

</llo_original>
